<compile_context>
chip_gen: v7x
topology: tpu7x:2x2x1
jax: 0.10.0
libtpu: 0.0.40
codegen_flags: <defaults>
</compile_context>

<pallas_src>
import functools

import numpy as np
import jax
import jax.numpy as jnp
from jax.experimental import pallas as pl
from jax.experimental.pallas import tpu as pltpu


# ----------------------------- Fused Pallas kernel ---------------------------
def _fused_lstm_kernel(x_ref, wih_ref, whh_ref, b_ref, h0_ref, c0_ref,
                       y_ref, hn_ref, cn_ref,
                       ybuf_scr, gx_scr, *, T, B, H, L, D):
    """Whole multi-layer (bi)LSTM in one kernel invocation.

    x_ref:   (T*B, IN_PAD)            padded, time-major flattened input
    wih_ref: (L*D, IN_PAD, 4H)        W_ih^T, zero-padded on input dim
    whh_ref: (L*D, H, 4H)             W_hh^T
    b_ref:   (L*D, 1, 4H)             combined bias (b_ih + b_hh)
    h0_ref, c0_ref: (L*D, B, H)
    y_ref:   (T*B, D*H)               final-layer outputs (both directions)
    hn_ref, cn_ref: (L*D, B, H)
    ybuf_scr: (T*B, IN_PAD)  VMEM     inter-layer activations
    gx_scr:   (T*B, 4H)      VMEM     hoisted input projection for current (l,d)
    """
    # Zero the inter-layer buffer once (covers any lane padding robustly).
    ybuf_scr[...] = jnp.zeros_like(ybuf_scr)

    for l in range(L):                      # Python-unrolled: 2 layers
        for d in range(D):                  # Python-unrolled: 2 directions
            idx = l * D + d
            wih = wih_ref[idx]              # (IN_PAD, 4H)
            whh = whh_ref[idx]              # (H, 4H)
            bias = b_ref[idx]               # (1, 4H)

            # Hoisted input projection for the entire sequence: one MXU matmul.
            xin = x_ref[...] if l == 0 else ybuf_scr[...]
            gx_scr[...] = (jnp.dot(xin, wih, preferred_element_type=jnp.float32)
                           + bias)

            h = h0_ref[idx].astype(jnp.float32)     # (B, H)
            c = c0_ref[idx].astype(jnp.float32)     # (B, H)

            # Fully unrolled time recurrence; all indices are static.
            for t in range(T):
                tt = t if d == 0 else (T - 1 - t)   # reverse dir: reversed index
                g = (gx_scr[tt * B:(tt + 1) * B, :]
                     + jnp.dot(h, whh, preferred_element_type=jnp.float32))
                # Full-vreg nonlinearities, then static lane slices (gate order
                # matches PyTorch: i, f, g, o).
                sg = jax.nn.sigmoid(g)
                th = jnp.tanh(g)
                i_g = sg[:, 0 * H:1 * H]
                f_g = sg[:, 1 * H:2 * H]
                g_g = th[:, 2 * H:3 * H]
                o_g = sg[:, 3 * H:4 * H]
                c = f_g * c + i_g * g_g
                h = o_g * jnp.tanh(c)

                if l == L - 1:
                    # Final layer: write straight into the output block.
                    y_ref[tt * B:(tt + 1) * B, d * H:(d + 1) * H] = \
                        h.astype(y_ref.dtype)
                else:
                    # Intermediate layer: both directions fill one buffer
                    # (replaces jnp.concatenate in the wrapper).
                    ybuf_scr[tt * B:(tt + 1) * B, d * H:(d + 1) * H] = h

            # Final hidden / cell state: written exactly once per (layer, dir).
            hn_ref[idx] = h.astype(hn_ref.dtype)
            cn_ref[idx] = c.astype(cn_ref.dtype)


# ------------------------ Full multi-layer bi-LSTM ---------------------------
def lstm_forward(params, x, h0, c0, *, num_layers, bidirectional, batch_first):
    """Mirrors torch.nn.LSTM forward: returns (output, (h_n, c_n))."""
    if batch_first:
        x = jnp.transpose(x, (1, 0, 2))            # -> (T, B, I)
    T, B, I = x.shape
    D = 2 if bidirectional else 1
    H = h0.shape[-1]
    L = num_layers
    IN_PAD = max(I, D * H)                         # common padded input width

    # Stack (and zero-pad) parameters: weights are pre-transposed so the
    # kernel does plain (rows, IN) @ (IN, 4H) matmuls.
    wih_list, whh_list, b_list = [], [], []
    for l in range(L):
        for d in range(D):
            w_ih, w_hh, b = params[(l, d)]
            wt = jnp.transpose(w_ih).astype(jnp.float32)       # (in_sz, 4H)
            pad = IN_PAD - wt.shape[0]
            if pad > 0:
                wt = jnp.pad(wt, ((0, pad), (0, 0)))           # zero rows
            wih_list.append(wt)
            whh_list.append(jnp.transpose(w_hh).astype(jnp.float32))
            b_list.append(b.reshape(1, 4 * H).astype(jnp.float32))
    wih_all = jnp.stack(wih_list, axis=0)          # (L*D, IN_PAD, 4H)
    whh_all = jnp.stack(whh_list, axis=0)          # (L*D, H, 4H)
    b_all = jnp.stack(b_list, axis=0)              # (L*D, 1, 4H)

    x_pad = x.astype(jnp.float32)
    if IN_PAD > I:
        x_pad = jnp.pad(x_pad, ((0, 0), (0, 0), (0, IN_PAD - I)))
    x2d = x_pad.reshape(T * B, IN_PAD)

    kernel = functools.partial(_fused_lstm_kernel, T=T, B=B, H=H, L=L, D=D)

    # TODO(synk): on v7x the two directions could additionally be split across
    # the two TensorCores (parallel direction axis); kept single-core here for
    # portability across v5e/v6e/v7x.
    y2d, hn, cn = pl.pallas_call(
        kernel,
        out_shape=(jax.ShapeDtypeStruct((T * B, D * H), jnp.float32),
                   jax.ShapeDtypeStruct((L * D, B, H), jnp.float32),
                   jax.ShapeDtypeStruct((L * D, B, H), jnp.float32)),
        grid_spec=pltpu.PrefetchScalarGridSpec(
            num_scalar_prefetch=0,
            grid=(1,),                              # single invocation
            in_specs=[
                pl.BlockSpec((T * B, IN_PAD), lambda i: (0, 0)),        # x
                pl.BlockSpec((L * D, IN_PAD, 4 * H), lambda i: (0, 0, 0)),
                pl.BlockSpec((L * D, H, 4 * H), lambda i: (0, 0, 0)),
                pl.BlockSpec((L * D, 1, 4 * H), lambda i: (0, 0, 0)),
                pl.BlockSpec((L * D, B, H), lambda i: (0, 0, 0)),       # h0
                pl.BlockSpec((L * D, B, H), lambda i: (0, 0, 0)),       # c0
            ],
            out_specs=[
                pl.BlockSpec((T * B, D * H), lambda i: (0, 0)),         # y
                pl.BlockSpec((L * D, B, H), lambda i: (0, 0, 0)),       # h_n
                pl.BlockSpec((L * D, B, H), lambda i: (0, 0, 0)),       # c_n
            ],
            scratch_shapes=[pltpu.VMEM((T * B, IN_PAD), jnp.float32),   # y buf
                            pltpu.VMEM((T * B, 4 * H), jnp.float32)],   # gx
        ),
        compiler_params=pltpu.CompilerParams(
            dimension_semantics=("arbitrary",)),
    )(x2d, wih_all, whh_all, b_all,
      h0.astype(jnp.float32), c0.astype(jnp.float32))

    output = y2d.reshape(T, B, D * H)
    if batch_first:
        output = jnp.transpose(output, (1, 0, 2))
    return output, (hn, cn)


# ---------------------------- Pure-JAX reference -----------------------------
def _lstm_ref_layer(x, w_ih, w_hh, b, h, c):
    def step(carry, xt):
        h, c = carry
        g = xt @ w_ih.T + h @ w_hh.T + b
        H = h.shape[-1]
        i = jax.nn.sigmoid(g[:, 0 * H:1 * H])
        f = jax.nn.sigmoid(g[:, 1 * H:2 * H])
        gg = jnp.tanh(g[:, 2 * H:3 * H])
        o = jax.nn.sigmoid(g[:, 3 * H:4 * H])
        c = f * c + i * gg
        h = o * jnp.tanh(c)
        return (h, c), h
    (h, c), ys = jax.lax.scan(step, (h, c), x)
    return ys, h, c


def lstm_ref(params, x, h0, c0, *, num_layers, bidirectional, batch_first):
    if batch_first:
        x = jnp.transpose(x, (1, 0, 2))
    num_dir = 2 if bidirectional else 1
    hn_list, cn_list = [], []
    layer_in = x
    for l in range(num_layers):
        outs = []
        for d in range(num_dir):
            w_ih, w_hh, b = params[(l, d)]
            idx = l * num_dir + d
            xi = layer_in if d == 0 else jnp.flip(layer_in, axis=0)
            y, hn, cn = _lstm_ref_layer(xi, w_ih, w_hh, b, h0[idx], c0[idx])
            if d == 1:
                y = jnp.flip(y, axis=0)
            outs.append(y)
            hn_list.append(hn)
            cn_list.append(cn)
        layer_in = jnp.concatenate(outs, axis=-1) if num_dir == 2 else outs[0]
    output = layer_in
    if batch_first:
        output = jnp.transpose(output, (1, 0, 2))
    return output, (jnp.stack(hn_list, 0), jnp.stack(cn_list, 0))


# ---------------------------------- main -------------------------------------
if __name__ == "__main__":
    # Module config
    INPUT_SIZE = 16
    HIDDEN_SIZE = 32
    NUM_LAYERS = 2
    HAS_BIAS = True
    BIDIRECTIONAL = True
    BATCH_FIRST = False

    SEQ = 8
    BATCH = 2
    num_dir = 2 if BIDIRECTIONAL else 1

    key = jax.random.PRNGKey(0)

    # Deterministic parameter init (torch default: U(-1/sqrt(H), 1/sqrt(H)))
    stdv = 1.0 / np.sqrt(HIDDEN_SIZE)
    params = {}
    for l in range(NUM_LAYERS):
        in_sz = INPUT_SIZE if l == 0 else HIDDEN_SIZE * num_dir
        for d in range(num_dir):
            key, k1, k2, k3, k4 = jax.random.split(key, 5)
            w_ih = jax.random.uniform(k1, (4 * HIDDEN_SIZE, in_sz),
                                      jnp.float32, -stdv, stdv)
            w_hh = jax.random.uniform(k2, (4 * HIDDEN_SIZE, HIDDEN_SIZE),
                                      jnp.float32, -stdv, stdv)
            if HAS_BIAS:
                b_ih = jax.random.uniform(k3, (4 * HIDDEN_SIZE,),
                                          jnp.float32, -stdv, stdv)
                b_hh = jax.random.uniform(k4, (4 * HIDDEN_SIZE,),
                                          jnp.float32, -stdv, stdv)
                b = b_ih + b_hh                     # combined bias
            else:
                b = jnp.zeros((4 * HIDDEN_SIZE,), jnp.float32)
            params[(l, d)] = (w_ih, w_hh, b)

    # Inputs (batch_first=False -> (T, B, I)); h0/c0: (num_layers*num_dir, B, H)
    key, kx, kh, kc = jax.random.split(key, 4)
    x = jax.random.normal(kx, (SEQ, BATCH, INPUT_SIZE), jnp.float32)
    h0 = jax.random.normal(kh, (NUM_LAYERS * num_dir, BATCH, HIDDEN_SIZE),
                           jnp.float32)
    c0 = jax.random.normal(kc, (NUM_LAYERS * num_dir, BATCH, HIDDEN_SIZE),
                           jnp.float32)

    out, (h_n, c_n) = lstm_forward(
        params, x, h0, c0,
        num_layers=NUM_LAYERS, bidirectional=BIDIRECTIONAL,
        batch_first=BATCH_FIRST)
    jax.block_until_ready((out, h_n, c_n))

    # Sanity-check against a pure-JAX reference of torch.nn.LSTM semantics.
    out_r, (h_r, c_r) = lstm_ref(
        params, x, h0, c0,
        num_layers=NUM_LAYERS, bidirectional=BIDIRECTIONAL,
        batch_first=BATCH_FIRST)
    np.testing.assert_allclose(np.asarray(out), np.asarray(out_r),
                               rtol=1e-5, atol=1e-5)
    np.testing.assert_allclose(np.asarray(h_n), np.asarray(h_r),
                               rtol=1e-5, atol=1e-5)
    np.testing.assert_allclose(np.asarray(c_n), np.asarray(c_r),
                               rtol=1e-5, atol=1e-5)

    print("KERNEL_OK")
</pallas_src>

<mosaic_0001>
module attributes {stable_mosaic.version = 11 : i64} {
  func.func @_fused_lstm_kernel(%arg0: i32, %arg1: memref<16x64xf32, #tpu.memory_space<vmem>>, %arg2: memref<4x64x128xf32, #tpu.memory_space<vmem>>, %arg3: memref<4x32x128xf32, #tpu.memory_space<vmem>>, %arg4: memref<4x1x128xf32, #tpu.memory_space<vmem>>, %arg5: memref<4x2x32xf32, #tpu.memory_space<vmem>>, %arg6: memref<4x2x32xf32, #tpu.memory_space<vmem>>, %arg7: memref<16x64xf32, #tpu.memory_space<vmem>>, %arg8: memref<4x2x32xf32, #tpu.memory_space<vmem>>, %arg9: memref<4x2x32xf32, #tpu.memory_space<vmem>>, %arg10: memref<16x64xf32, #tpu.memory_space<vmem>>, %arg11: memref<16x128xf32, #tpu.memory_space<vmem>>) attributes {dimension_semantics = [#tpu.dimension_semantics<arbitrary>], iteration_bounds = array<i64: 1>, scalar_prefetch = 0 : i64, scratch_operands = 2 : i64, tpu.core_type = #tpu.core_type<tc>, window_params = [{pipeline_mode = #tpu.pipeline_mode<synchronous>, transform_indices = @transform_0, window_bounds = array<i64: 16, 64>}, {pipeline_mode = #tpu.pipeline_mode<synchronous>, transform_indices = @transform_1, window_bounds = array<i64: 4, 64, 128>}, {pipeline_mode = #tpu.pipeline_mode<synchronous>, transform_indices = @transform_2, window_bounds = array<i64: 4, 32, 128>}, {pipeline_mode = #tpu.pipeline_mode<synchronous>, transform_indices = @transform_3, window_bounds = array<i64: 4, 1, 128>}, {pipeline_mode = #tpu.pipeline_mode<synchronous>, transform_indices = @transform_4, window_bounds = array<i64: 4, 2, 32>}, {pipeline_mode = #tpu.pipeline_mode<synchronous>, transform_indices = @transform_5, window_bounds = array<i64: 4, 2, 32>}, {pipeline_mode = #tpu.pipeline_mode<synchronous>, transform_indices = @transform_6, window_bounds = array<i64: 16, 64>}, {pipeline_mode = #tpu.pipeline_mode<synchronous>, transform_indices = @transform_7, window_bounds = array<i64: 4, 2, 32>}, {pipeline_mode = #tpu.pipeline_mode<synchronous>, transform_indices = @transform_8, window_bounds = array<i64: 4, 2, 32>}]} {
    %cst = arith.constant 0.000000e+00 : f32
    %0 = vector.broadcast %cst : f32 to vector<16x64xf32>
    %c0 = arith.constant 0 : index
    %c0_0 = arith.constant 0 : index
    %1 = vector.load %arg10[%c0, %c0_0] : memref<16x64xf32, #tpu.memory_space<vmem>>, vector<16x64xf32>
    tpu.vector_store %arg10[%c0, %c0_0], %0 {strides = array<i32>} : memref<16x64xf32, #tpu.memory_space<vmem>>, vector<16x64xf32>,
    %c0_1 = arith.constant 0 : index
    %c0_2 = arith.constant 0 : index
    %c0_3 = arith.constant 0 : index
    %2 = vector.load %arg2[%c0_1, %c0_2, %c0_3] : memref<4x64x128xf32, #tpu.memory_space<vmem>>, vector<1x64x128xf32>
    %3 = vector.shape_cast %2 : vector<1x64x128xf32> to vector<64x128xf32>
    %c0_4 = arith.constant 0 : index
    %c0_5 = arith.constant 0 : index
    %c0_6 = arith.constant 0 : index
    %4 = vector.load %arg3[%c0_4, %c0_5, %c0_6] : memref<4x32x128xf32, #tpu.memory_space<vmem>>, vector<1x32x128xf32>
    %5 = vector.shape_cast %4 : vector<1x32x128xf32> to vector<32x128xf32>
    %c0_7 = arith.constant 0 : index
    %c0_8 = arith.constant 0 : index
    %c0_9 = arith.constant 0 : index
    %6 = vector.load %arg4[%c0_7, %c0_8, %c0_9] : memref<4x1x128xf32, #tpu.memory_space<vmem>>, vector<1x1x128xf32>
    %7 = vector.shape_cast %6 : vector<1x1x128xf32> to vector<1x128xf32>
    %c0_10 = arith.constant 0 : index
    %c0_11 = arith.constant 0 : index
    %8 = vector.load %arg1[%c0_10, %c0_11] : memref<16x64xf32, #tpu.memory_space<vmem>>, vector<16x64xf32>
    %cst_12 = arith.constant dense<0.000000e+00> : vector<16x128xf32>
    %9 = tpu.matmul %8, %3, %cst_12 {dimension_numbers = #tpu.dot_dimension_numbers<[1], [0], [0], [1], [0, 0, 1, 1], [], []>} : vector<16x64xf32>, vector<64x128xf32>, vector<16x128xf32> -> vector<16x128xf32>
    %10 = vector.broadcast %7 : vector<1x128xf32> to vector<16x128xf32>
    %11 = arith.addf %9, %10 : vector<16x128xf32>
    %c0_13 = arith.constant 0 : index
    %c0_14 = arith.constant 0 : index
    %12 = vector.load %arg11[%c0_13, %c0_14] : memref<16x128xf32, #tpu.memory_space<vmem>>, vector<16x128xf32>
    tpu.vector_store %arg11[%c0_13, %c0_14], %11 {strides = array<i32>} : memref<16x128xf32, #tpu.memory_space<vmem>>, vector<16x128xf32>,
    %c0_15 = arith.constant 0 : index
    %c0_16 = arith.constant 0 : index
    %c0_17 = arith.constant 0 : index
    %13 = vector.load %arg5[%c0_15, %c0_16, %c0_17] : memref<4x2x32xf32, #tpu.memory_space<vmem>>, vector<1x2x32xf32>
    %14 = vector.shape_cast %13 : vector<1x2x32xf32> to vector<2x32xf32>
    %c0_18 = arith.constant 0 : index
    %c0_19 = arith.constant 0 : index
    %c0_20 = arith.constant 0 : index
    %15 = vector.load %arg6[%c0_18, %c0_19, %c0_20] : memref<4x2x32xf32, #tpu.memory_space<vmem>>, vector<1x2x32xf32>
    %16 = vector.shape_cast %15 : vector<1x2x32xf32> to vector<2x32xf32>
    %c0_21 = arith.constant 0 : index
    %c0_22 = arith.constant 0 : index
    %17 = vector.load %arg11[%c0_21, %c0_22] : memref<16x128xf32, #tpu.memory_space<vmem>>, vector<2x128xf32>
    %cst_23 = arith.constant dense<0.000000e+00> : vector<2x128xf32>
    %18 = tpu.matmul %14, %5, %cst_23 {dimension_numbers = #tpu.dot_dimension_numbers<[1], [0], [0], [1], [0, 0, 1, 1], [], []>} : vector<2x32xf32>, vector<32x128xf32>, vector<2x128xf32> -> vector<2x128xf32>
    %19 = arith.addf %17, %18 : vector<2x128xf32>
    %20 = arith.negf %19 : vector<2x128xf32>
    %21 = math.exp %20 : vector<2x128xf32>
    %cst_24 = arith.constant 1.000000e+00 : f32
    %22 = vector.broadcast %cst_24 : f32 to vector<2x128xf32>
    %23 = arith.addf %22, %21 : vector<2x128xf32>
    %24 = arith.divf %22, %23 : vector<2x128xf32>
    %25 = math.tanh %19 : vector<2x128xf32>
    %26 = vector.extract_strided_slice %24 {offsets = [0, 0], sizes = [2, 32], strides = [1, 1]} : vector<2x128xf32> to vector<2x32xf32>
    %27 = vector.extract_strided_slice %24 {offsets = [0, 32], sizes = [2, 32], strides = [1, 1]} : vector<2x128xf32> to vector<2x32xf32>
    %28 = vector.extract_strided_slice %25 {offsets = [0, 64], sizes = [2, 32], strides = [1, 1]} : vector<2x128xf32> to vector<2x32xf32>
    %29 = vector.extract_strided_slice %24 {offsets = [0, 96], sizes = [2, 32], strides = [1, 1]} : vector<2x128xf32> to vector<2x32xf32>
    %30 = arith.mulf %27, %16 : vector<2x32xf32>
    %31 = arith.mulf %26, %28 : vector<2x32xf32>
    %32 = arith.addf %30, %31 : vector<2x32xf32>
    %33 = math.tanh %32 : vector<2x32xf32>
    %34 = arith.mulf %29, %33 : vector<2x32xf32>
    %c0_25 = arith.constant 0 : index
    %c0_26 = arith.constant 0 : index
    %35 = vector.load %arg10[%c0_25, %c0_26] : memref<16x64xf32, #tpu.memory_space<vmem>>, vector<2x32xf32>
    tpu.vector_store %arg10[%c0_25, %c0_26], %34 {strides = array<i32>} : memref<16x64xf32, #tpu.memory_space<vmem>>, vector<2x32xf32>,
    %c2 = arith.constant 2 : index
    %c0_27 = arith.constant 0 : index
    %36 = vector.load %arg11[%c2, %c0_27] : memref<16x128xf32, #tpu.memory_space<vmem>>, vector<2x128xf32>
    %cst_28 = arith.constant dense<0.000000e+00> : vector<2x128xf32>
    %37 = tpu.matmul %34, %5, %cst_28 {dimension_numbers = #tpu.dot_dimension_numbers<[1], [0], [0], [1], [0, 0, 1, 1], [], []>} : vector<2x32xf32>, vector<32x128xf32>, vector<2x128xf32> -> vector<2x128xf32>
    %38 = arith.addf %36, %37 : vector<2x128xf32>
    %39 = arith.negf %38 : vector<2x128xf32>
    %40 = math.exp %39 : vector<2x128xf32>
    %cst_29 = arith.constant 1.000000e+00 : f32
    %41 = vector.broadcast %cst_29 : f32 to vector<2x128xf32>
    %42 = arith.addf %41, %40 : vector<2x128xf32>
    %43 = arith.divf %41, %42 : vector<2x128xf32>
    %44 = math.tanh %38 : vector<2x128xf32>
    %45 = vector.extract_strided_slice %43 {offsets = [0, 0], sizes = [2, 32], strides = [1, 1]} : vector<2x128xf32> to vector<2x32xf32>
    %46 = vector.extract_strided_slice %43 {offsets = [0, 32], sizes = [2, 32], strides = [1, 1]} : vector<2x128xf32> to vector<2x32xf32>
    %47 = vector.extract_strided_slice %44 {offsets = [0, 64], sizes = [2, 32], strides = [1, 1]} : vector<2x128xf32> to vector<2x32xf32>
    %48 = vector.extract_strided_slice %43 {offsets = [0, 96], sizes = [2, 32], strides = [1, 1]} : vector<2x128xf32> to vector<2x32xf32>
    %49 = arith.mulf %46, %32 : vector<2x32xf32>
    %50 = arith.mulf %45, %47 : vector<2x32xf32>
    %51 = arith.addf %49, %50 : vector<2x32xf32>
    %52 = math.tanh %51 : vector<2x32xf32>
    %53 = arith.mulf %48, %52 : vector<2x32xf32>
    %c2_30 = arith.constant 2 : index
    %c0_31 = arith.constant 0 : index
    %54 = vector.load %arg10[%c2_30, %c0_31] : memref<16x64xf32, #tpu.memory_space<vmem>>, vector<2x32xf32>
    tpu.vector_store %arg10[%c2_30, %c0_31], %53 {strides = array<i32>} : memref<16x64xf32, #tpu.memory_space<vmem>>, vector<2x32xf32>,
    %c4 = arith.constant 4 : index
    %c0_32 = arith.constant 0 : index
    %55 = vector.load %arg11[%c4, %c0_32] : memref<16x128xf32, #tpu.memory_space<vmem>>, vector<2x128xf32>
    %cst_33 = arith.constant dense<0.000000e+00> : vector<2x128xf32>
    %56 = tpu.matmul %53, %5, %cst_33 {dimension_numbers = #tpu.dot_dimension_numbers<[1], [0], [0], [1], [0, 0, 1, 1], [], []>} : vector<2x32xf32>, vector<32x128xf32>, vector<2x128xf32> -> vector<2x128xf32>
    %57 = arith.addf %55, %56 : vector<2x128xf32>
    %58 = arith.negf %57 : vector<2x128xf32>
    %59 = math.exp %58 : vector<2x128xf32>
    %cst_34 = arith.constant 1.000000e+00 : f32
    %60 = vector.broadcast %cst_34 : f32 to vector<2x128xf32>
    %61 = arith.addf %60, %59 : vector<2x128xf32>
    %62 = arith.divf %60, %61 : vector<2x128xf32>
    %63 = math.tanh %57 : vector<2x128xf32>
    %64 = vector.extract_strided_slice %62 {offsets = [0, 0], sizes = [2, 32], strides = [1, 1]} : vector<2x128xf32> to vector<2x32xf32>
    %65 = vector.extract_strided_slice %62 {offsets = [0, 32], sizes = [2, 32], strides = [1, 1]} : vector<2x128xf32> to vector<2x32xf32>
    %66 = vector.extract_strided_slice %63 {offsets = [0, 64], sizes = [2, 32], strides = [1, 1]} : vector<2x128xf32> to vector<2x32xf32>
    %67 = vector.extract_strided_slice %62 {offsets = [0, 96], sizes = [2, 32], strides = [1, 1]} : vector<2x128xf32> to vector<2x32xf32>
    %68 = arith.mulf %65, %51 : vector<2x32xf32>
    %69 = arith.mulf %64, %66 : vector<2x32xf32>
    %70 = arith.addf %68, %69 : vector<2x32xf32>
    %71 = math.tanh %70 : vector<2x32xf32>
    %72 = arith.mulf %67, %71 : vector<2x32xf32>
    %c4_35 = arith.constant 4 : index
    %c0_36 = arith.constant 0 : index
    %73 = vector.load %arg10[%c4_35, %c0_36] : memref<16x64xf32, #tpu.memory_space<vmem>>, vector<2x32xf32>
    tpu.vector_store %arg10[%c4_35, %c0_36], %72 {strides = array<i32>} : memref<16x64xf32, #tpu.memory_space<vmem>>, vector<2x32xf32>,
    %c6 = arith.constant 6 : index
    %c0_37 = arith.constant 0 : index
    %74 = vector.load %arg11[%c6, %c0_37] : memref<16x128xf32, #tpu.memory_space<vmem>>, vector<2x128xf32>
    %cst_38 = arith.constant dense<0.000000e+00> : vector<2x128xf32>
    %75 = tpu.matmul %72, %5, %cst_38 {dimension_numbers = #tpu.dot_dimension_numbers<[1], [0], [0], [1], [0, 0, 1, 1], [], []>} : vector<2x32xf32>, vector<32x128xf32>, vector<2x128xf32> -> vector<2x128xf32>
    %76 = arith.addf %74, %75 : vector<2x128xf32>
    %77 = arith.negf %76 : vector<2x128xf32>
    %78 = math.exp %77 : vector<2x128xf32>
    %cst_39 = arith.constant 1.000000e+00 : f32
    %79 = vector.broadcast %cst_39 : f32 to vector<2x128xf32>
    %80 = arith.addf %79, %78 : vector<2x128xf32>
    %81 = arith.divf %79, %80 : vector<2x128xf32>
    %82 = math.tanh %76 : vector<2x128xf32>
    %83 = vector.extract_strided_slice %81 {offsets = [0, 0], sizes = [2, 32], strides = [1, 1]} : vector<2x128xf32> to vector<2x32xf32>
    %84 = vector.extract_strided_slice %81 {offsets = [0, 32], sizes = [2, 32], strides = [1, 1]} : vector<2x128xf32> to vector<2x32xf32>
    %85 = vector.extract_strided_slice %82 {offsets = [0, 64], sizes = [2, 32], strides = [1, 1]} : vector<2x128xf32> to vector<2x32xf32>
    %86 = vector.extract_strided_slice %81 {offsets = [0, 96], sizes = [2, 32], strides = [1, 1]} : vector<2x128xf32> to vector<2x32xf32>
    %87 = arith.mulf %84, %70 : vector<2x32xf32>
    %88 = arith.mulf %83, %85 : vector<2x32xf32>
    %89 = arith.addf %87, %88 : vector<2x32xf32>
    %90 = math.tanh %89 : vector<2x32xf32>
    %91 = arith.mulf %86, %90 : vector<2x32xf32>
    %c6_40 = arith.constant 6 : index
    %c0_41 = arith.constant 0 : index
    %92 = vector.load %arg10[%c6_40, %c0_41] : memref<16x64xf32, #tpu.memory_space<vmem>>, vector<2x32xf32>
    tpu.vector_store %arg10[%c6_40, %c0_41], %91 {strides = array<i32>} : memref<16x64xf32, #tpu.memory_space<vmem>>, vector<2x32xf32>,
    %c8 = arith.constant 8 : index
    %c0_42 = arith.constant 0 : index
    %93 = vector.load %arg11[%c8, %c0_42] : memref<16x128xf32, #tpu.memory_space<vmem>>, vector<2x128xf32>
    %cst_43 = arith.constant dense<0.000000e+00> : vector<2x128xf32>
    %94 = tpu.matmul %91, %5, %cst_43 {dimension_numbers = #tpu.dot_dimension_numbers<[1], [0], [0], [1], [0, 0, 1, 1], [], []>} : vector<2x32xf32>, vector<32x128xf32>, vector<2x128xf32> -> vector<2x128xf32>
    %95 = arith.addf %93, %94 : vector<2x128xf32>
    %96 = arith.negf %95 : vector<2x128xf32>
    %97 = math.exp %96 : vector<2x128xf32>
    %cst_44 = arith.constant 1.000000e+00 : f32
    %98 = vector.broadcast %cst_44 : f32 to vector<2x128xf32>
    %99 = arith.addf %98, %97 : vector<2x128xf32>
    %100 = arith.divf %98, %99 : vector<2x128xf32>
    %101 = math.tanh %95 : vector<2x128xf32>
    %102 = vector.extract_strided_slice %100 {offsets = [0, 0], sizes = [2, 32], strides = [1, 1]} : vector<2x128xf32> to vector<2x32xf32>
    %103 = vector.extract_strided_slice %100 {offsets = [0, 32], sizes = [2, 32], strides = [1, 1]} : vector<2x128xf32> to vector<2x32xf32>
    %104 = vector.extract_strided_slice %101 {offsets = [0, 64], sizes = [2, 32], strides = [1, 1]} : vector<2x128xf32> to vector<2x32xf32>
    %105 = vector.extract_strided_slice %100 {offsets = [0, 96], sizes = [2, 32], strides = [1, 1]} : vector<2x128xf32> to vector<2x32xf32>
    %106 = arith.mulf %103, %89 : vector<2x32xf32>
    %107 = arith.mulf %102, %104 : vector<2x32xf32>
    %108 = arith.addf %106, %107 : vector<2x32xf32>
    %109 = math.tanh %108 : vector<2x32xf32>
    %110 = arith.mulf %105, %109 : vector<2x32xf32>
    %c8_45 = arith.constant 8 : index
    %c0_46 = arith.constant 0 : index
    %111 = vector.load %arg10[%c8_45, %c0_46] : memref<16x64xf32, #tpu.memory_space<vmem>>, vector<2x32xf32>
    tpu.vector_store %arg10[%c8_45, %c0_46], %110 {strides = array<i32>} : memref<16x64xf32, #tpu.memory_space<vmem>>, vector<2x32xf32>,
    %c10 = arith.constant 10 : index
    %c0_47 = arith.constant 0 : index
    %112 = vector.load %arg11[%c10, %c0_47] : memref<16x128xf32, #tpu.memory_space<vmem>>, vector<2x128xf32>
    %cst_48 = arith.constant dense<0.000000e+00> : vector<2x128xf32>
    %113 = tpu.matmul %110, %5, %cst_48 {dimension_numbers = #tpu.dot_dimension_numbers<[1], [0], [0], [1], [0, 0, 1, 1], [], []>} : vector<2x32xf32>, vector<32x128xf32>, vector<2x128xf32> -> vector<2x128xf32>
    %114 = arith.addf %112, %113 : vector<2x128xf32>
    %115 = arith.negf %114 : vector<2x128xf32>
    %116 = math.exp %115 : vector<2x128xf32>
    %cst_49 = arith.constant 1.000000e+00 : f32
    %117 = vector.broadcast %cst_49 : f32 to vector<2x128xf32>
    %118 = arith.addf %117, %116 : vector<2x128xf32>
    %119 = arith.divf %117, %118 : vector<2x128xf32>
    %120 = math.tanh %114 : vector<2x128xf32>
    %121 = vector.extract_strided_slice %119 {offsets = [0, 0], sizes = [2, 32], strides = [1, 1]} : vector<2x128xf32> to vector<2x32xf32>
    %122 = vector.extract_strided_slice %119 {offsets = [0, 32], sizes = [2, 32], strides = [1, 1]} : vector<2x128xf32> to vector<2x32xf32>
    %123 = vector.extract_strided_slice %120 {offsets = [0, 64], sizes = [2, 32], strides = [1, 1]} : vector<2x128xf32> to vector<2x32xf32>
    %124 = vector.extract_strided_slice %119 {offsets = [0, 96], sizes = [2, 32], strides = [1, 1]} : vector<2x128xf32> to vector<2x32xf32>
    %125 = arith.mulf %122, %108 : vector<2x32xf32>
    %126 = arith.mulf %121, %123 : vector<2x32xf32>
    %127 = arith.addf %125, %126 : vector<2x32xf32>
    %128 = math.tanh %127 : vector<2x32xf32>
    %129 = arith.mulf %124, %128 : vector<2x32xf32>
    %c10_50 = arith.constant 10 : index
    %c0_51 = arith.constant 0 : index
    %130 = vector.load %arg10[%c10_50, %c0_51] : memref<16x64xf32, #tpu.memory_space<vmem>>, vector<2x32xf32>
    tpu.vector_store %arg10[%c10_50, %c0_51], %129 {strides = array<i32>} : memref<16x64xf32, #tpu.memory_space<vmem>>, vector<2x32xf32>,
    %c12 = arith.constant 12 : index
    %c0_52 = arith.constant 0 : index
    %131 = vector.load %arg11[%c12, %c0_52] : memref<16x128xf32, #tpu.memory_space<vmem>>, vector<2x128xf32>
    %cst_53 = arith.constant dense<0.000000e+00> : vector<2x128xf32>
    %132 = tpu.matmul %129, %5, %cst_53 {dimension_numbers = #tpu.dot_dimension_numbers<[1], [0], [0], [1], [0, 0, 1, 1], [], []>} : vector<2x32xf32>, vector<32x128xf32>, vector<2x128xf32> -> vector<2x128xf32>
    %133 = arith.addf %131, %132 : vector<2x128xf32>
    %134 = arith.negf %133 : vector<2x128xf32>
    %135 = math.exp %134 : vector<2x128xf32>
    %cst_54 = arith.constant 1.000000e+00 : f32
    %136 = vector.broadcast %cst_54 : f32 to vector<2x128xf32>
    %137 = arith.addf %136, %135 : vector<2x128xf32>
    %138 = arith.divf %136, %137 : vector<2x128xf32>
    %139 = math.tanh %133 : vector<2x128xf32>
    %140 = vector.extract_strided_slice %138 {offsets = [0, 0], sizes = [2, 32], strides = [1, 1]} : vector<2x128xf32> to vector<2x32xf32>
    %141 = vector.extract_strided_slice %138 {offsets = [0, 32], sizes = [2, 32], strides = [1, 1]} : vector<2x128xf32> to vector<2x32xf32>
    %142 = vector.extract_strided_slice %139 {offsets = [0, 64], sizes = [2, 32], strides = [1, 1]} : vector<2x128xf32> to vector<2x32xf32>
    %143 = vector.extract_strided_slice %138 {offsets = [0, 96], sizes = [2, 32], strides = [1, 1]} : vector<2x128xf32> to vector<2x32xf32>
    %144 = arith.mulf %141, %127 : vector<2x32xf32>
    %145 = arith.mulf %140, %142 : vector<2x32xf32>
    %146 = arith.addf %144, %145 : vector<2x32xf32>
    %147 = math.tanh %146 : vector<2x32xf32>
    %148 = arith.mulf %143, %147 : vector<2x32xf32>
    %c12_55 = arith.constant 12 : index
    %c0_56 = arith.constant 0 : index
    %149 = vector.load %arg10[%c12_55, %c0_56] : memref<16x64xf32, #tpu.memory_space<vmem>>, vector<2x32xf32>
    tpu.vector_store %arg10[%c12_55, %c0_56], %148 {strides = array<i32>} : memref<16x64xf32, #tpu.memory_space<vmem>>, vector<2x32xf32>,
    %c14 = arith.constant 14 : index
    %c0_57 = arith.constant 0 : index
    %150 = vector.load %arg11[%c14, %c0_57] : memref<16x128xf32, #tpu.memory_space<vmem>>, vector<2x128xf32>
    %cst_58 = arith.constant dense<0.000000e+00> : vector<2x128xf32>
    %151 = tpu.matmul %148, %5, %cst_58 {dimension_numbers = #tpu.dot_dimension_numbers<[1], [0], [0], [1], [0, 0, 1, 1], [], []>} : vector<2x32xf32>, vector<32x128xf32>, vector<2x128xf32> -> vector<2x128xf32>
    %152 = arith.addf %150, %151 : vector<2x128xf32>
    %153 = arith.negf %152 : vector<2x128xf32>
    %154 = math.exp %153 : vector<2x128xf32>
    %cst_59 = arith.constant 1.000000e+00 : f32
    %155 = vector.broadcast %cst_59 : f32 to vector<2x128xf32>
    %156 = arith.addf %155, %154 : vector<2x128xf32>
    %157 = arith.divf %155, %156 : vector<2x128xf32>
    %158 = math.tanh %152 : vector<2x128xf32>
    %159 = vector.extract_strided_slice %157 {offsets = [0, 0], sizes = [2, 32], strides = [1, 1]} : vector<2x128xf32> to vector<2x32xf32>
    %160 = vector.extract_strided_slice %157 {offsets = [0, 32], sizes = [2, 32], strides = [1, 1]} : vector<2x128xf32> to vector<2x32xf32>
    %161 = vector.extract_strided_slice %158 {offsets = [0, 64], sizes = [2, 32], strides = [1, 1]} : vector<2x128xf32> to vector<2x32xf32>
    %162 = vector.extract_strided_slice %157 {offsets = [0, 96], sizes = [2, 32], strides = [1, 1]} : vector<2x128xf32> to vector<2x32xf32>
    %163 = arith.mulf %160, %146 : vector<2x32xf32>
    %164 = arith.mulf %159, %161 : vector<2x32xf32>
    %165 = arith.addf %163, %164 : vector<2x32xf32>
    %166 = math.tanh %165 : vector<2x32xf32>
    %167 = arith.mulf %162, %166 : vector<2x32xf32>
    %c14_60 = arith.constant 14 : index
    %c0_61 = arith.constant 0 : index
    %168 = vector.load %arg10[%c14_60, %c0_61] : memref<16x64xf32, #tpu.memory_space<vmem>>, vector<2x32xf32>
    tpu.vector_store %arg10[%c14_60, %c0_61], %167 {strides = array<i32>} : memref<16x64xf32, #tpu.memory_space<vmem>>, vector<2x32xf32>,
    %c0_62 = arith.constant 0 : index
    %c0_63 = arith.constant 0 : index
    %c0_64 = arith.constant 0 : index
    %169 = vector.load %arg8[%c0_62, %c0_63, %c0_64] : memref<4x2x32xf32, #tpu.memory_space<vmem>>, vector<1x2x32xf32>
    %170 = vector.shape_cast %169 : vector<1x2x32xf32> to vector<2x32xf32>
    %171 = vector.shape_cast %167 : vector<2x32xf32> to vector<1x2x32xf32>
    tpu.vector_store %arg8[%c0_62, %c0_63, %c0_64], %171 {strides = array<i32>} : memref<4x2x32xf32, #tpu.memory_space<vmem>>, vector<1x2x32xf32>,
    %c0_65 = arith.constant 0 : index
    %c0_66 = arith.constant 0 : index
    %c0_67 = arith.constant 0 : index
    %172 = vector.load %arg9[%c0_65, %c0_66, %c0_67] : memref<4x2x32xf32, #tpu.memory_space<vmem>>, vector<1x2x32xf32>
    %173 = vector.shape_cast %172 : vector<1x2x32xf32> to vector<2x32xf32>
    %174 = vector.shape_cast %165 : vector<2x32xf32> to vector<1x2x32xf32>
    tpu.vector_store %arg9[%c0_65, %c0_66, %c0_67], %174 {strides = array<i32>} : memref<4x2x32xf32, #tpu.memory_space<vmem>>, vector<1x2x32xf32>,
    %c1 = arith.constant 1 : index
    %c0_68 = arith.constant 0 : index
    %c0_69 = arith.constant 0 : index
    %175 = vector.load %arg2[%c1, %c0_68, %c0_69] : memref<4x64x128xf32, #tpu.memory_space<vmem>>, vector<1x64x128xf32>
    %176 = vector.shape_cast %175 : vector<1x64x128xf32> to vector<64x128xf32>
    %c1_70 = arith.constant 1 : index
    %c0_71 = arith.constant 0 : index
    %c0_72 = arith.constant 0 : index
    %177 = vector.load %arg3[%c1_70, %c0_71, %c0_72] : memref<4x32x128xf32, #tpu.memory_space<vmem>>, vector<1x32x128xf32>
    %178 = vector.shape_cast %177 : vector<1x32x128xf32> to vector<32x128xf32>
    %c1_73 = arith.constant 1 : index
    %c0_74 = arith.constant 0 : index
    %c0_75 = arith.constant 0 : index
    %179 = vector.load %arg4[%c1_73, %c0_74, %c0_75] : memref<4x1x128xf32, #tpu.memory_space<vmem>>, vector<1x1x128xf32>
    %180 = vector.shape_cast %179 : vector<1x1x128xf32> to vector<1x128xf32>
    %c0_76 = arith.constant 0 : index
    %c0_77 = arith.constant 0 : index
    %181 = vector.load %arg1[%c0_76, %c0_77] : memref<16x64xf32, #tpu.memory_space<vmem>>, vector<16x64xf32>
    %cst_78 = arith.constant dense<0.000000e+00> : vector<16x128xf32>
    %182 = tpu.matmul %181, %176, %cst_78 {dimension_numbers = #tpu.dot_dimension_numbers<[1], [0], [0], [1], [0, 0, 1, 1], [], []>} : vector<16x64xf32>, vector<64x128xf32>, vector<16x128xf32> -> vector<16x128xf32>
    %183 = vector.broadcast %180 : vector<1x128xf32> to vector<16x128xf32>
    %184 = arith.addf %182, %183 : vector<16x128xf32>
    %c0_79 = arith.constant 0 : index
    %c0_80 = arith.constant 0 : index
    %185 = vector.load %arg11[%c0_79, %c0_80] : memref<16x128xf32, #tpu.memory_space<vmem>>, vector<16x128xf32>
    tpu.vector_store %arg11[%c0_79, %c0_80], %184 {strides = array<i32>} : memref<16x128xf32, #tpu.memory_space<vmem>>, vector<16x128xf32>,
    %c1_81 = arith.constant 1 : index
    %c0_82 = arith.constant 0 : index
    %c0_83 = arith.constant 0 : index
    %186 = vector.load %arg5[%c1_81, %c0_82, %c0_83] : memref<4x2x32xf32, #tpu.memory_space<vmem>>, vector<1x2x32xf32>
    %187 = vector.shape_cast %186 : vector<1x2x32xf32> to vector<2x32xf32>
    %c1_84 = arith.constant 1 : index
    %c0_85 = arith.constant 0 : index
    %c0_86 = arith.constant 0 : index
    %188 = vector.load %arg6[%c1_84, %c0_85, %c0_86] : memref<4x2x32xf32, #tpu.memory_space<vmem>>, vector<1x2x32xf32>
    %189 = vector.shape_cast %188 : vector<1x2x32xf32> to vector<2x32xf32>
    %c14_87 = arith.constant 14 : index
    %c0_88 = arith.constant 0 : index
    %190 = vector.load %arg11[%c14_87, %c0_88] : memref<16x128xf32, #tpu.memory_space<vmem>>, vector<2x128xf32>
    %cst_89 = arith.constant dense<0.000000e+00> : vector<2x128xf32>
    %191 = tpu.matmul %187, %178, %cst_89 {dimension_numbers = #tpu.dot_dimension_numbers<[1], [0], [0], [1], [0, 0, 1, 1], [], []>} : vector<2x32xf32>, vector<32x128xf32>, vector<2x128xf32> -> vector<2x128xf32>
    %192 = arith.addf %190, %191 : vector<2x128xf32>
    %193 = arith.negf %192 : vector<2x128xf32>
    %194 = math.exp %193 : vector<2x128xf32>
    %cst_90 = arith.constant 1.000000e+00 : f32
    %195 = vector.broadcast %cst_90 : f32 to vector<2x128xf32>
    %196 = arith.addf %195, %194 : vector<2x128xf32>
    %197 = arith.divf %195, %196 : vector<2x128xf32>
    %198 = math.tanh %192 : vector<2x128xf32>
    %199 = vector.extract_strided_slice %197 {offsets = [0, 0], sizes = [2, 32], strides = [1, 1]} : vector<2x128xf32> to vector<2x32xf32>
    %200 = vector.extract_strided_slice %197 {offsets = [0, 32], sizes = [2, 32], strides = [1, 1]} : vector<2x128xf32> to vector<2x32xf32>
    %201 = vector.extract_strided_slice %198 {offsets = [0, 64], sizes = [2, 32], strides = [1, 1]} : vector<2x128xf32> to vector<2x32xf32>
    %202 = vector.extract_strided_slice %197 {offsets = [0, 96], sizes = [2, 32], strides = [1, 1]} : vector<2x128xf32> to vector<2x32xf32>
    %203 = arith.mulf %200, %189 : vector<2x32xf32>
    %204 = arith.mulf %199, %201 : vector<2x32xf32>
    %205 = arith.addf %203, %204 : vector<2x32xf32>
    %206 = math.tanh %205 : vector<2x32xf32>
    %207 = arith.mulf %202, %206 : vector<2x32xf32>
    %c14_91 = arith.constant 14 : index
    %c32 = arith.constant 32 : index
    %208 = vector.load %arg10[%c14_91, %c32] : memref<16x64xf32, #tpu.memory_space<vmem>>, vector<2x32xf32>
    tpu.vector_store %arg10[%c14_91, %c32], %207 {strides = array<i32>} : memref<16x64xf32, #tpu.memory_space<vmem>>, vector<2x32xf32>,
    %c12_92 = arith.constant 12 : index
    %c0_93 = arith.constant 0 : index
    %209 = vector.load %arg11[%c12_92, %c0_93] : memref<16x128xf32, #tpu.memory_space<vmem>>, vector<2x128xf32>
    %cst_94 = arith.constant dense<0.000000e+00> : vector<2x128xf32>
    %210 = tpu.matmul %207, %178, %cst_94 {dimension_numbers = #tpu.dot_dimension_numbers<[1], [0], [0], [1], [0, 0, 1, 1], [], []>} : vector<2x32xf32>, vector<32x128xf32>, vector<2x128xf32> -> vector<2x128xf32>
    %211 = arith.addf %209, %210 : vector<2x128xf32>
    %212 = arith.negf %211 : vector<2x128xf32>
    %213 = math.exp %212 : vector<2x128xf32>
    %cst_95 = arith.constant 1.000000e+00 : f32
    %214 = vector.broadcast %cst_95 : f32 to vector<2x128xf32>
    %215 = arith.addf %214, %213 : vector<2x128xf32>
    %216 = arith.divf %214, %215 : vector<2x128xf32>
    %217 = math.tanh %211 : vector<2x128xf32>
    %218 = vector.extract_strided_slice %216 {offsets = [0, 0], sizes = [2, 32], strides = [1, 1]} : vector<2x128xf32> to vector<2x32xf32>
    %219 = vector.extract_strided_slice %216 {offsets = [0, 32], sizes = [2, 32], strides = [1, 1]} : vector<2x128xf32> to vector<2x32xf32>
    %220 = vector.extract_strided_slice %217 {offsets = [0, 64], sizes = [2, 32], strides = [1, 1]} : vector<2x128xf32> to vector<2x32xf32>
    %221 = vector.extract_strided_slice %216 {offsets = [0, 96], sizes = [2, 32], strides = [1, 1]} : vector<2x128xf32> to vector<2x32xf32>
    %222 = arith.mulf %219, %205 : vector<2x32xf32>
    %223 = arith.mulf %218, %220 : vector<2x32xf32>
    %224 = arith.addf %222, %223 : vector<2x32xf32>
    %225 = math.tanh %224 : vector<2x32xf32>
    %226 = arith.mulf %221, %225 : vector<2x32xf32>
    %c12_96 = arith.constant 12 : index
    %c32_97 = arith.constant 32 : index
    %227 = vector.load %arg10[%c12_96, %c32_97] : memref<16x64xf32, #tpu.memory_space<vmem>>, vector<2x32xf32>
    tpu.vector_store %arg10[%c12_96, %c32_97], %226 {strides = array<i32>} : memref<16x64xf32, #tpu.memory_space<vmem>>, vector<2x32xf32>,
    %c10_98 = arith.constant 10 : index
    %c0_99 = arith.constant 0 : index
    %228 = vector.load %arg11[%c10_98, %c0_99] : memref<16x128xf32, #tpu.memory_space<vmem>>, vector<2x128xf32>
    %cst_100 = arith.constant dense<0.000000e+00> : vector<2x128xf32>
    %229 = tpu.matmul %226, %178, %cst_100 {dimension_numbers = #tpu.dot_dimension_numbers<[1], [0], [0], [1], [0, 0, 1, 1], [], []>} : vector<2x32xf32>, vector<32x128xf32>, vector<2x128xf32> -> vector<2x128xf32>
    %230 = arith.addf %228, %229 : vector<2x128xf32>
    %231 = arith.negf %230 : vector<2x128xf32>
    %232 = math.exp %231 : vector<2x128xf32>
    %cst_101 = arith.constant 1.000000e+00 : f32
    %233 = vector.broadcast %cst_101 : f32 to vector<2x128xf32>
    %234 = arith.addf %233, %232 : vector<2x128xf32>
    %235 = arith.divf %233, %234 : vector<2x128xf32>
    %236 = math.tanh %230 : vector<2x128xf32>
    %237 = vector.extract_strided_slice %235 {offsets = [0, 0], sizes = [2, 32], strides = [1, 1]} : vector<2x128xf32> to vector<2x32xf32>
    %238 = vector.extract_strided_slice %235 {offsets = [0, 32], sizes = [2, 32], strides = [1, 1]} : vector<2x128xf32> to vector<2x32xf32>
    %239 = vector.extract_strided_slice %236 {offsets = [0, 64], sizes = [2, 32], strides = [1, 1]} : vector<2x128xf32> to vector<2x32xf32>
    %240 = vector.extract_strided_slice %235 {offsets = [0, 96], sizes = [2, 32], strides = [1, 1]} : vector<2x128xf32> to vector<2x32xf32>
    %241 = arith.mulf %238, %224 : vector<2x32xf32>
    %242 = arith.mulf %237, %239 : vector<2x32xf32>
    %243 = arith.addf %241, %242 : vector<2x32xf32>
    %244 = math.tanh %243 : vector<2x32xf32>
    %245 = arith.mulf %240, %244 : vector<2x32xf32>
    %c10_102 = arith.constant 10 : index
    %c32_103 = arith.constant 32 : index
    %246 = vector.load %arg10[%c10_102, %c32_103] : memref<16x64xf32, #tpu.memory_space<vmem>>, vector<2x32xf32>
    tpu.vector_store %arg10[%c10_102, %c32_103], %245 {strides = array<i32>} : memref<16x64xf32, #tpu.memory_space<vmem>>, vector<2x32xf32>,
    %c8_104 = arith.constant 8 : index
    %c0_105 = arith.constant 0 : index
    %247 = vector.load %arg11[%c8_104, %c0_105] : memref<16x128xf32, #tpu.memory_space<vmem>>, vector<2x128xf32>
    %cst_106 = arith.constant dense<0.000000e+00> : vector<2x128xf32>
    %248 = tpu.matmul %245, %178, %cst_106 {dimension_numbers = #tpu.dot_dimension_numbers<[1], [0], [0], [1], [0, 0, 1, 1], [], []>} : vector<2x32xf32>, vector<32x128xf32>, vector<2x128xf32> -> vector<2x128xf32>
    %249 = arith.addf %247, %248 : vector<2x128xf32>
    %250 = arith.negf %249 : vector<2x128xf32>
    %251 = math.exp %250 : vector<2x128xf32>
    %cst_107 = arith.constant 1.000000e+00 : f32
    %252 = vector.broadcast %cst_107 : f32 to vector<2x128xf32>
    %253 = arith.addf %252, %251 : vector<2x128xf32>
    %254 = arith.divf %252, %253 : vector<2x128xf32>
    %255 = math.tanh %249 : vector<2x128xf32>
    %256 = vector.extract_strided_slice %254 {offsets = [0, 0], sizes = [2, 32], strides = [1, 1]} : vector<2x128xf32> to vector<2x32xf32>
    %257 = vector.extract_strided_slice %254 {offsets = [0, 32], sizes = [2, 32], strides = [1, 1]} : vector<2x128xf32> to vector<2x32xf32>
    %258 = vector.extract_strided_slice %255 {offsets = [0, 64], sizes = [2, 32], strides = [1, 1]} : vector<2x128xf32> to vector<2x32xf32>
    %259 = vector.extract_strided_slice %254 {offsets = [0, 96], sizes = [2, 32], strides = [1, 1]} : vector<2x128xf32> to vector<2x32xf32>
    %260 = arith.mulf %257, %243 : vector<2x32xf32>
    %261 = arith.mulf %256, %258 : vector<2x32xf32>
    %262 = arith.addf %260, %261 : vector<2x32xf32>
    %263 = math.tanh %262 : vector<2x32xf32>
    %264 = arith.mulf %259, %263 : vector<2x32xf32>
    %c8_108 = arith.constant 8 : index
    %c32_109 = arith.constant 32 : index
    %265 = vector.load %arg10[%c8_108, %c32_109] : memref<16x64xf32, #tpu.memory_space<vmem>>, vector<2x32xf32>
    tpu.vector_store %arg10[%c8_108, %c32_109], %264 {strides = array<i32>} : memref<16x64xf32, #tpu.memory_space<vmem>>, vector<2x32xf32>,
    %c6_110 = arith.constant 6 : index
    %c0_111 = arith.constant 0 : index
    %266 = vector.load %arg11[%c6_110, %c0_111] : memref<16x128xf32, #tpu.memory_space<vmem>>, vector<2x128xf32>
    %cst_112 = arith.constant dense<0.000000e+00> : vector<2x128xf32>
    %267 = tpu.matmul %264, %178, %cst_112 {dimension_numbers = #tpu.dot_dimension_numbers<[1], [0], [0], [1], [0, 0, 1, 1], [], []>} : vector<2x32xf32>, vector<32x128xf32>, vector<2x128xf32> -> vector<2x128xf32>
    %268 = arith.addf %266, %267 : vector<2x128xf32>
    %269 = arith.negf %268 : vector<2x128xf32>
    %270 = math.exp %269 : vector<2x128xf32>
    %cst_113 = arith.constant 1.000000e+00 : f32
    %271 = vector.broadcast %cst_113 : f32 to vector<2x128xf32>
    %272 = arith.addf %271, %270 : vector<2x128xf32>
    %273 = arith.divf %271, %272 : vector<2x128xf32>
    %274 = math.tanh %268 : vector<2x128xf32>
    %275 = vector.extract_strided_slice %273 {offsets = [0, 0], sizes = [2, 32], strides = [1, 1]} : vector<2x128xf32> to vector<2x32xf32>
    %276 = vector.extract_strided_slice %273 {offsets = [0, 32], sizes = [2, 32], strides = [1, 1]} : vector<2x128xf32> to vector<2x32xf32>
    %277 = vector.extract_strided_slice %274 {offsets = [0, 64], sizes = [2, 32], strides = [1, 1]} : vector<2x128xf32> to vector<2x32xf32>
    %278 = vector.extract_strided_slice %273 {offsets = [0, 96], sizes = [2, 32], strides = [1, 1]} : vector<2x128xf32> to vector<2x32xf32>
    %279 = arith.mulf %276, %262 : vector<2x32xf32>
    %280 = arith.mulf %275, %277 : vector<2x32xf32>
    %281 = arith.addf %279, %280 : vector<2x32xf32>
    %282 = math.tanh %281 : vector<2x32xf32>
    %283 = arith.mulf %278, %282 : vector<2x32xf32>
    %c6_114 = arith.constant 6 : index
    %c32_115 = arith.constant 32 : index
    %284 = vector.load %arg10[%c6_114, %c32_115] : memref<16x64xf32, #tpu.memory_space<vmem>>, vector<2x32xf32>
    tpu.vector_store %arg10[%c6_114, %c32_115], %283 {strides = array<i32>} : memref<16x64xf32, #tpu.memory_space<vmem>>, vector<2x32xf32>,
    %c4_116 = arith.constant 4 : index
    %c0_117 = arith.constant 0 : index
    %285 = vector.load %arg11[%c4_116, %c0_117] : memref<16x128xf32, #tpu.memory_space<vmem>>, vector<2x128xf32>
    %cst_118 = arith.constant dense<0.000000e+00> : vector<2x128xf32>
    %286 = tpu.matmul %283, %178, %cst_118 {dimension_numbers = #tpu.dot_dimension_numbers<[1], [0], [0], [1], [0, 0, 1, 1], [], []>} : vector<2x32xf32>, vector<32x128xf32>, vector<2x128xf32> -> vector<2x128xf32>
    %287 = arith.addf %285, %286 : vector<2x128xf32>
    %288 = arith.negf %287 : vector<2x128xf32>
    %289 = math.exp %288 : vector<2x128xf32>
    %cst_119 = arith.constant 1.000000e+00 : f32
    %290 = vector.broadcast %cst_119 : f32 to vector<2x128xf32>
    %291 = arith.addf %290, %289 : vector<2x128xf32>
    %292 = arith.divf %290, %291 : vector<2x128xf32>
    %293 = math.tanh %287 : vector<2x128xf32>
    %294 = vector.extract_strided_slice %292 {offsets = [0, 0], sizes = [2, 32], strides = [1, 1]} : vector<2x128xf32> to vector<2x32xf32>
    %295 = vector.extract_strided_slice %292 {offsets = [0, 32], sizes = [2, 32], strides = [1, 1]} : vector<2x128xf32> to vector<2x32xf32>
    %296 = vector.extract_strided_slice %293 {offsets = [0, 64], sizes = [2, 32], strides = [1, 1]} : vector<2x128xf32> to vector<2x32xf32>
    %297 = vector.extract_strided_slice %292 {offsets = [0, 96], sizes = [2, 32], strides = [1, 1]} : vector<2x128xf32> to vector<2x32xf32>
    %298 = arith.mulf %295, %281 : vector<2x32xf32>
    %299 = arith.mulf %294, %296 : vector<2x32xf32>
    %300 = arith.addf %298, %299 : vector<2x32xf32>
    %301 = math.tanh %300 : vector<2x32xf32>
    %302 = arith.mulf %297, %301 : vector<2x32xf32>
    %c4_120 = arith.constant 4 : index
    %c32_121 = arith.constant 32 : index
    %303 = vector.load %arg10[%c4_120, %c32_121] : memref<16x64xf32, #tpu.memory_space<vmem>>, vector<2x32xf32>
    tpu.vector_store %arg10[%c4_120, %c32_121], %302 {strides = array<i32>} : memref<16x64xf32, #tpu.memory_space<vmem>>, vector<2x32xf32>,
    %c2_122 = arith.constant 2 : index
    %c0_123 = arith.constant 0 : index
    %304 = vector.load %arg11[%c2_122, %c0_123] : memref<16x128xf32, #tpu.memory_space<vmem>>, vector<2x128xf32>
    %cst_124 = arith.constant dense<0.000000e+00> : vector<2x128xf32>
    %305 = tpu.matmul %302, %178, %cst_124 {dimension_numbers = #tpu.dot_dimension_numbers<[1], [0], [0], [1], [0, 0, 1, 1], [], []>} : vector<2x32xf32>, vector<32x128xf32>, vector<2x128xf32> -> vector<2x128xf32>
    %306 = arith.addf %304, %305 : vector<2x128xf32>
    %307 = arith.negf %306 : vector<2x128xf32>
    %308 = math.exp %307 : vector<2x128xf32>
    %cst_125 = arith.constant 1.000000e+00 : f32
    %309 = vector.broadcast %cst_125 : f32 to vector<2x128xf32>
    %310 = arith.addf %309, %308 : vector<2x128xf32>
    %311 = arith.divf %309, %310 : vector<2x128xf32>
    %312 = math.tanh %306 : vector<2x128xf32>
    %313 = vector.extract_strided_slice %311 {offsets = [0, 0], sizes = [2, 32], strides = [1, 1]} : vector<2x128xf32> to vector<2x32xf32>
    %314 = vector.extract_strided_slice %311 {offsets = [0, 32], sizes = [2, 32], strides = [1, 1]} : vector<2x128xf32> to vector<2x32xf32>
    %315 = vector.extract_strided_slice %312 {offsets = [0, 64], sizes = [2, 32], strides = [1, 1]} : vector<2x128xf32> to vector<2x32xf32>
    %316 = vector.extract_strided_slice %311 {offsets = [0, 96], sizes = [2, 32], strides = [1, 1]} : vector<2x128xf32> to vector<2x32xf32>
    %317 = arith.mulf %314, %300 : vector<2x32xf32>
    %318 = arith.mulf %313, %315 : vector<2x32xf32>
    %319 = arith.addf %317, %318 : vector<2x32xf32>
    %320 = math.tanh %319 : vector<2x32xf32>
    %321 = arith.mulf %316, %320 : vector<2x32xf32>
    %c2_126 = arith.constant 2 : index
    %c32_127 = arith.constant 32 : index
    %322 = vector.load %arg10[%c2_126, %c32_127] : memref<16x64xf32, #tpu.memory_space<vmem>>, vector<2x32xf32>
    tpu.vector_store %arg10[%c2_126, %c32_127], %321 {strides = array<i32>} : memref<16x64xf32, #tpu.memory_space<vmem>>, vector<2x32xf32>,
    %c0_128 = arith.constant 0 : index
    %c0_129 = arith.constant 0 : index
    %323 = vector.load %arg11[%c0_128, %c0_129] : memref<16x128xf32, #tpu.memory_space<vmem>>, vector<2x128xf32>
    %cst_130 = arith.constant dense<0.000000e+00> : vector<2x128xf32>
    %324 = tpu.matmul %321, %178, %cst_130 {dimension_numbers = #tpu.dot_dimension_numbers<[1], [0], [0], [1], [0, 0, 1, 1], [], []>} : vector<2x32xf32>, vector<32x128xf32>, vector<2x128xf32> -> vector<2x128xf32>
    %325 = arith.addf %323, %324 : vector<2x128xf32>
    %326 = arith.negf %325 : vector<2x128xf32>
    %327 = math.exp %326 : vector<2x128xf32>
    %cst_131 = arith.constant 1.000000e+00 : f32
    %328 = vector.broadcast %cst_131 : f32 to vector<2x128xf32>
    %329 = arith.addf %328, %327 : vector<2x128xf32>
    %330 = arith.divf %328, %329 : vector<2x128xf32>
    %331 = math.tanh %325 : vector<2x128xf32>
    %332 = vector.extract_strided_slice %330 {offsets = [0, 0], sizes = [2, 32], strides = [1, 1]} : vector<2x128xf32> to vector<2x32xf32>
    %333 = vector.extract_strided_slice %330 {offsets = [0, 32], sizes = [2, 32], strides = [1, 1]} : vector<2x128xf32> to vector<2x32xf32>
    %334 = vector.extract_strided_slice %331 {offsets = [0, 64], sizes = [2, 32], strides = [1, 1]} : vector<2x128xf32> to vector<2x32xf32>
    %335 = vector.extract_strided_slice %330 {offsets = [0, 96], sizes = [2, 32], strides = [1, 1]} : vector<2x128xf32> to vector<2x32xf32>
    %336 = arith.mulf %333, %319 : vector<2x32xf32>
    %337 = arith.mulf %332, %334 : vector<2x32xf32>
    %338 = arith.addf %336, %337 : vector<2x32xf32>
    %339 = math.tanh %338 : vector<2x32xf32>
    %340 = arith.mulf %335, %339 : vector<2x32xf32>
    %c0_132 = arith.constant 0 : index
    %c32_133 = arith.constant 32 : index
    %341 = vector.load %arg10[%c0_132, %c32_133] : memref<16x64xf32, #tpu.memory_space<vmem>>, vector<2x32xf32>
    tpu.vector_store %arg10[%c0_132, %c32_133], %340 {strides = array<i32>} : memref<16x64xf32, #tpu.memory_space<vmem>>, vector<2x32xf32>,
    %c1_134 = arith.constant 1 : index
    %c0_135 = arith.constant 0 : index
    %c0_136 = arith.constant 0 : index
    %342 = vector.load %arg8[%c1_134, %c0_135, %c0_136] : memref<4x2x32xf32, #tpu.memory_space<vmem>>, vector<1x2x32xf32>
    %343 = vector.shape_cast %342 : vector<1x2x32xf32> to vector<2x32xf32>
    %344 = vector.shape_cast %340 : vector<2x32xf32> to vector<1x2x32xf32>
    tpu.vector_store %arg8[%c1_134, %c0_135, %c0_136], %344 {strides = array<i32>} : memref<4x2x32xf32, #tpu.memory_space<vmem>>, vector<1x2x32xf32>,
    %c1_137 = arith.constant 1 : index
    %c0_138 = arith.constant 0 : index
    %c0_139 = arith.constant 0 : index
    %345 = vector.load %arg9[%c1_137, %c0_138, %c0_139] : memref<4x2x32xf32, #tpu.memory_space<vmem>>, vector<1x2x32xf32>
    %346 = vector.shape_cast %345 : vector<1x2x32xf32> to vector<2x32xf32>
    %347 = vector.shape_cast %338 : vector<2x32xf32> to vector<1x2x32xf32>
    tpu.vector_store %arg9[%c1_137, %c0_138, %c0_139], %347 {strides = array<i32>} : memref<4x2x32xf32, #tpu.memory_space<vmem>>, vector<1x2x32xf32>,
    %c2_140 = arith.constant 2 : index
    %c0_141 = arith.constant 0 : index
    %c0_142 = arith.constant 0 : index
    %348 = vector.load %arg2[%c2_140, %c0_141, %c0_142] : memref<4x64x128xf32, #tpu.memory_space<vmem>>, vector<1x64x128xf32>
    %349 = vector.shape_cast %348 : vector<1x64x128xf32> to vector<64x128xf32>
    %c2_143 = arith.constant 2 : index
    %c0_144 = arith.constant 0 : index
    %c0_145 = arith.constant 0 : index
    %350 = vector.load %arg3[%c2_143, %c0_144, %c0_145] : memref<4x32x128xf32, #tpu.memory_space<vmem>>, vector<1x32x128xf32>
    %351 = vector.shape_cast %350 : vector<1x32x128xf32> to vector<32x128xf32>
    %c2_146 = arith.constant 2 : index
    %c0_147 = arith.constant 0 : index
    %c0_148 = arith.constant 0 : index
    %352 = vector.load %arg4[%c2_146, %c0_147, %c0_148] : memref<4x1x128xf32, #tpu.memory_space<vmem>>, vector<1x1x128xf32>
    %353 = vector.shape_cast %352 : vector<1x1x128xf32> to vector<1x128xf32>
    %c0_149 = arith.constant 0 : index
    %c0_150 = arith.constant 0 : index
    %354 = vector.load %arg10[%c0_149, %c0_150] : memref<16x64xf32, #tpu.memory_space<vmem>>, vector<16x64xf32>
    %cst_151 = arith.constant dense<0.000000e+00> : vector<16x128xf32>
    %355 = tpu.matmul %354, %349, %cst_151 {dimension_numbers = #tpu.dot_dimension_numbers<[1], [0], [0], [1], [0, 0, 1, 1], [], []>} : vector<16x64xf32>, vector<64x128xf32>, vector<16x128xf32> -> vector<16x128xf32>
    %356 = vector.broadcast %353 : vector<1x128xf32> to vector<16x128xf32>
    %357 = arith.addf %355, %356 : vector<16x128xf32>
    %c0_152 = arith.constant 0 : index
    %c0_153 = arith.constant 0 : index
    %358 = vector.load %arg11[%c0_152, %c0_153] : memref<16x128xf32, #tpu.memory_space<vmem>>, vector<16x128xf32>
    tpu.vector_store %arg11[%c0_152, %c0_153], %357 {strides = array<i32>} : memref<16x128xf32, #tpu.memory_space<vmem>>, vector<16x128xf32>,
    %c2_154 = arith.constant 2 : index
    %c0_155 = arith.constant 0 : index
    %c0_156 = arith.constant 0 : index
    %359 = vector.load %arg5[%c2_154, %c0_155, %c0_156] : memref<4x2x32xf32, #tpu.memory_space<vmem>>, vector<1x2x32xf32>
    %360 = vector.shape_cast %359 : vector<1x2x32xf32> to vector<2x32xf32>
    %c2_157 = arith.constant 2 : index
    %c0_158 = arith.constant 0 : index
    %c0_159 = arith.constant 0 : index
    %361 = vector.load %arg6[%c2_157, %c0_158, %c0_159] : memref<4x2x32xf32, #tpu.memory_space<vmem>>, vector<1x2x32xf32>
    %362 = vector.shape_cast %361 : vector<1x2x32xf32> to vector<2x32xf32>
    %c0_160 = arith.constant 0 : index
    %c0_161 = arith.constant 0 : index
    %363 = vector.load %arg11[%c0_160, %c0_161] : memref<16x128xf32, #tpu.memory_space<vmem>>, vector<2x128xf32>
    %cst_162 = arith.constant dense<0.000000e+00> : vector<2x128xf32>
    %364 = tpu.matmul %360, %351, %cst_162 {dimension_numbers = #tpu.dot_dimension_numbers<[1], [0], [0], [1], [0, 0, 1, 1], [], []>} : vector<2x32xf32>, vector<32x128xf32>, vector<2x128xf32> -> vector<2x128xf32>
    %365 = arith.addf %363, %364 : vector<2x128xf32>
    %366 = arith.negf %365 : vector<2x128xf32>
    %367 = math.exp %366 : vector<2x128xf32>
    %cst_163 = arith.constant 1.000000e+00 : f32
    %368 = vector.broadcast %cst_163 : f32 to vector<2x128xf32>
    %369 = arith.addf %368, %367 : vector<2x128xf32>
    %370 = arith.divf %368, %369 : vector<2x128xf32>
    %371 = math.tanh %365 : vector<2x128xf32>
    %372 = vector.extract_strided_slice %370 {offsets = [0, 0], sizes = [2, 32], strides = [1, 1]} : vector<2x128xf32> to vector<2x32xf32>
    %373 = vector.extract_strided_slice %370 {offsets = [0, 32], sizes = [2, 32], strides = [1, 1]} : vector<2x128xf32> to vector<2x32xf32>
    %374 = vector.extract_strided_slice %371 {offsets = [0, 64], sizes = [2, 32], strides = [1, 1]} : vector<2x128xf32> to vector<2x32xf32>
    %375 = vector.extract_strided_slice %370 {offsets = [0, 96], sizes = [2, 32], strides = [1, 1]} : vector<2x128xf32> to vector<2x32xf32>
    %376 = arith.mulf %373, %362 : vector<2x32xf32>
    %377 = arith.mulf %372, %374 : vector<2x32xf32>
    %378 = arith.addf %376, %377 : vector<2x32xf32>
    %379 = math.tanh %378 : vector<2x32xf32>
    %380 = arith.mulf %375, %379 : vector<2x32xf32>
    %c0_164 = arith.constant 0 : index
    %c0_165 = arith.constant 0 : index
    %381 = vector.load %arg7[%c0_164, %c0_165] : memref<16x64xf32, #tpu.memory_space<vmem>>, vector<2x32xf32>
    tpu.vector_store %arg7[%c0_164, %c0_165], %380 {strides = array<i32>} : memref<16x64xf32, #tpu.memory_space<vmem>>, vector<2x32xf32>,
    %c2_166 = arith.constant 2 : index
    %c0_167 = arith.constant 0 : index
    %382 = vector.load %arg11[%c2_166, %c0_167] : memref<16x128xf32, #tpu.memory_space<vmem>>, vector<2x128xf32>
    %cst_168 = arith.constant dense<0.000000e+00> : vector<2x128xf32>
    %383 = tpu.matmul %380, %351, %cst_168 {dimension_numbers = #tpu.dot_dimension_numbers<[1], [0], [0], [1], [0, 0, 1, 1], [], []>} : vector<2x32xf32>, vector<32x128xf32>, vector<2x128xf32> -> vector<2x128xf32>
    %384 = arith.addf %382, %383 : vector<2x128xf32>
    %385 = arith.negf %384 : vector<2x128xf32>
    %386 = math.exp %385 : vector<2x128xf32>
    %cst_169 = arith.constant 1.000000e+00 : f32
    %387 = vector.broadcast %cst_169 : f32 to vector<2x128xf32>
    %388 = arith.addf %387, %386 : vector<2x128xf32>
    %389 = arith.divf %387, %388 : vector<2x128xf32>
    %390 = math.tanh %384 : vector<2x128xf32>
    %391 = vector.extract_strided_slice %389 {offsets = [0, 0], sizes = [2, 32], strides = [1, 1]} : vector<2x128xf32> to vector<2x32xf32>
    %392 = vector.extract_strided_slice %389 {offsets = [0, 32], sizes = [2, 32], strides = [1, 1]} : vector<2x128xf32> to vector<2x32xf32>
    %393 = vector.extract_strided_slice %390 {offsets = [0, 64], sizes = [2, 32], strides = [1, 1]} : vector<2x128xf32> to vector<2x32xf32>
    %394 = vector.extract_strided_slice %389 {offsets = [0, 96], sizes = [2, 32], strides = [1, 1]} : vector<2x128xf32> to vector<2x32xf32>
    %395 = arith.mulf %392, %378 : vector<2x32xf32>
    %396 = arith.mulf %391, %393 : vector<2x32xf32>
    %397 = arith.addf %395, %396 : vector<2x32xf32>
    %398 = math.tanh %397 : vector<2x32xf32>
    %399 = arith.mulf %394, %398 : vector<2x32xf32>
    %c2_170 = arith.constant 2 : index
    %c0_171 = arith.constant 0 : index
    %400 = vector.load %arg7[%c2_170, %c0_171] : memref<16x64xf32, #tpu.memory_space<vmem>>, vector<2x32xf32>
    tpu.vector_store %arg7[%c2_170, %c0_171], %399 {strides = array<i32>} : memref<16x64xf32, #tpu.memory_space<vmem>>, vector<2x32xf32>,
    %c4_172 = arith.constant 4 : index
    %c0_173 = arith.constant 0 : index
    %401 = vector.load %arg11[%c4_172, %c0_173] : memref<16x128xf32, #tpu.memory_space<vmem>>, vector<2x128xf32>
    %cst_174 = arith.constant dense<0.000000e+00> : vector<2x128xf32>
    %402 = tpu.matmul %399, %351, %cst_174 {dimension_numbers = #tpu.dot_dimension_numbers<[1], [0], [0], [1], [0, 0, 1, 1], [], []>} : vector<2x32xf32>, vector<32x128xf32>, vector<2x128xf32> -> vector<2x128xf32>
    %403 = arith.addf %401, %402 : vector<2x128xf32>
    %404 = arith.negf %403 : vector<2x128xf32>
    %405 = math.exp %404 : vector<2x128xf32>
    %cst_175 = arith.constant 1.000000e+00 : f32
    %406 = vector.broadcast %cst_175 : f32 to vector<2x128xf32>
    %407 = arith.addf %406, %405 : vector<2x128xf32>
    %408 = arith.divf %406, %407 : vector<2x128xf32>
    %409 = math.tanh %403 : vector<2x128xf32>
    %410 = vector.extract_strided_slice %408 {offsets = [0, 0], sizes = [2, 32], strides = [1, 1]} : vector<2x128xf32> to vector<2x32xf32>
    %411 = vector.extract_strided_slice %408 {offsets = [0, 32], sizes = [2, 32], strides = [1, 1]} : vector<2x128xf32> to vector<2x32xf32>
    %412 = vector.extract_strided_slice %409 {offsets = [0, 64], sizes = [2, 32], strides = [1, 1]} : vector<2x128xf32> to vector<2x32xf32>
    %413 = vector.extract_strided_slice %408 {offsets = [0, 96], sizes = [2, 32], strides = [1, 1]} : vector<2x128xf32> to vector<2x32xf32>
    %414 = arith.mulf %411, %397 : vector<2x32xf32>
    %415 = arith.mulf %410, %412 : vector<2x32xf32>
    %416 = arith.addf %414, %415 : vector<2x32xf32>
    %417 = math.tanh %416 : vector<2x32xf32>
    %418 = arith.mulf %413, %417 : vector<2x32xf32>
    %c4_176 = arith.constant 4 : index
    %c0_177 = arith.constant 0 : index
    %419 = vector.load %arg7[%c4_176, %c0_177] : memref<16x64xf32, #tpu.memory_space<vmem>>, vector<2x32xf32>
    tpu.vector_store %arg7[%c4_176, %c0_177], %418 {strides = array<i32>} : memref<16x64xf32, #tpu.memory_space<vmem>>, vector<2x32xf32>,
    %c6_178 = arith.constant 6 : index
    %c0_179 = arith.constant 0 : index
    %420 = vector.load %arg11[%c6_178, %c0_179] : memref<16x128xf32, #tpu.memory_space<vmem>>, vector<2x128xf32>
    %cst_180 = arith.constant dense<0.000000e+00> : vector<2x128xf32>
    %421 = tpu.matmul %418, %351, %cst_180 {dimension_numbers = #tpu.dot_dimension_numbers<[1], [0], [0], [1], [0, 0, 1, 1], [], []>} : vector<2x32xf32>, vector<32x128xf32>, vector<2x128xf32> -> vector<2x128xf32>
    %422 = arith.addf %420, %421 : vector<2x128xf32>
    %423 = arith.negf %422 : vector<2x128xf32>
    %424 = math.exp %423 : vector<2x128xf32>
    %cst_181 = arith.constant 1.000000e+00 : f32
    %425 = vector.broadcast %cst_181 : f32 to vector<2x128xf32>
    %426 = arith.addf %425, %424 : vector<2x128xf32>
    %427 = arith.divf %425, %426 : vector<2x128xf32>
    %428 = math.tanh %422 : vector<2x128xf32>
    %429 = vector.extract_strided_slice %427 {offsets = [0, 0], sizes = [2, 32], strides = [1, 1]} : vector<2x128xf32> to vector<2x32xf32>
    %430 = vector.extract_strided_slice %427 {offsets = [0, 32], sizes = [2, 32], strides = [1, 1]} : vector<2x128xf32> to vector<2x32xf32>
    %431 = vector.extract_strided_slice %428 {offsets = [0, 64], sizes = [2, 32], strides = [1, 1]} : vector<2x128xf32> to vector<2x32xf32>
    %432 = vector.extract_strided_slice %427 {offsets = [0, 96], sizes = [2, 32], strides = [1, 1]} : vector<2x128xf32> to vector<2x32xf32>
    %433 = arith.mulf %430, %416 : vector<2x32xf32>
    %434 = arith.mulf %429, %431 : vector<2x32xf32>
    %435 = arith.addf %433, %434 : vector<2x32xf32>
    %436 = math.tanh %435 : vector<2x32xf32>
    %437 = arith.mulf %432, %436 : vector<2x32xf32>
    %c6_182 = arith.constant 6 : index
    %c0_183 = arith.constant 0 : index
    %438 = vector.load %arg7[%c6_182, %c0_183] : memref<16x64xf32, #tpu.memory_space<vmem>>, vector<2x32xf32>
    tpu.vector_store %arg7[%c6_182, %c0_183], %437 {strides = array<i32>} : memref<16x64xf32, #tpu.memory_space<vmem>>, vector<2x32xf32>,
    %c8_184 = arith.constant 8 : index
    %c0_185 = arith.constant 0 : index
    %439 = vector.load %arg11[%c8_184, %c0_185] : memref<16x128xf32, #tpu.memory_space<vmem>>, vector<2x128xf32>
    %cst_186 = arith.constant dense<0.000000e+00> : vector<2x128xf32>
    %440 = tpu.matmul %437, %351, %cst_186 {dimension_numbers = #tpu.dot_dimension_numbers<[1], [0], [0], [1], [0, 0, 1, 1], [], []>} : vector<2x32xf32>, vector<32x128xf32>, vector<2x128xf32> -> vector<2x128xf32>
    %441 = arith.addf %439, %440 : vector<2x128xf32>
    %442 = arith.negf %441 : vector<2x128xf32>
    %443 = math.exp %442 : vector<2x128xf32>
    %cst_187 = arith.constant 1.000000e+00 : f32
    %444 = vector.broadcast %cst_187 : f32 to vector<2x128xf32>
    %445 = arith.addf %444, %443 : vector<2x128xf32>
    %446 = arith.divf %444, %445 : vector<2x128xf32>
    %447 = math.tanh %441 : vector<2x128xf32>
    %448 = vector.extract_strided_slice %446 {offsets = [0, 0], sizes = [2, 32], strides = [1, 1]} : vector<2x128xf32> to vector<2x32xf32>
    %449 = vector.extract_strided_slice %446 {offsets = [0, 32], sizes = [2, 32], strides = [1, 1]} : vector<2x128xf32> to vector<2x32xf32>
    %450 = vector.extract_strided_slice %447 {offsets = [0, 64], sizes = [2, 32], strides = [1, 1]} : vector<2x128xf32> to vector<2x32xf32>
    %451 = vector.extract_strided_slice %446 {offsets = [0, 96], sizes = [2, 32], strides = [1, 1]} : vector<2x128xf32> to vector<2x32xf32>
    %452 = arith.mulf %449, %435 : vector<2x32xf32>
    %453 = arith.mulf %448, %450 : vector<2x32xf32>
    %454 = arith.addf %452, %453 : vector<2x32xf32>
    %455 = math.tanh %454 : vector<2x32xf32>
    %456 = arith.mulf %451, %455 : vector<2x32xf32>
    %c8_188 = arith.constant 8 : index
    %c0_189 = arith.constant 0 : index
    %457 = vector.load %arg7[%c8_188, %c0_189] : memref<16x64xf32, #tpu.memory_space<vmem>>, vector<2x32xf32>
    tpu.vector_store %arg7[%c8_188, %c0_189], %456 {strides = array<i32>} : memref<16x64xf32, #tpu.memory_space<vmem>>, vector<2x32xf32>,
    %c10_190 = arith.constant 10 : index
    %c0_191 = arith.constant 0 : index
    %458 = vector.load %arg11[%c10_190, %c0_191] : memref<16x128xf32, #tpu.memory_space<vmem>>, vector<2x128xf32>
    %cst_192 = arith.constant dense<0.000000e+00> : vector<2x128xf32>
    %459 = tpu.matmul %456, %351, %cst_192 {dimension_numbers = #tpu.dot_dimension_numbers<[1], [0], [0], [1], [0, 0, 1, 1], [], []>} : vector<2x32xf32>, vector<32x128xf32>, vector<2x128xf32> -> vector<2x128xf32>
    %460 = arith.addf %458, %459 : vector<2x128xf32>
    %461 = arith.negf %460 : vector<2x128xf32>
    %462 = math.exp %461 : vector<2x128xf32>
    %cst_193 = arith.constant 1.000000e+00 : f32
    %463 = vector.broadcast %cst_193 : f32 to vector<2x128xf32>
    %464 = arith.addf %463, %462 : vector<2x128xf32>
    %465 = arith.divf %463, %464 : vector<2x128xf32>
    %466 = math.tanh %460 : vector<2x128xf32>
    %467 = vector.extract_strided_slice %465 {offsets = [0, 0], sizes = [2, 32], strides = [1, 1]} : vector<2x128xf32> to vector<2x32xf32>
    %468 = vector.extract_strided_slice %465 {offsets = [0, 32], sizes = [2, 32], strides = [1, 1]} : vector<2x128xf32> to vector<2x32xf32>
    %469 = vector.extract_strided_slice %466 {offsets = [0, 64], sizes = [2, 32], strides = [1, 1]} : vector<2x128xf32> to vector<2x32xf32>
    %470 = vector.extract_strided_slice %465 {offsets = [0, 96], sizes = [2, 32], strides = [1, 1]} : vector<2x128xf32> to vector<2x32xf32>
    %471 = arith.mulf %468, %454 : vector<2x32xf32>
    %472 = arith.mulf %467, %469 : vector<2x32xf32>
    %473 = arith.addf %471, %472 : vector<2x32xf32>
    %474 = math.tanh %473 : vector<2x32xf32>
    %475 = arith.mulf %470, %474 : vector<2x32xf32>
    %c10_194 = arith.constant 10 : index
    %c0_195 = arith.constant 0 : index
    %476 = vector.load %arg7[%c10_194, %c0_195] : memref<16x64xf32, #tpu.memory_space<vmem>>, vector<2x32xf32>
    tpu.vector_store %arg7[%c10_194, %c0_195], %475 {strides = array<i32>} : memref<16x64xf32, #tpu.memory_space<vmem>>, vector<2x32xf32>,
    %c12_196 = arith.constant 12 : index
    %c0_197 = arith.constant 0 : index
    %477 = vector.load %arg11[%c12_196, %c0_197] : memref<16x128xf32, #tpu.memory_space<vmem>>, vector<2x128xf32>
    %cst_198 = arith.constant dense<0.000000e+00> : vector<2x128xf32>
    %478 = tpu.matmul %475, %351, %cst_198 {dimension_numbers = #tpu.dot_dimension_numbers<[1], [0], [0], [1], [0, 0, 1, 1], [], []>} : vector<2x32xf32>, vector<32x128xf32>, vector<2x128xf32> -> vector<2x128xf32>
    %479 = arith.addf %477, %478 : vector<2x128xf32>
    %480 = arith.negf %479 : vector<2x128xf32>
    %481 = math.exp %480 : vector<2x128xf32>
    %cst_199 = arith.constant 1.000000e+00 : f32
    %482 = vector.broadcast %cst_199 : f32 to vector<2x128xf32>
    %483 = arith.addf %482, %481 : vector<2x128xf32>
    %484 = arith.divf %482, %483 : vector<2x128xf32>
    %485 = math.tanh %479 : vector<2x128xf32>
    %486 = vector.extract_strided_slice %484 {offsets = [0, 0], sizes = [2, 32], strides = [1, 1]} : vector<2x128xf32> to vector<2x32xf32>
    %487 = vector.extract_strided_slice %484 {offsets = [0, 32], sizes = [2, 32], strides = [1, 1]} : vector<2x128xf32> to vector<2x32xf32>
    %488 = vector.extract_strided_slice %485 {offsets = [0, 64], sizes = [2, 32], strides = [1, 1]} : vector<2x128xf32> to vector<2x32xf32>
    %489 = vector.extract_strided_slice %484 {offsets = [0, 96], sizes = [2, 32], strides = [1, 1]} : vector<2x128xf32> to vector<2x32xf32>
    %490 = arith.mulf %487, %473 : vector<2x32xf32>
    %491 = arith.mulf %486, %488 : vector<2x32xf32>
    %492 = arith.addf %490, %491 : vector<2x32xf32>
    %493 = math.tanh %492 : vector<2x32xf32>
    %494 = arith.mulf %489, %493 : vector<2x32xf32>
    %c12_200 = arith.constant 12 : index
    %c0_201 = arith.constant 0 : index
    %495 = vector.load %arg7[%c12_200, %c0_201] : memref<16x64xf32, #tpu.memory_space<vmem>>, vector<2x32xf32>
    tpu.vector_store %arg7[%c12_200, %c0_201], %494 {strides = array<i32>} : memref<16x64xf32, #tpu.memory_space<vmem>>, vector<2x32xf32>,
    %c14_202 = arith.constant 14 : index
    %c0_203 = arith.constant 0 : index
    %496 = vector.load %arg11[%c14_202, %c0_203] : memref<16x128xf32, #tpu.memory_space<vmem>>, vector<2x128xf32>
    %cst_204 = arith.constant dense<0.000000e+00> : vector<2x128xf32>
    %497 = tpu.matmul %494, %351, %cst_204 {dimension_numbers = #tpu.dot_dimension_numbers<[1], [0], [0], [1], [0, 0, 1, 1], [], []>} : vector<2x32xf32>, vector<32x128xf32>, vector<2x128xf32> -> vector<2x128xf32>
    %498 = arith.addf %496, %497 : vector<2x128xf32>
    %499 = arith.negf %498 : vector<2x128xf32>
    %500 = math.exp %499 : vector<2x128xf32>
    %cst_205 = arith.constant 1.000000e+00 : f32
    %501 = vector.broadcast %cst_205 : f32 to vector<2x128xf32>
    %502 = arith.addf %501, %500 : vector<2x128xf32>
    %503 = arith.divf %501, %502 : vector<2x128xf32>
    %504 = math.tanh %498 : vector<2x128xf32>
    %505 = vector.extract_strided_slice %503 {offsets = [0, 0], sizes = [2, 32], strides = [1, 1]} : vector<2x128xf32> to vector<2x32xf32>
    %506 = vector.extract_strided_slice %503 {offsets = [0, 32], sizes = [2, 32], strides = [1, 1]} : vector<2x128xf32> to vector<2x32xf32>
    %507 = vector.extract_strided_slice %504 {offsets = [0, 64], sizes = [2, 32], strides = [1, 1]} : vector<2x128xf32> to vector<2x32xf32>
    %508 = vector.extract_strided_slice %503 {offsets = [0, 96], sizes = [2, 32], strides = [1, 1]} : vector<2x128xf32> to vector<2x32xf32>
    %509 = arith.mulf %506, %492 : vector<2x32xf32>
    %510 = arith.mulf %505, %507 : vector<2x32xf32>
    %511 = arith.addf %509, %510 : vector<2x32xf32>
    %512 = math.tanh %511 : vector<2x32xf32>
    %513 = arith.mulf %508, %512 : vector<2x32xf32>
    %c14_206 = arith.constant 14 : index
    %c0_207 = arith.constant 0 : index
    %514 = vector.load %arg7[%c14_206, %c0_207] : memref<16x64xf32, #tpu.memory_space<vmem>>, vector<2x32xf32>
    tpu.vector_store %arg7[%c14_206, %c0_207], %513 {strides = array<i32>} : memref<16x64xf32, #tpu.memory_space<vmem>>, vector<2x32xf32>,
    %c2_208 = arith.constant 2 : index
    %c0_209 = arith.constant 0 : index
    %c0_210 = arith.constant 0 : index
    %515 = vector.load %arg8[%c2_208, %c0_209, %c0_210] : memref<4x2x32xf32, #tpu.memory_space<vmem>>, vector<1x2x32xf32>
    %516 = vector.shape_cast %515 : vector<1x2x32xf32> to vector<2x32xf32>
    %517 = vector.shape_cast %513 : vector<2x32xf32> to vector<1x2x32xf32>
    tpu.vector_store %arg8[%c2_208, %c0_209, %c0_210], %517 {strides = array<i32>} : memref<4x2x32xf32, #tpu.memory_space<vmem>>, vector<1x2x32xf32>,
    %c2_211 = arith.constant 2 : index
    %c0_212 = arith.constant 0 : index
    %c0_213 = arith.constant 0 : index
    %518 = vector.load %arg9[%c2_211, %c0_212, %c0_213] : memref<4x2x32xf32, #tpu.memory_space<vmem>>, vector<1x2x32xf32>
    %519 = vector.shape_cast %518 : vector<1x2x32xf32> to vector<2x32xf32>
    %520 = vector.shape_cast %511 : vector<2x32xf32> to vector<1x2x32xf32>
    tpu.vector_store %arg9[%c2_211, %c0_212, %c0_213], %520 {strides = array<i32>} : memref<4x2x32xf32, #tpu.memory_space<vmem>>, vector<1x2x32xf32>,
    %c3 = arith.constant 3 : index
    %c0_214 = arith.constant 0 : index
    %c0_215 = arith.constant 0 : index
    %521 = vector.load %arg2[%c3, %c0_214, %c0_215] : memref<4x64x128xf32, #tpu.memory_space<vmem>>, vector<1x64x128xf32>
    %522 = vector.shape_cast %521 : vector<1x64x128xf32> to vector<64x128xf32>
    %c3_216 = arith.constant 3 : index
    %c0_217 = arith.constant 0 : index
    %c0_218 = arith.constant 0 : index
    %523 = vector.load %arg3[%c3_216, %c0_217, %c0_218] : memref<4x32x128xf32, #tpu.memory_space<vmem>>, vector<1x32x128xf32>
    %524 = vector.shape_cast %523 : vector<1x32x128xf32> to vector<32x128xf32>
    %c3_219 = arith.constant 3 : index
    %c0_220 = arith.constant 0 : index
    %c0_221 = arith.constant 0 : index
    %525 = vector.load %arg4[%c3_219, %c0_220, %c0_221] : memref<4x1x128xf32, #tpu.memory_space<vmem>>, vector<1x1x128xf32>
    %526 = vector.shape_cast %525 : vector<1x1x128xf32> to vector<1x128xf32>
    %c0_222 = arith.constant 0 : index
    %c0_223 = arith.constant 0 : index
    %527 = vector.load %arg10[%c0_222, %c0_223] : memref<16x64xf32, #tpu.memory_space<vmem>>, vector<16x64xf32>
    %cst_224 = arith.constant dense<0.000000e+00> : vector<16x128xf32>
    %528 = tpu.matmul %527, %522, %cst_224 {dimension_numbers = #tpu.dot_dimension_numbers<[1], [0], [0], [1], [0, 0, 1, 1], [], []>} : vector<16x64xf32>, vector<64x128xf32>, vector<16x128xf32> -> vector<16x128xf32>
    %529 = vector.broadcast %526 : vector<1x128xf32> to vector<16x128xf32>
    %530 = arith.addf %528, %529 : vector<16x128xf32>
    %c0_225 = arith.constant 0 : index
    %c0_226 = arith.constant 0 : index
    %531 = vector.load %arg11[%c0_225, %c0_226] : memref<16x128xf32, #tpu.memory_space<vmem>>, vector<16x128xf32>
    tpu.vector_store %arg11[%c0_225, %c0_226], %530 {strides = array<i32>} : memref<16x128xf32, #tpu.memory_space<vmem>>, vector<16x128xf32>,
    %c3_227 = arith.constant 3 : index
    %c0_228 = arith.constant 0 : index
    %c0_229 = arith.constant 0 : index
    %532 = vector.load %arg5[%c3_227, %c0_228, %c0_229] : memref<4x2x32xf32, #tpu.memory_space<vmem>>, vector<1x2x32xf32>
    %533 = vector.shape_cast %532 : vector<1x2x32xf32> to vector<2x32xf32>
    %c3_230 = arith.constant 3 : index
    %c0_231 = arith.constant 0 : index
    %c0_232 = arith.constant 0 : index
    %534 = vector.load %arg6[%c3_230, %c0_231, %c0_232] : memref<4x2x32xf32, #tpu.memory_space<vmem>>, vector<1x2x32xf32>
    %535 = vector.shape_cast %534 : vector<1x2x32xf32> to vector<2x32xf32>
    %c14_233 = arith.constant 14 : index
    %c0_234 = arith.constant 0 : index
    %536 = vector.load %arg11[%c14_233, %c0_234] : memref<16x128xf32, #tpu.memory_space<vmem>>, vector<2x128xf32>
    %cst_235 = arith.constant dense<0.000000e+00> : vector<2x128xf32>
    %537 = tpu.matmul %533, %524, %cst_235 {dimension_numbers = #tpu.dot_dimension_numbers<[1], [0], [0], [1], [0, 0, 1, 1], [], []>} : vector<2x32xf32>, vector<32x128xf32>, vector<2x128xf32> -> vector<2x128xf32>
    %538 = arith.addf %536, %537 : vector<2x128xf32>
    %539 = arith.negf %538 : vector<2x128xf32>
    %540 = math.exp %539 : vector<2x128xf32>
    %cst_236 = arith.constant 1.000000e+00 : f32
    %541 = vector.broadcast %cst_236 : f32 to vector<2x128xf32>
    %542 = arith.addf %541, %540 : vector<2x128xf32>
    %543 = arith.divf %541, %542 : vector<2x128xf32>
    %544 = math.tanh %538 : vector<2x128xf32>
    %545 = vector.extract_strided_slice %543 {offsets = [0, 0], sizes = [2, 32], strides = [1, 1]} : vector<2x128xf32> to vector<2x32xf32>
    %546 = vector.extract_strided_slice %543 {offsets = [0, 32], sizes = [2, 32], strides = [1, 1]} : vector<2x128xf32> to vector<2x32xf32>
    %547 = vector.extract_strided_slice %544 {offsets = [0, 64], sizes = [2, 32], strides = [1, 1]} : vector<2x128xf32> to vector<2x32xf32>
    %548 = vector.extract_strided_slice %543 {offsets = [0, 96], sizes = [2, 32], strides = [1, 1]} : vector<2x128xf32> to vector<2x32xf32>
    %549 = arith.mulf %546, %535 : vector<2x32xf32>
    %550 = arith.mulf %545, %547 : vector<2x32xf32>
    %551 = arith.addf %549, %550 : vector<2x32xf32>
    %552 = math.tanh %551 : vector<2x32xf32>
    %553 = arith.mulf %548, %552 : vector<2x32xf32>
    %c14_237 = arith.constant 14 : index
    %c32_238 = arith.constant 32 : index
    %554 = vector.load %arg7[%c14_237, %c32_238] : memref<16x64xf32, #tpu.memory_space<vmem>>, vector<2x32xf32>
    tpu.vector_store %arg7[%c14_237, %c32_238], %553 {strides = array<i32>} : memref<16x64xf32, #tpu.memory_space<vmem>>, vector<2x32xf32>,
    %c12_239 = arith.constant 12 : index
    %c0_240 = arith.constant 0 : index
    %555 = vector.load %arg11[%c12_239, %c0_240] : memref<16x128xf32, #tpu.memory_space<vmem>>, vector<2x128xf32>
    %cst_241 = arith.constant dense<0.000000e+00> : vector<2x128xf32>
    %556 = tpu.matmul %553, %524, %cst_241 {dimension_numbers = #tpu.dot_dimension_numbers<[1], [0], [0], [1], [0, 0, 1, 1], [], []>} : vector<2x32xf32>, vector<32x128xf32>, vector<2x128xf32> -> vector<2x128xf32>
    %557 = arith.addf %555, %556 : vector<2x128xf32>
    %558 = arith.negf %557 : vector<2x128xf32>
    %559 = math.exp %558 : vector<2x128xf32>
    %cst_242 = arith.constant 1.000000e+00 : f32
    %560 = vector.broadcast %cst_242 : f32 to vector<2x128xf32>
    %561 = arith.addf %560, %559 : vector<2x128xf32>
    %562 = arith.divf %560, %561 : vector<2x128xf32>
    %563 = math.tanh %557 : vector<2x128xf32>
    %564 = vector.extract_strided_slice %562 {offsets = [0, 0], sizes = [2, 32], strides = [1, 1]} : vector<2x128xf32> to vector<2x32xf32>
    %565 = vector.extract_strided_slice %562 {offsets = [0, 32], sizes = [2, 32], strides = [1, 1]} : vector<2x128xf32> to vector<2x32xf32>
    %566 = vector.extract_strided_slice %563 {offsets = [0, 64], sizes = [2, 32], strides = [1, 1]} : vector<2x128xf32> to vector<2x32xf32>
    %567 = vector.extract_strided_slice %562 {offsets = [0, 96], sizes = [2, 32], strides = [1, 1]} : vector<2x128xf32> to vector<2x32xf32>
    %568 = arith.mulf %565, %551 : vector<2x32xf32>
    %569 = arith.mulf %564, %566 : vector<2x32xf32>
    %570 = arith.addf %568, %569 : vector<2x32xf32>
    %571 = math.tanh %570 : vector<2x32xf32>
    %572 = arith.mulf %567, %571 : vector<2x32xf32>
    %c12_243 = arith.constant 12 : index
    %c32_244 = arith.constant 32 : index
    %573 = vector.load %arg7[%c12_243, %c32_244] : memref<16x64xf32, #tpu.memory_space<vmem>>, vector<2x32xf32>
    tpu.vector_store %arg7[%c12_243, %c32_244], %572 {strides = array<i32>} : memref<16x64xf32, #tpu.memory_space<vmem>>, vector<2x32xf32>,
    %c10_245 = arith.constant 10 : index
    %c0_246 = arith.constant 0 : index
    %574 = vector.load %arg11[%c10_245, %c0_246] : memref<16x128xf32, #tpu.memory_space<vmem>>, vector<2x128xf32>
    %cst_247 = arith.constant dense<0.000000e+00> : vector<2x128xf32>
    %575 = tpu.matmul %572, %524, %cst_247 {dimension_numbers = #tpu.dot_dimension_numbers<[1], [0], [0], [1], [0, 0, 1, 1], [], []>} : vector<2x32xf32>, vector<32x128xf32>, vector<2x128xf32> -> vector<2x128xf32>
    %576 = arith.addf %574, %575 : vector<2x128xf32>
    %577 = arith.negf %576 : vector<2x128xf32>
    %578 = math.exp %577 : vector<2x128xf32>
    %cst_248 = arith.constant 1.000000e+00 : f32
    %579 = vector.broadcast %cst_248 : f32 to vector<2x128xf32>
    %580 = arith.addf %579, %578 : vector<2x128xf32>
    %581 = arith.divf %579, %580 : vector<2x128xf32>
    %582 = math.tanh %576 : vector<2x128xf32>
    %583 = vector.extract_strided_slice %581 {offsets = [0, 0], sizes = [2, 32], strides = [1, 1]} : vector<2x128xf32> to vector<2x32xf32>
    %584 = vector.extract_strided_slice %581 {offsets = [0, 32], sizes = [2, 32], strides = [1, 1]} : vector<2x128xf32> to vector<2x32xf32>
    %585 = vector.extract_strided_slice %582 {offsets = [0, 64], sizes = [2, 32], strides = [1, 1]} : vector<2x128xf32> to vector<2x32xf32>
    %586 = vector.extract_strided_slice %581 {offsets = [0, 96], sizes = [2, 32], strides = [1, 1]} : vector<2x128xf32> to vector<2x32xf32>
    %587 = arith.mulf %584, %570 : vector<2x32xf32>
    %588 = arith.mulf %583, %585 : vector<2x32xf32>
    %589 = arith.addf %587, %588 : vector<2x32xf32>
    %590 = math.tanh %589 : vector<2x32xf32>
    %591 = arith.mulf %586, %590 : vector<2x32xf32>
    %c10_249 = arith.constant 10 : index
    %c32_250 = arith.constant 32 : index
    %592 = vector.load %arg7[%c10_249, %c32_250] : memref<16x64xf32, #tpu.memory_space<vmem>>, vector<2x32xf32>
    tpu.vector_store %arg7[%c10_249, %c32_250], %591 {strides = array<i32>} : memref<16x64xf32, #tpu.memory_space<vmem>>, vector<2x32xf32>,
    %c8_251 = arith.constant 8 : index
    %c0_252 = arith.constant 0 : index
    %593 = vector.load %arg11[%c8_251, %c0_252] : memref<16x128xf32, #tpu.memory_space<vmem>>, vector<2x128xf32>
    %cst_253 = arith.constant dense<0.000000e+00> : vector<2x128xf32>
    %594 = tpu.matmul %591, %524, %cst_253 {dimension_numbers = #tpu.dot_dimension_numbers<[1], [0], [0], [1], [0, 0, 1, 1], [], []>} : vector<2x32xf32>, vector<32x128xf32>, vector<2x128xf32> -> vector<2x128xf32>
    %595 = arith.addf %593, %594 : vector<2x128xf32>
    %596 = arith.negf %595 : vector<2x128xf32>
    %597 = math.exp %596 : vector<2x128xf32>
    %cst_254 = arith.constant 1.000000e+00 : f32
    %598 = vector.broadcast %cst_254 : f32 to vector<2x128xf32>
    %599 = arith.addf %598, %597 : vector<2x128xf32>
    %600 = arith.divf %598, %599 : vector<2x128xf32>
    %601 = math.tanh %595 : vector<2x128xf32>
    %602 = vector.extract_strided_slice %600 {offsets = [0, 0], sizes = [2, 32], strides = [1, 1]} : vector<2x128xf32> to vector<2x32xf32>
    %603 = vector.extract_strided_slice %600 {offsets = [0, 32], sizes = [2, 32], strides = [1, 1]} : vector<2x128xf32> to vector<2x32xf32>
    %604 = vector.extract_strided_slice %601 {offsets = [0, 64], sizes = [2, 32], strides = [1, 1]} : vector<2x128xf32> to vector<2x32xf32>
    %605 = vector.extract_strided_slice %600 {offsets = [0, 96], sizes = [2, 32], strides = [1, 1]} : vector<2x128xf32> to vector<2x32xf32>
    %606 = arith.mulf %603, %589 : vector<2x32xf32>
    %607 = arith.mulf %602, %604 : vector<2x32xf32>
    %608 = arith.addf %606, %607 : vector<2x32xf32>
    %609 = math.tanh %608 : vector<2x32xf32>
    %610 = arith.mulf %605, %609 : vector<2x32xf32>
    %c8_255 = arith.constant 8 : index
    %c32_256 = arith.constant 32 : index
    %611 = vector.load %arg7[%c8_255, %c32_256] : memref<16x64xf32, #tpu.memory_space<vmem>>, vector<2x32xf32>
    tpu.vector_store %arg7[%c8_255, %c32_256], %610 {strides = array<i32>} : memref<16x64xf32, #tpu.memory_space<vmem>>, vector<2x32xf32>,
    %c6_257 = arith.constant 6 : index
    %c0_258 = arith.constant 0 : index
    %612 = vector.load %arg11[%c6_257, %c0_258] : memref<16x128xf32, #tpu.memory_space<vmem>>, vector<2x128xf32>
    %cst_259 = arith.constant dense<0.000000e+00> : vector<2x128xf32>
    %613 = tpu.matmul %610, %524, %cst_259 {dimension_numbers = #tpu.dot_dimension_numbers<[1], [0], [0], [1], [0, 0, 1, 1], [], []>} : vector<2x32xf32>, vector<32x128xf32>, vector<2x128xf32> -> vector<2x128xf32>
    %614 = arith.addf %612, %613 : vector<2x128xf32>
    %615 = arith.negf %614 : vector<2x128xf32>
    %616 = math.exp %615 : vector<2x128xf32>
    %cst_260 = arith.constant 1.000000e+00 : f32
    %617 = vector.broadcast %cst_260 : f32 to vector<2x128xf32>
    %618 = arith.addf %617, %616 : vector<2x128xf32>
    %619 = arith.divf %617, %618 : vector<2x128xf32>
    %620 = math.tanh %614 : vector<2x128xf32>
    %621 = vector.extract_strided_slice %619 {offsets = [0, 0], sizes = [2, 32], strides = [1, 1]} : vector<2x128xf32> to vector<2x32xf32>
    %622 = vector.extract_strided_slice %619 {offsets = [0, 32], sizes = [2, 32], strides = [1, 1]} : vector<2x128xf32> to vector<2x32xf32>
    %623 = vector.extract_strided_slice %620 {offsets = [0, 64], sizes = [2, 32], strides = [1, 1]} : vector<2x128xf32> to vector<2x32xf32>
    %624 = vector.extract_strided_slice %619 {offsets = [0, 96], sizes = [2, 32], strides = [1, 1]} : vector<2x128xf32> to vector<2x32xf32>
    %625 = arith.mulf %622, %608 : vector<2x32xf32>
    %626 = arith.mulf %621, %623 : vector<2x32xf32>
    %627 = arith.addf %625, %626 : vector<2x32xf32>
    %628 = math.tanh %627 : vector<2x32xf32>
    %629 = arith.mulf %624, %628 : vector<2x32xf32>
    %c6_261 = arith.constant 6 : index
    %c32_262 = arith.constant 32 : index
    %630 = vector.load %arg7[%c6_261, %c32_262] : memref<16x64xf32, #tpu.memory_space<vmem>>, vector<2x32xf32>
    tpu.vector_store %arg7[%c6_261, %c32_262], %629 {strides = array<i32>} : memref<16x64xf32, #tpu.memory_space<vmem>>, vector<2x32xf32>,
    %c4_263 = arith.constant 4 : index
    %c0_264 = arith.constant 0 : index
    %631 = vector.load %arg11[%c4_263, %c0_264] : memref<16x128xf32, #tpu.memory_space<vmem>>, vector<2x128xf32>
    %cst_265 = arith.constant dense<0.000000e+00> : vector<2x128xf32>
    %632 = tpu.matmul %629, %524, %cst_265 {dimension_numbers = #tpu.dot_dimension_numbers<[1], [0], [0], [1], [0, 0, 1, 1], [], []>} : vector<2x32xf32>, vector<32x128xf32>, vector<2x128xf32> -> vector<2x128xf32>
    %633 = arith.addf %631, %632 : vector<2x128xf32>
    %634 = arith.negf %633 : vector<2x128xf32>
    %635 = math.exp %634 : vector<2x128xf32>
    %cst_266 = arith.constant 1.000000e+00 : f32
    %636 = vector.broadcast %cst_266 : f32 to vector<2x128xf32>
    %637 = arith.addf %636, %635 : vector<2x128xf32>
    %638 = arith.divf %636, %637 : vector<2x128xf32>
    %639 = math.tanh %633 : vector<2x128xf32>
    %640 = vector.extract_strided_slice %638 {offsets = [0, 0], sizes = [2, 32], strides = [1, 1]} : vector<2x128xf32> to vector<2x32xf32>
    %641 = vector.extract_strided_slice %638 {offsets = [0, 32], sizes = [2, 32], strides = [1, 1]} : vector<2x128xf32> to vector<2x32xf32>
    %642 = vector.extract_strided_slice %639 {offsets = [0, 64], sizes = [2, 32], strides = [1, 1]} : vector<2x128xf32> to vector<2x32xf32>
    %643 = vector.extract_strided_slice %638 {offsets = [0, 96], sizes = [2, 32], strides = [1, 1]} : vector<2x128xf32> to vector<2x32xf32>
    %644 = arith.mulf %641, %627 : vector<2x32xf32>
    %645 = arith.mulf %640, %642 : vector<2x32xf32>
    %646 = arith.addf %644, %645 : vector<2x32xf32>
    %647 = math.tanh %646 : vector<2x32xf32>
    %648 = arith.mulf %643, %647 : vector<2x32xf32>
    %c4_267 = arith.constant 4 : index
    %c32_268 = arith.constant 32 : index
    %649 = vector.load %arg7[%c4_267, %c32_268] : memref<16x64xf32, #tpu.memory_space<vmem>>, vector<2x32xf32>
    tpu.vector_store %arg7[%c4_267, %c32_268], %648 {strides = array<i32>} : memref<16x64xf32, #tpu.memory_space<vmem>>, vector<2x32xf32>,
    %c2_269 = arith.constant 2 : index
    %c0_270 = arith.constant 0 : index
    %650 = vector.load %arg11[%c2_269, %c0_270] : memref<16x128xf32, #tpu.memory_space<vmem>>, vector<2x128xf32>
    %cst_271 = arith.constant dense<0.000000e+00> : vector<2x128xf32>
    %651 = tpu.matmul %648, %524, %cst_271 {dimension_numbers = #tpu.dot_dimension_numbers<[1], [0], [0], [1], [0, 0, 1, 1], [], []>} : vector<2x32xf32>, vector<32x128xf32>, vector<2x128xf32> -> vector<2x128xf32>
    %652 = arith.addf %650, %651 : vector<2x128xf32>
    %653 = arith.negf %652 : vector<2x128xf32>
    %654 = math.exp %653 : vector<2x128xf32>
    %cst_272 = arith.constant 1.000000e+00 : f32
    %655 = vector.broadcast %cst_272 : f32 to vector<2x128xf32>
    %656 = arith.addf %655, %654 : vector<2x128xf32>
    %657 = arith.divf %655, %656 : vector<2x128xf32>
    %658 = math.tanh %652 : vector<2x128xf32>
    %659 = vector.extract_strided_slice %657 {offsets = [0, 0], sizes = [2, 32], strides = [1, 1]} : vector<2x128xf32> to vector<2x32xf32>
    %660 = vector.extract_strided_slice %657 {offsets = [0, 32], sizes = [2, 32], strides = [1, 1]} : vector<2x128xf32> to vector<2x32xf32>
    %661 = vector.extract_strided_slice %658 {offsets = [0, 64], sizes = [2, 32], strides = [1, 1]} : vector<2x128xf32> to vector<2x32xf32>
    %662 = vector.extract_strided_slice %657 {offsets = [0, 96], sizes = [2, 32], strides = [1, 1]} : vector<2x128xf32> to vector<2x32xf32>
    %663 = arith.mulf %660, %646 : vector<2x32xf32>
    %664 = arith.mulf %659, %661 : vector<2x32xf32>
    %665 = arith.addf %663, %664 : vector<2x32xf32>
    %666 = math.tanh %665 : vector<2x32xf32>
    %667 = arith.mulf %662, %666 : vector<2x32xf32>
    %c2_273 = arith.constant 2 : index
    %c32_274 = arith.constant 32 : index
    %668 = vector.load %arg7[%c2_273, %c32_274] : memref<16x64xf32, #tpu.memory_space<vmem>>, vector<2x32xf32>
    tpu.vector_store %arg7[%c2_273, %c32_274], %667 {strides = array<i32>} : memref<16x64xf32, #tpu.memory_space<vmem>>, vector<2x32xf32>,
    %c0_275 = arith.constant 0 : index
    %c0_276 = arith.constant 0 : index
    %669 = vector.load %arg11[%c0_275, %c0_276] : memref<16x128xf32, #tpu.memory_space<vmem>>, vector<2x128xf32>
    %cst_277 = arith.constant dense<0.000000e+00> : vector<2x128xf32>
    %670 = tpu.matmul %667, %524, %cst_277 {dimension_numbers = #tpu.dot_dimension_numbers<[1], [0], [0], [1], [0, 0, 1, 1], [], []>} : vector<2x32xf32>, vector<32x128xf32>, vector<2x128xf32> -> vector<2x128xf32>
    %671 = arith.addf %669, %670 : vector<2x128xf32>
    %672 = arith.negf %671 : vector<2x128xf32>
    %673 = math.exp %672 : vector<2x128xf32>
    %cst_278 = arith.constant 1.000000e+00 : f32
    %674 = vector.broadcast %cst_278 : f32 to vector<2x128xf32>
    %675 = arith.addf %674, %673 : vector<2x128xf32>
    %676 = arith.divf %674, %675 : vector<2x128xf32>
    %677 = math.tanh %671 : vector<2x128xf32>
    %678 = vector.extract_strided_slice %676 {offsets = [0, 0], sizes = [2, 32], strides = [1, 1]} : vector<2x128xf32> to vector<2x32xf32>
    %679 = vector.extract_strided_slice %676 {offsets = [0, 32], sizes = [2, 32], strides = [1, 1]} : vector<2x128xf32> to vector<2x32xf32>
    %680 = vector.extract_strided_slice %677 {offsets = [0, 64], sizes = [2, 32], strides = [1, 1]} : vector<2x128xf32> to vector<2x32xf32>
    %681 = vector.extract_strided_slice %676 {offsets = [0, 96], sizes = [2, 32], strides = [1, 1]} : vector<2x128xf32> to vector<2x32xf32>
    %682 = arith.mulf %679, %665 : vector<2x32xf32>
    %683 = arith.mulf %678, %680 : vector<2x32xf32>
    %684 = arith.addf %682, %683 : vector<2x32xf32>
    %685 = math.tanh %684 : vector<2x32xf32>
    %686 = arith.mulf %681, %685 : vector<2x32xf32>
    %c0_279 = arith.constant 0 : index
    %c32_280 = arith.constant 32 : index
    %687 = vector.load %arg7[%c0_279, %c32_280] : memref<16x64xf32, #tpu.memory_space<vmem>>, vector<2x32xf32>
    tpu.vector_store %arg7[%c0_279, %c32_280], %686 {strides = array<i32>} : memref<16x64xf32, #tpu.memory_space<vmem>>, vector<2x32xf32>,
    %c3_281 = arith.constant 3 : index
    %c0_282 = arith.constant 0 : index
    %c0_283 = arith.constant 0 : index
    %688 = vector.load %arg8[%c3_281, %c0_282, %c0_283] : memref<4x2x32xf32, #tpu.memory_space<vmem>>, vector<1x2x32xf32>
    %689 = vector.shape_cast %688 : vector<1x2x32xf32> to vector<2x32xf32>
    %690 = vector.shape_cast %686 : vector<2x32xf32> to vector<1x2x32xf32>
    tpu.vector_store %arg8[%c3_281, %c0_282, %c0_283], %690 {strides = array<i32>} : memref<4x2x32xf32, #tpu.memory_space<vmem>>, vector<1x2x32xf32>,
    %c3_284 = arith.constant 3 : index
    %c0_285 = arith.constant 0 : index
    %c0_286 = arith.constant 0 : index
    %691 = vector.load %arg9[%c3_284, %c0_285, %c0_286] : memref<4x2x32xf32, #tpu.memory_space<vmem>>, vector<1x2x32xf32>
    %692 = vector.shape_cast %691 : vector<1x2x32xf32> to vector<2x32xf32>
    %693 = vector.shape_cast %684 : vector<2x32xf32> to vector<1x2x32xf32>
    tpu.vector_store %arg9[%c3_284, %c0_285, %c0_286], %693 {strides = array<i32>} : memref<4x2x32xf32, #tpu.memory_space<vmem>>, vector<1x2x32xf32>,
    return
  }
  func.func @transform_0(%arg0: i32) -> (i32, i32) {
    %c0_i32 = arith.constant 0 : i32
    %c0_i32_0 = arith.constant 0 : i32
    %c0_i32_1 = arith.constant 0 : i32
    return %c0_i32, %c0_i32_0 : i32, i32
  }
  func.func @transform_1(%arg0: i32) -> (i32, i32, i32) {
    %c0_i32 = arith.constant 0 : i32
    %c0_i32_0 = arith.constant 0 : i32
    %c0_i32_1 = arith.constant 0 : i32
    %c0_i32_2 = arith.constant 0 : i32
    return %c0_i32, %c0_i32_0, %c0_i32_1 : i32, i32, i32
  }
  func.func @transform_2(%arg0: i32) -> (i32, i32, i32) {
    %c0_i32 = arith.constant 0 : i32
    %c0_i32_0 = arith.constant 0 : i32
    %c0_i32_1 = arith.constant 0 : i32
    %c0_i32_2 = arith.constant 0 : i32
    return %c0_i32, %c0_i32_0, %c0_i32_1 : i32, i32, i32
  }
  func.func @transform_3(%arg0: i32) -> (i32, i32, i32) {
    %c0_i32 = arith.constant 0 : i32
    %c0_i32_0 = arith.constant 0 : i32
    %c0_i32_1 = arith.constant 0 : i32
    %c0_i32_2 = arith.constant 0 : i32
    return %c0_i32, %c0_i32_0, %c0_i32_1 : i32, i32, i32
  }
  func.func @transform_4(%arg0: i32) -> (i32, i32, i32) {
    %c0_i32 = arith.constant 0 : i32
    %c0_i32_0 = arith.constant 0 : i32
    %c0_i32_1 = arith.constant 0 : i32
    %c0_i32_2 = arith.constant 0 : i32
    return %c0_i32, %c0_i32_0, %c0_i32_1 : i32, i32, i32
  }
  func.func @transform_5(%arg0: i32) -> (i32, i32, i32) {
    %c0_i32 = arith.constant 0 : i32
    %c0_i32_0 = arith.constant 0 : i32
    %c0_i32_1 = arith.constant 0 : i32
    %c0_i32_2 = arith.constant 0 : i32
    return %c0_i32, %c0_i32_0, %c0_i32_1 : i32, i32, i32
  }
  func.func @transform_6(%arg0: i32) -> (i32, i32) {
    %c0_i32 = arith.constant 0 : i32
    %c0_i32_0 = arith.constant 0 : i32
    %c0_i32_1 = arith.constant 0 : i32
    return %c0_i32, %c0_i32_0 : i32, i32
  }
  func.func @transform_7(%arg0: i32) -> (i32, i32, i32) {
    %c0_i32 = arith.constant 0 : i32
    %c0_i32_0 = arith.constant 0 : i32
    %c0_i32_1 = arith.constant 0 : i32
    %c0_i32_2 = arith.constant 0 : i32
    return %c0_i32, %c0_i32_0, %c0_i32_1 : i32, i32, i32
  }
  func.func @transform_8(%arg0: i32) -> (i32, i32, i32) {
    %c0_i32 = arith.constant 0 : i32
    %c0_i32_0 = arith.constant 0 : i32
    %c0_i32_1 = arith.constant 0 : i32
    %c0_i32_2 = arith.constant 0 : i32
    return %c0_i32, %c0_i32_0, %c0_i32_1 : i32, i32, i32
  }
}

</mosaic_0001>

<llo_original>
// kernel: tpu_custom_call.1
$region0: #{tpu_custom_call.1}
  #allocation0 [shape = 'u32[]', space=smem, size = 0x4, offset = 0x4, fixed_abs, tag = 'smem constant byte address 0x4 - core index']
  #allocation1 [shape = 'u32[144,128]{1,0:T(1,128)}', space=vmem, size = 0x12000, scoped, tag = 'internal scratch']
  #allocation2 [shape = 'f32[16,64]{1,0:T(8,128)}', space=vmem, size = 0x2000, scoped, tag = 'scratch operand']
  #allocation3 [shape = 'f32[16,128]{1,0:T(8,128)}', space=vmem, size = 0x2000, scoped, tag = 'scratch operand']
  %s0 = inlined_call_operand.hbm [shape: f32[16,64], index: 0, kind: input, shape index: {}]
  %s1 = inlined_call_operand.hbm [shape: f32[4,64,128], index: 1, kind: input, shape index: {}]
  %s2 = inlined_call_operand.hbm [shape: f32[4,32,128], index: 2, kind: input, shape index: {}]
  %s3 = inlined_call_operand.hbm [shape: f32[4,1,128], index: 3, kind: input, shape index: {}]
  %s4 = inlined_call_operand.vmem [shape: f32[4,2,32], index: 4, kind: input, shape index: {}]
  %s5 = inlined_call_operand.vmem [shape: f32[4,2,32], index: 5, kind: input, shape index: {}]
  %s6 = inlined_call_operand.hbm [shape: f32[16,64], index: 6, kind: output, shape index: {0}]
  %s7 = inlined_call_operand.hbm [shape: f32[4,2,32], index: 7, kind: output, shape index: {1}]
  %s8 = inlined_call_operand.hbm [shape: f32[4,2,32], index: 8, kind: output, shape index: {2}]
  %9 = xla_tuple %s6, %s7, %s8
  %s10 = sld [smem:[#allocation0]]
  $region66: #{tpu_custom_call.1} parent=0
    _
  %s12 = ssub.s32 1, %s10
  %s13 = scalar_select 0, %s12, %s10
  $region1: #{tpu_custom_call.1} parent=0
    #allocation4 [shape = 'u8[8192]{0}', space=vmem, size = 0x2000, scoped, tag = 'input window, operand 0, single buffered']
    #allocation5 [shape = 's32[1]{0}', space=sflag, size = 0x4, scoped, tag = 'scoped memory for tpu_custom_call.1']
    #allocation6 [shape = 's32[1]{0}', space=sflag, size = 0x4, scoped, tag = 'scoped memory for tpu_custom_call.1']
    #allocation7 [shape = 'u8[131072]{0}', space=vmem, size = 0x20000, scoped, tag = 'input window, operand 1, single buffered']
    #allocation8 [shape = 's32[1]{0}', space=sflag, size = 0x4, scoped, tag = 'scoped memory for tpu_custom_call.1']
    #allocation9 [shape = 'u8[65536]{0}', space=vmem, size = 0x10000, scoped, tag = 'input window, operand 2, single buffered']
    #allocation10 [shape = 'u8[2048]{0}', space=vmem, size = 0x800, scoped, tag = 'input window, operand 3, single buffered']
    #allocation11 [shape = 's32[1]{0}', space=sflag, size = 0x4, scoped, tag = 'scoped memory for tpu_custom_call.1']
    #allocation12 [shape = 'u8[8192]{0}', space=vmem, size = 0x2000, scoped, tag = 'output window, operand 0, single buffered']
    #allocation13 [shape = 'u8[4096]{0}', space=vmem, size = 0x1000, scoped, tag = 'output window, operand 1, single buffered']
    #allocation14 [shape = 's32[1]{0}', space=sflag, size = 0x4, scoped, tag = 'scoped memory for tpu_custom_call.1']
    #allocation15 [shape = 'u8[4096]{0}', space=vmem, size = 0x1000, scoped, tag = 'output window, operand 2, single buffered']
    %14 = vsyncpa [#allocation5], 0
    %15 = vsyncpa [#allocation8], 0
    %16 = vsyncpa [#allocation11], 0
    %17 = vsyncpa [#allocation6], 0
    %18 = vsyncpa [#allocation14], 0
    // Predicated region
    $region2: #{tpu_custom_call.1} parent=1 // pred_check
      _
    $region3: #{tpu_custom_call.1} parent=1 // pred_check_branch
      %20 = sbr.rel (0) target = $region5
    $region4: #{tpu_custom_call.1} parent=1 // pred_region
      %s22 = ssub.s32 256, 256
      %23 = vsyncadd [#allocation5], %s22
      %s24 = sshll.u32 [#allocation4], 4
      %s25 = int_to_ptr.vmem [resolvable:$true] %s24
      %30 = dma.hbm_to_vmem [thread:$0]  %s0, 256, %s25, [#allocation5], 128, 128, 8
    $region5: #{tpu_custom_call.1} parent=1 // pred_fallthru
      _
    // Predicated region
    $region6: #{tpu_custom_call.1} parent=1 // pred_check
      _
    $region7: #{tpu_custom_call.1} parent=1 // pred_check_branch
      %32 = sbr.rel (0) target = $region9
    $region8: #{tpu_custom_call.1} parent=1 // pred_region
      %s34 = ssub.s32 4096, 4096
      %35 = vsyncadd [#allocation8], %s34
      %s36 = sshll.u32 [#allocation7], 4
      %s37 = int_to_ptr.vmem [resolvable:$true] %s36
      %42 = dma.hbm_to_vmem [thread:$0]  %s1, 4096, %s37, [#allocation8], 128, 128, 8
    $region9: #{tpu_custom_call.1} parent=1 // pred_fallthru
      _
    // Predicated region
    $region10: #{tpu_custom_call.1} parent=1 // pred_check
      _
    $region11: #{tpu_custom_call.1} parent=1 // pred_check_branch
      %44 = sbr.rel (0) target = $region13
    $region12: #{tpu_custom_call.1} parent=1 // pred_region
      %s46 = ssub.s32 2048, 2048
      %47 = vsyncadd [#allocation8], %s46
      %s48 = sshll.u32 [#allocation9], 4
      %s49 = int_to_ptr.vmem [resolvable:$true] %s48
      %54 = dma.hbm_to_vmem [thread:$0]  %s2, 2048, %s49, [#allocation8], 128, 128, 8
    $region13: #{tpu_custom_call.1} parent=1 // pred_fallthru
      _
    // Predicated region
    $region14: #{tpu_custom_call.1} parent=1 // pred_check
      _
    $region15: #{tpu_custom_call.1} parent=1 // pred_check_branch
      %56 = sbr.rel (0) target = $region17
    $region16: #{tpu_custom_call.1} parent=1 // pred_region
      %s58 = ssub.s32 64, 64
      %59 = vsyncadd [#allocation11], %s58
      %s60 = sshll.u32 [#allocation10], 4
      %s61 = int_to_ptr.vmem [resolvable:$true] %s60
      %66 = dma.hbm_to_vmem [thread:$0]  %s3, 64, %s61, [#allocation11], 16, 16, 1
    $region17: #{tpu_custom_call.1} parent=1 // pred_fallthru
      _
    // Predicated region
    $region18: #{tpu_custom_call.1} parent=1 // pred_check
      _
    $region19: #{tpu_custom_call.1} parent=1 // pred_check_branch
      %68 = sbr.rel (0) target = $region21
    $region20: #{tpu_custom_call.1} parent=1 // pred_region
      _
    $region21: #{tpu_custom_call.1} parent=1 // pred_fallthru
      _
    // Predicated region
    $region22: #{tpu_custom_call.1} parent=1 // pred_check
      _
    $region23: #{tpu_custom_call.1} parent=1 // pred_check_branch
      %70 = sbr.rel (0) target = $region25
    $region24: #{tpu_custom_call.1} parent=1 // pred_region
      _
    $region25: #{tpu_custom_call.1} parent=1 // pred_fallthru
      _
    // Predicated region
    $region26: #{tpu_custom_call.1} parent=1 // pred_check
      _
    $region27: #{tpu_custom_call.1} parent=1 // pred_check_branch
      %72 = sbr.rel (0) target = $region29
    $region28: #{tpu_custom_call.1} parent=1 // pred_region
      %73 = dma.done [#allocation5], 256
    $region29: #{tpu_custom_call.1} parent=1 // pred_fallthru
      _
    // Predicated region
    $region30: #{tpu_custom_call.1} parent=1 // pred_check
      _
    $region31: #{tpu_custom_call.1} parent=1 // pred_check_branch
      %75 = sbr.rel (0) target = $region33
    $region32: #{tpu_custom_call.1} parent=1 // pred_region
      %76 = dma.done [#allocation8], 4096
    $region33: #{tpu_custom_call.1} parent=1 // pred_fallthru
      _
    // Predicated region
    $region34: #{tpu_custom_call.1} parent=1 // pred_check
      _
    $region35: #{tpu_custom_call.1} parent=1 // pred_check_branch
      %78 = sbr.rel (0) target = $region37
    $region36: #{tpu_custom_call.1} parent=1 // pred_region
      %79 = dma.done [#allocation8], 2048
    $region37: #{tpu_custom_call.1} parent=1 // pred_fallthru
      _
    // Predicated region
    $region38: #{tpu_custom_call.1} parent=1 // pred_check
      _
    $region39: #{tpu_custom_call.1} parent=1 // pred_check_branch
      %81 = sbr.rel (0) target = $region41
    $region40: #{tpu_custom_call.1} parent=1 // pred_region
      %82 = dma.done [#allocation11], 64
    $region41: #{tpu_custom_call.1} parent=1 // pred_fallthru
      _
    %vm83 = vcmask 523264
    %84 = vst.msk [vmem:[#allocation2] sm:$0xff] %vm83, 0.0
    %85 = vst.msk [vmem:[#allocation2 + $0x8] sm:$0xff] %vm83, 0.0
    %v86 = vld [vmem:[#allocation7] sm:$0xff]
    %v87 = vld [vmem:[#allocation7 + $0x8] sm:$0xff]
    %v88 = vld [vmem:[#allocation7 + $0x10] sm:$0xff]
    %v89 = vld [vmem:[#allocation7 + $0x18] sm:$0xff]
    %v90 = vld [vmem:[#allocation7 + $0x20] sm:$0xff]
    %v91 = vld [vmem:[#allocation7 + $0x28] sm:$0xff]
    %v92 = vld [vmem:[#allocation7 + $0x30] sm:$0xff]
    %v93 = vld [vmem:[#allocation7 + $0x38] sm:$0xff]
    %v94 = vld [vmem:[#allocation9] sm:$0xff]
    %v95 = vld [vmem:[#allocation9 + $0x8] sm:$0xff]
    %v96 = vld [vmem:[#allocation9 + $0x10] sm:$0xff]
    %v97 = vld [vmem:[#allocation9 + $0x18] sm:$0xff]
    %v98 = vld [vmem:[#allocation10] sm:$0x1]
    %v99 = vld [vmem:[#allocation4] sm:$0xff]
    %v100 = vld [vmem:[#allocation4 + $0x8] sm:$0xff]
    %v102 = vlaneseq
    %v103 = vshrl.u32 %v102, 7
    %v104 = vsub.s32 0, %v103
    %v105 = vrot.slane %v98, %v104
    %v108 = vsel %vm83, %v99, 0
    %v111 = vsel %vm83, %v100, 0
    %113 = vmatprep.subr.mxu0 0.0
    %114 = vmatpush1.msra.mxu0 %v86
    %115 = vmatprep.subr.mxu0 0.0
    %116 = vmatpush1.msra.mxu0 %v87
    %117 = vmatprep.subr.mxu0 0.0
    %118 = vmatpush1.msra.mxu0 %v88
    %119 = vmatprep.subr.mxu0 0.0
    %120 = vmatpush1.msra.mxu0 %v89
    %121 = vmatprep.subr.mxu0 0.0
    %122 = vmatpush1.msra.mxu0 %v90
    %123 = vmatprep.subr.mxu0 0.0
    %124 = vmatpush1.msra.mxu0 %v91
    %125 = vmatprep.subr.mxu0 0.0
    %126 = vmatpush1.msra.mxu0 %v92
    %127 = vmatprep.subr.mxu0 0.0
    %128 = vmatpush1.msra.mxu0 %v93
    %129 = vmatprep.subr.mxu0 0.0
    %130 = vmatpush1.msra.mxu0 0.0
    %131 = vmatprep.subr.mxu0 0.0
    %132 = vmatpush1.msra.mxu0 0.0
    %133 = vmatprep.subr.mxu0 0.0
    %134 = vmatpush1.msra.mxu0 0.0
    %135 = vmatprep.subr.mxu0 0.0
    %136 = vmatpush1.msra.mxu0 0.0
    %137 = vmatprep.subr.mxu0 0.0
    %138 = vmatpush1.msra.mxu0 0.0
    %139 = vmatprep.subr.mxu0 0.0
    %140 = vmatpush1.msra.mxu0 0.0
    %141 = vmatprep.subr.mxu0 0.0
    %142 = vmatpush1.msra.mxu0 0.0
    %143 = vmatprep.subr.mxu0 0.0
    %144 = vmatpush1.msra.mxu0 0.0
    %145 = vmatprep.subr.mxu0 0.0
    %146 = vmatpush1.msra.mxu0 0.0
    %147 = vmatprep.subr.mxu0 0.0
    %148 = vmatpush1.msra.mxu0 0.0
    %149 = vmatprep.subr.mxu0 0.0
    %150 = vmatpush1.msra.mxu0 0.0
    %151 = vmatprep.subr.mxu0 0.0
    %152 = vmatpush1.msra.mxu0 0.0
    %153 = vmatprep.subr.mxu0 0.0
    %154 = vmatpush1.msra.mxu0 0.0
    %155 = vmatprep.subr.mxu0 0.0
    %156 = vmatpush1.msra.mxu0 0.0
    %157 = vmatprep.subr.mxu0 0.0
    %158 = vmatpush1.msra.mxu0 0.0
    %159 = vmatprep.subr.mxu0 0.0
    %160 = vmatpush1.msra.mxu0 0.0
    %161 = vmatprep.subr.mxu0 0.0
    %162 = vmatpush1.msra.mxu0 0.0
    %163 = vmatprep.subr.mxu0 0.0
    %164 = vmatpush1.msra.mxu0 0.0
    %165 = vmatprep.subr.mxu0 0.0
    %166 = vmatpush1.msra.mxu0 0.0
    %167 = vmatprep.subr.mxu0 0.0
    %168 = vmatpush1.msra.mxu0 0.0
    %169 = vmatprep.subr.mxu0 0.0
    %170 = vmatpush1.msra.mxu0 0.0
    %171 = vmatprep.subr.mxu0 0.0
    %172 = vmatpush1.msra.mxu0 0.0
    %173 = vmatprep.subr.mxu0 0.0
    %174 = vmatpush1.msra.mxu0 0.0
    %175 = vmatprep.subr.mxu0 0.0
    %176 = vmatpush1.msra.mxu0 0.0
    %177 = vmatprep.mubr.f32.mxu0 0.0
    %178 = vmatmul.mubr.f32.gmra.mrb[0].mxu0 %v108
    %v179 = vpop.f32.mrb[0].mxu0
    %v180 = vadd.f32 %v105, %v179
    %v181 = vpop.f32.mrb[0].mxu0
    %182 = vmatprep.mubr.f32.mxu0 0.0
    %183 = vmatmul.mubr.f32.gmra.mrb[0].mxu0 %v111
    %v184 = vpop.f32.mrb[0].mxu0
    %v185 = vadd.f32 %v105, %v184
    %v186 = vpop.f32.mrb[0].mxu0
    %187 = vdwg.mxu0
    %188 = vst [vmem:[#allocation3] sm:$0xff] %v180
    %189 = vst [vmem:[#allocation3 + $0x8] sm:$0xff] %v185
    %v190 = vld [vmem:[%s4] sm:$0x3]
    %v191 = vld [vmem:[%s5] sm:$0x3]
    %v192 = vld [vmem:[#allocation3] sm:$0x3]
    %vm193 = vcmask 261120
    %v195 = vsel %vm193, %v190, 0
    %197 = vmatprep.subr.mxu0 0.0
    %198 = vmatpush1.msra.mxu0 %v94
    %199 = vmatprep.subr.mxu0 0.0
    %200 = vmatpush1.msra.mxu0 %v95
    %201 = vmatprep.subr.mxu0 0.0
    %202 = vmatpush1.msra.mxu0 %v96
    %203 = vmatprep.subr.mxu0 0.0
    %204 = vmatpush1.msra.mxu0 %v97
    %205 = vmatprep.subr.mxu0 0.0
    %206 = vmatpush1.msra.mxu0 0.0
    %207 = vmatprep.subr.mxu0 0.0
    %208 = vmatpush1.msra.mxu0 0.0
    %209 = vmatprep.subr.mxu0 0.0
    %210 = vmatpush1.msra.mxu0 0.0
    %211 = vmatprep.subr.mxu0 0.0
    %212 = vmatpush1.msra.mxu0 0.0
    %213 = vmatprep.subr.mxu0 0.0
    %214 = vmatpush1.msra.mxu0 0.0
    %215 = vmatprep.subr.mxu0 0.0
    %216 = vmatpush1.msra.mxu0 0.0
    %217 = vmatprep.subr.mxu0 0.0
    %218 = vmatpush1.msra.mxu0 0.0
    %219 = vmatprep.subr.mxu0 0.0
    %220 = vmatpush1.msra.mxu0 0.0
    %221 = vmatprep.subr.mxu0 0.0
    %222 = vmatpush1.msra.mxu0 0.0
    %223 = vmatprep.subr.mxu0 0.0
    %224 = vmatpush1.msra.mxu0 0.0
    %225 = vmatprep.subr.mxu0 0.0
    %226 = vmatpush1.msra.mxu0 0.0
    %227 = vmatprep.subr.mxu0 0.0
    %228 = vmatpush1.msra.mxu0 0.0
    %229 = vmatprep.subr.mxu0 0.0
    %230 = vmatpush1.msra.mxu0 0.0
    %231 = vmatprep.subr.mxu0 0.0
    %232 = vmatpush1.msra.mxu0 0.0
    %233 = vmatprep.subr.mxu0 0.0
    %234 = vmatpush1.msra.mxu0 0.0
    %235 = vmatprep.subr.mxu0 0.0
    %236 = vmatpush1.msra.mxu0 0.0
    %237 = vmatprep.subr.mxu0 0.0
    %238 = vmatpush1.msra.mxu0 0.0
    %239 = vmatprep.subr.mxu0 0.0
    %240 = vmatpush1.msra.mxu0 0.0
    %241 = vmatprep.subr.mxu0 0.0
    %242 = vmatpush1.msra.mxu0 0.0
    %243 = vmatprep.subr.mxu0 0.0
    %244 = vmatpush1.msra.mxu0 0.0
    %245 = vmatprep.subr.mxu0 0.0
    %246 = vmatpush1.msra.mxu0 0.0
    %247 = vmatprep.subr.mxu0 0.0
    %248 = vmatpush1.msra.mxu0 0.0
    %249 = vmatprep.subr.mxu0 0.0
    %250 = vmatpush1.msra.mxu0 0.0
    %251 = vmatprep.subr.mxu0 0.0
    %252 = vmatpush1.msra.mxu0 0.0
    %253 = vmatprep.subr.mxu0 0.0
    %254 = vmatpush1.msra.mxu0 0.0
    %255 = vmatprep.subr.mxu0 0.0
    %256 = vmatpush1.msra.mxu0 0.0
    %257 = vmatprep.subr.mxu0 0.0
    %258 = vmatpush1.msra.mxu0 0.0
    %259 = vmatprep.subr.mxu0 0.0
    %260 = vmatpush1.msra.mxu0 0.0
    %261 = vmatprep.mubr.f32.mxu0 0.0
    %262 = vmatmul.mubr.f32.gmra.mrb[0].mxu0 %v195
    %v263 = vpop.f32.mrb[0].mxu0
    %v264 = vadd.f32 0.0, %v263
    %v265 = vpop.f32.mrb[0].mxu0
    %266 = vdwg.mxu0
    %v267 = vadd.f32 %v192, %v264
    %v268 = vxor.u32 %v267, 2147483648
    %v269 = vmul.f32 %v268, 1.442695
    %v270 = vpow.pop %v269
    %v271 = vadd.f32 %v270, 1.0
    %v272 = vrcp.pop %v271
    %v273 = vmul.f32 1.0, %v272
    %v274 = vtanh.pop %v267
    %276 = vrot.lane.b32.xlu0 %v191, 32
    %v277 = vpop.permute.xlu0 %276
    %v279 = vmul.f32 %v273, %v277
    %281 = vrot.lane.b32.xlu0 %v274, 64
    %v282 = vpop.permute.xlu0 %281
    %v284 = vmul.f32 %v273, %v282
    %286 = vrot.lane.b32.xlu0 %v284, 32
    %v287 = vpop.permute.xlu0 %286
    %v289 = vadd.f32 %v279, %v287
    %v290 = vtanh.pop %v289
    %292 = vrot.lane.b32.xlu0 %v290, 64
    %v293 = vpop.permute.xlu0 %292
    %v295 = vmul.f32 %v273, %v293
    %297 = vrot.lane.b32.xlu0 %v295, 32
    %v298 = vpop.permute.xlu0 %297
    %vm300 = vcmask 254976
    %301 = vst.msk [vmem:[#allocation2] sm:$0x3] %vm300, %v298
    %v302 = vld [vmem:[#allocation3 + $0x2] sm:$0x3]
    %v303 = vsel %vm193, %v298, 0
    %305 = vmatprep.subr.mxu0 0.0
    %306 = vmatpush1.msra.mxu0 %v94
    %307 = vmatprep.subr.mxu0 0.0
    %308 = vmatpush1.msra.mxu0 %v95
    %309 = vmatprep.subr.mxu0 0.0
    %310 = vmatpush1.msra.mxu0 %v96
    %311 = vmatprep.subr.mxu0 0.0
    %312 = vmatpush1.msra.mxu0 %v97
    %313 = vmatprep.subr.mxu0 0.0
    %314 = vmatpush1.msra.mxu0 0.0
    %315 = vmatprep.subr.mxu0 0.0
    %316 = vmatpush1.msra.mxu0 0.0
    %317 = vmatprep.subr.mxu0 0.0
    %318 = vmatpush1.msra.mxu0 0.0
    %319 = vmatprep.subr.mxu0 0.0
    %320 = vmatpush1.msra.mxu0 0.0
    %321 = vmatprep.subr.mxu0 0.0
    %322 = vmatpush1.msra.mxu0 0.0
    %323 = vmatprep.subr.mxu0 0.0
    %324 = vmatpush1.msra.mxu0 0.0
    %325 = vmatprep.subr.mxu0 0.0
    %326 = vmatpush1.msra.mxu0 0.0
    %327 = vmatprep.subr.mxu0 0.0
    %328 = vmatpush1.msra.mxu0 0.0
    %329 = vmatprep.subr.mxu0 0.0
    %330 = vmatpush1.msra.mxu0 0.0
    %331 = vmatprep.subr.mxu0 0.0
    %332 = vmatpush1.msra.mxu0 0.0
    %333 = vmatprep.subr.mxu0 0.0
    %334 = vmatpush1.msra.mxu0 0.0
    %335 = vmatprep.subr.mxu0 0.0
    %336 = vmatpush1.msra.mxu0 0.0
    %337 = vmatprep.subr.mxu0 0.0
    %338 = vmatpush1.msra.mxu0 0.0
    %339 = vmatprep.subr.mxu0 0.0
    %340 = vmatpush1.msra.mxu0 0.0
    %341 = vmatprep.subr.mxu0 0.0
    %342 = vmatpush1.msra.mxu0 0.0
    %343 = vmatprep.subr.mxu0 0.0
    %344 = vmatpush1.msra.mxu0 0.0
    %345 = vmatprep.subr.mxu0 0.0
    %346 = vmatpush1.msra.mxu0 0.0
    %347 = vmatprep.subr.mxu0 0.0
    %348 = vmatpush1.msra.mxu0 0.0
    %349 = vmatprep.subr.mxu0 0.0
    %350 = vmatpush1.msra.mxu0 0.0
    %351 = vmatprep.subr.mxu0 0.0
    %352 = vmatpush1.msra.mxu0 0.0
    %353 = vmatprep.subr.mxu0 0.0
    %354 = vmatpush1.msra.mxu0 0.0
    %355 = vmatprep.subr.mxu0 0.0
    %356 = vmatpush1.msra.mxu0 0.0
    %357 = vmatprep.subr.mxu0 0.0
    %358 = vmatpush1.msra.mxu0 0.0
    %359 = vmatprep.subr.mxu0 0.0
    %360 = vmatpush1.msra.mxu0 0.0
    %361 = vmatprep.subr.mxu0 0.0
    %362 = vmatpush1.msra.mxu0 0.0
    %363 = vmatprep.subr.mxu0 0.0
    %364 = vmatpush1.msra.mxu0 0.0
    %365 = vmatprep.subr.mxu0 0.0
    %366 = vmatpush1.msra.mxu0 0.0
    %367 = vmatprep.subr.mxu0 0.0
    %368 = vmatpush1.msra.mxu0 0.0
    %369 = vmatprep.mubr.f32.mxu0 0.0
    %370 = vmatmul.mubr.f32.gmra.mrb[0].mxu0 %v303
    %v371 = vpop.f32.mrb[0].mxu0
    %v372 = vadd.f32 0.0, %v371
    %v373 = vpop.f32.mrb[0].mxu0
    %374 = vdwg.mxu0
    %v375 = vadd.f32 %v302, %v372
    %v376 = vxor.u32 %v375, 2147483648
    %v377 = vmul.f32 %v376, 1.442695
    %v378 = vpow.pop %v377
    %v379 = vadd.f32 %v378, 1.0
    %v380 = vrcp.pop %v379
    %v381 = vmul.f32 1.0, %v380
    %v382 = vtanh.pop %v375
    %v383 = vmul.f32 %v381, %v289
    %385 = vrot.lane.b32.xlu0 %v382, 64
    %v386 = vpop.permute.xlu0 %385
    %v388 = vmul.f32 %v381, %v386
    %390 = vrot.lane.b32.xlu0 %v388, 32
    %v391 = vpop.permute.xlu0 %390
    %v393 = vadd.f32 %v383, %v391
    %v394 = vtanh.pop %v393
    %396 = vrot.lane.b32.xlu0 %v394, 64
    %v397 = vpop.permute.xlu0 %396
    %v399 = vmul.f32 %v381, %v397
    %401 = vrot.lane.b32.xlu0 %v399, 32
    %v402 = vpop.permute.xlu0 %401
    %404 = vst.msk [vmem:[#allocation2 + $0x2] sm:$0x3] %vm300, %v402
    %v405 = vld [vmem:[#allocation3 + $0x4] sm:$0x3]
    %v406 = vsel %vm193, %v402, 0
    %408 = vmatprep.subr.mxu0 0.0
    %409 = vmatpush1.msra.mxu0 %v94
    %410 = vmatprep.subr.mxu0 0.0
    %411 = vmatpush1.msra.mxu0 %v95
    %412 = vmatprep.subr.mxu0 0.0
    %413 = vmatpush1.msra.mxu0 %v96
    %414 = vmatprep.subr.mxu0 0.0
    %415 = vmatpush1.msra.mxu0 %v97
    %416 = vmatprep.subr.mxu0 0.0
    %417 = vmatpush1.msra.mxu0 0.0
    %418 = vmatprep.subr.mxu0 0.0
    %419 = vmatpush1.msra.mxu0 0.0
    %420 = vmatprep.subr.mxu0 0.0
    %421 = vmatpush1.msra.mxu0 0.0
    %422 = vmatprep.subr.mxu0 0.0
    %423 = vmatpush1.msra.mxu0 0.0
    %424 = vmatprep.subr.mxu0 0.0
    %425 = vmatpush1.msra.mxu0 0.0
    %426 = vmatprep.subr.mxu0 0.0
    %427 = vmatpush1.msra.mxu0 0.0
    %428 = vmatprep.subr.mxu0 0.0
    %429 = vmatpush1.msra.mxu0 0.0
    %430 = vmatprep.subr.mxu0 0.0
    %431 = vmatpush1.msra.mxu0 0.0
    %432 = vmatprep.subr.mxu0 0.0
    %433 = vmatpush1.msra.mxu0 0.0
    %434 = vmatprep.subr.mxu0 0.0
    %435 = vmatpush1.msra.mxu0 0.0
    %436 = vmatprep.subr.mxu0 0.0
    %437 = vmatpush1.msra.mxu0 0.0
    %438 = vmatprep.subr.mxu0 0.0
    %439 = vmatpush1.msra.mxu0 0.0
    %440 = vmatprep.subr.mxu0 0.0
    %441 = vmatpush1.msra.mxu0 0.0
    %442 = vmatprep.subr.mxu0 0.0
    %443 = vmatpush1.msra.mxu0 0.0
    %444 = vmatprep.subr.mxu0 0.0
    %445 = vmatpush1.msra.mxu0 0.0
    %446 = vmatprep.subr.mxu0 0.0
    %447 = vmatpush1.msra.mxu0 0.0
    %448 = vmatprep.subr.mxu0 0.0
    %449 = vmatpush1.msra.mxu0 0.0
    %450 = vmatprep.subr.mxu0 0.0
    %451 = vmatpush1.msra.mxu0 0.0
    %452 = vmatprep.subr.mxu0 0.0
    %453 = vmatpush1.msra.mxu0 0.0
    %454 = vmatprep.subr.mxu0 0.0
    %455 = vmatpush1.msra.mxu0 0.0
    %456 = vmatprep.subr.mxu0 0.0
    %457 = vmatpush1.msra.mxu0 0.0
    %458 = vmatprep.subr.mxu0 0.0
    %459 = vmatpush1.msra.mxu0 0.0
    %460 = vmatprep.subr.mxu0 0.0
    %461 = vmatpush1.msra.mxu0 0.0
    %462 = vmatprep.subr.mxu0 0.0
    %463 = vmatpush1.msra.mxu0 0.0
    %464 = vmatprep.subr.mxu0 0.0
    %465 = vmatpush1.msra.mxu0 0.0
    %466 = vmatprep.subr.mxu0 0.0
    %467 = vmatpush1.msra.mxu0 0.0
    %468 = vmatprep.subr.mxu0 0.0
    %469 = vmatpush1.msra.mxu0 0.0
    %470 = vmatprep.subr.mxu0 0.0
    %471 = vmatpush1.msra.mxu0 0.0
    %472 = vmatprep.mubr.f32.mxu0 0.0
    %473 = vmatmul.mubr.f32.gmra.mrb[0].mxu0 %v406
    %v474 = vpop.f32.mrb[0].mxu0
    %v475 = vadd.f32 0.0, %v474
    %v476 = vpop.f32.mrb[0].mxu0
    %477 = vdwg.mxu0
    %v478 = vadd.f32 %v405, %v475
    %v479 = vxor.u32 %v478, 2147483648
    %v480 = vmul.f32 %v479, 1.442695
    %v481 = vpow.pop %v480
    %v482 = vadd.f32 %v481, 1.0
    %v483 = vrcp.pop %v482
    %v484 = vmul.f32 1.0, %v483
    %v485 = vtanh.pop %v478
    %v486 = vmul.f32 %v484, %v393
    %488 = vrot.lane.b32.xlu0 %v485, 64
    %v489 = vpop.permute.xlu0 %488
    %v491 = vmul.f32 %v484, %v489
    %493 = vrot.lane.b32.xlu0 %v491, 32
    %v494 = vpop.permute.xlu0 %493
    %v496 = vadd.f32 %v486, %v494
    %v497 = vtanh.pop %v496
    %499 = vrot.lane.b32.xlu0 %v497, 64
    %v500 = vpop.permute.xlu0 %499
    %v502 = vmul.f32 %v484, %v500
    %504 = vrot.lane.b32.xlu0 %v502, 32
    %v505 = vpop.permute.xlu0 %504
    %507 = vst.msk [vmem:[#allocation2 + $0x4] sm:$0x3] %vm300, %v505
    %v508 = vld [vmem:[#allocation3 + $0x6] sm:$0x3]
    %v509 = vsel %vm193, %v505, 0
    %511 = vmatprep.subr.mxu0 0.0
    %512 = vmatpush1.msra.mxu0 %v94
    %513 = vmatprep.subr.mxu0 0.0
    %514 = vmatpush1.msra.mxu0 %v95
    %515 = vmatprep.subr.mxu0 0.0
    %516 = vmatpush1.msra.mxu0 %v96
    %517 = vmatprep.subr.mxu0 0.0
    %518 = vmatpush1.msra.mxu0 %v97
    %519 = vmatprep.subr.mxu0 0.0
    %520 = vmatpush1.msra.mxu0 0.0
    %521 = vmatprep.subr.mxu0 0.0
    %522 = vmatpush1.msra.mxu0 0.0
    %523 = vmatprep.subr.mxu0 0.0
    %524 = vmatpush1.msra.mxu0 0.0
    %525 = vmatprep.subr.mxu0 0.0
    %526 = vmatpush1.msra.mxu0 0.0
    %527 = vmatprep.subr.mxu0 0.0
    %528 = vmatpush1.msra.mxu0 0.0
    %529 = vmatprep.subr.mxu0 0.0
    %530 = vmatpush1.msra.mxu0 0.0
    %531 = vmatprep.subr.mxu0 0.0
    %532 = vmatpush1.msra.mxu0 0.0
    %533 = vmatprep.subr.mxu0 0.0
    %534 = vmatpush1.msra.mxu0 0.0
    %535 = vmatprep.subr.mxu0 0.0
    %536 = vmatpush1.msra.mxu0 0.0
    %537 = vmatprep.subr.mxu0 0.0
    %538 = vmatpush1.msra.mxu0 0.0
    %539 = vmatprep.subr.mxu0 0.0
    %540 = vmatpush1.msra.mxu0 0.0
    %541 = vmatprep.subr.mxu0 0.0
    %542 = vmatpush1.msra.mxu0 0.0
    %543 = vmatprep.subr.mxu0 0.0
    %544 = vmatpush1.msra.mxu0 0.0
    %545 = vmatprep.subr.mxu0 0.0
    %546 = vmatpush1.msra.mxu0 0.0
    %547 = vmatprep.subr.mxu0 0.0
    %548 = vmatpush1.msra.mxu0 0.0
    %549 = vmatprep.subr.mxu0 0.0
    %550 = vmatpush1.msra.mxu0 0.0
    %551 = vmatprep.subr.mxu0 0.0
    %552 = vmatpush1.msra.mxu0 0.0
    %553 = vmatprep.subr.mxu0 0.0
    %554 = vmatpush1.msra.mxu0 0.0
    %555 = vmatprep.subr.mxu0 0.0
    %556 = vmatpush1.msra.mxu0 0.0
    %557 = vmatprep.subr.mxu0 0.0
    %558 = vmatpush1.msra.mxu0 0.0
    %559 = vmatprep.subr.mxu0 0.0
    %560 = vmatpush1.msra.mxu0 0.0
    %561 = vmatprep.subr.mxu0 0.0
    %562 = vmatpush1.msra.mxu0 0.0
    %563 = vmatprep.subr.mxu0 0.0
    %564 = vmatpush1.msra.mxu0 0.0
    %565 = vmatprep.subr.mxu0 0.0
    %566 = vmatpush1.msra.mxu0 0.0
    %567 = vmatprep.subr.mxu0 0.0
    %568 = vmatpush1.msra.mxu0 0.0
    %569 = vmatprep.subr.mxu0 0.0
    %570 = vmatpush1.msra.mxu0 0.0
    %571 = vmatprep.subr.mxu0 0.0
    %572 = vmatpush1.msra.mxu0 0.0
    %573 = vmatprep.subr.mxu0 0.0
    %574 = vmatpush1.msra.mxu0 0.0
    %575 = vmatprep.mubr.f32.mxu0 0.0
    %576 = vmatmul.mubr.f32.gmra.mrb[0].mxu0 %v509
    %v577 = vpop.f32.mrb[0].mxu0
    %v578 = vadd.f32 0.0, %v577
    %v579 = vpop.f32.mrb[0].mxu0
    %580 = vdwg.mxu0
    %v581 = vadd.f32 %v508, %v578
    %v582 = vxor.u32 %v581, 2147483648
    %v583 = vmul.f32 %v582, 1.442695
    %v584 = vpow.pop %v583
    %v585 = vadd.f32 %v584, 1.0
    %v586 = vrcp.pop %v585
    %v587 = vmul.f32 1.0, %v586
    %v588 = vtanh.pop %v581
    %v589 = vmul.f32 %v587, %v496
    %591 = vrot.lane.b32.xlu0 %v588, 64
    %v592 = vpop.permute.xlu0 %591
    %v594 = vmul.f32 %v587, %v592
    %596 = vrot.lane.b32.xlu0 %v594, 32
    %v597 = vpop.permute.xlu0 %596
    %v599 = vadd.f32 %v589, %v597
    %v600 = vtanh.pop %v599
    %602 = vrot.lane.b32.xlu0 %v600, 64
    %v603 = vpop.permute.xlu0 %602
    %v605 = vmul.f32 %v587, %v603
    %607 = vrot.lane.b32.xlu0 %v605, 32
    %v608 = vpop.permute.xlu0 %607
    %610 = vst.msk [vmem:[#allocation2 + $0x6] sm:$0x3] %vm300, %v608
    %v611 = vld [vmem:[#allocation3 + $0x8] sm:$0x3]
    %v612 = vsel %vm193, %v608, 0
    %614 = vmatprep.subr.mxu0 0.0
    %615 = vmatpush1.msra.mxu0 %v94
    %616 = vmatprep.subr.mxu0 0.0
    %617 = vmatpush1.msra.mxu0 %v95
    %618 = vmatprep.subr.mxu0 0.0
    %619 = vmatpush1.msra.mxu0 %v96
    %620 = vmatprep.subr.mxu0 0.0
    %621 = vmatpush1.msra.mxu0 %v97
    %622 = vmatprep.subr.mxu0 0.0
    %623 = vmatpush1.msra.mxu0 0.0
    %624 = vmatprep.subr.mxu0 0.0
    %625 = vmatpush1.msra.mxu0 0.0
    %626 = vmatprep.subr.mxu0 0.0
    %627 = vmatpush1.msra.mxu0 0.0
    %628 = vmatprep.subr.mxu0 0.0
    %629 = vmatpush1.msra.mxu0 0.0
    %630 = vmatprep.subr.mxu0 0.0
    %631 = vmatpush1.msra.mxu0 0.0
    %632 = vmatprep.subr.mxu0 0.0
    %633 = vmatpush1.msra.mxu0 0.0
    %634 = vmatprep.subr.mxu0 0.0
    %635 = vmatpush1.msra.mxu0 0.0
    %636 = vmatprep.subr.mxu0 0.0
    %637 = vmatpush1.msra.mxu0 0.0
    %638 = vmatprep.subr.mxu0 0.0
    %639 = vmatpush1.msra.mxu0 0.0
    %640 = vmatprep.subr.mxu0 0.0
    %641 = vmatpush1.msra.mxu0 0.0
    %642 = vmatprep.subr.mxu0 0.0
    %643 = vmatpush1.msra.mxu0 0.0
    %644 = vmatprep.subr.mxu0 0.0
    %645 = vmatpush1.msra.mxu0 0.0
    %646 = vmatprep.subr.mxu0 0.0
    %647 = vmatpush1.msra.mxu0 0.0
    %648 = vmatprep.subr.mxu0 0.0
    %649 = vmatpush1.msra.mxu0 0.0
    %650 = vmatprep.subr.mxu0 0.0
    %651 = vmatpush1.msra.mxu0 0.0
    %652 = vmatprep.subr.mxu0 0.0
    %653 = vmatpush1.msra.mxu0 0.0
    %654 = vmatprep.subr.mxu0 0.0
    %655 = vmatpush1.msra.mxu0 0.0
    %656 = vmatprep.subr.mxu0 0.0
    %657 = vmatpush1.msra.mxu0 0.0
    %658 = vmatprep.subr.mxu0 0.0
    %659 = vmatpush1.msra.mxu0 0.0
    %660 = vmatprep.subr.mxu0 0.0
    %661 = vmatpush1.msra.mxu0 0.0
    %662 = vmatprep.subr.mxu0 0.0
    %663 = vmatpush1.msra.mxu0 0.0
    %664 = vmatprep.subr.mxu0 0.0
    %665 = vmatpush1.msra.mxu0 0.0
    %666 = vmatprep.subr.mxu0 0.0
    %667 = vmatpush1.msra.mxu0 0.0
    %668 = vmatprep.subr.mxu0 0.0
    %669 = vmatpush1.msra.mxu0 0.0
    %670 = vmatprep.subr.mxu0 0.0
    %671 = vmatpush1.msra.mxu0 0.0
    %672 = vmatprep.subr.mxu0 0.0
    %673 = vmatpush1.msra.mxu0 0.0
    %674 = vmatprep.subr.mxu0 0.0
    %675 = vmatpush1.msra.mxu0 0.0
    %676 = vmatprep.subr.mxu0 0.0
    %677 = vmatpush1.msra.mxu0 0.0
    %678 = vmatprep.mubr.f32.mxu0 0.0
    %679 = vmatmul.mubr.f32.gmra.mrb[0].mxu0 %v612
    %v680 = vpop.f32.mrb[0].mxu0
    %v681 = vadd.f32 0.0, %v680
    %v682 = vpop.f32.mrb[0].mxu0
    %683 = vdwg.mxu0
    %v684 = vadd.f32 %v611, %v681
    %v685 = vxor.u32 %v684, 2147483648
    %v686 = vmul.f32 %v685, 1.442695
    %v687 = vpow.pop %v686
    %v688 = vadd.f32 %v687, 1.0
    %v689 = vrcp.pop %v688
    %v690 = vmul.f32 1.0, %v689
    %v691 = vtanh.pop %v684
    %v692 = vmul.f32 %v690, %v599
    %694 = vrot.lane.b32.xlu0 %v691, 64
    %v695 = vpop.permute.xlu0 %694
    %v697 = vmul.f32 %v690, %v695
    %699 = vrot.lane.b32.xlu0 %v697, 32
    %v700 = vpop.permute.xlu0 %699
    %v702 = vadd.f32 %v692, %v700
    %v703 = vtanh.pop %v702
    %705 = vrot.lane.b32.xlu0 %v703, 64
    %v706 = vpop.permute.xlu0 %705
    %v708 = vmul.f32 %v690, %v706
    %710 = vrot.lane.b32.xlu0 %v708, 32
    %v711 = vpop.permute.xlu0 %710
    %713 = vst.msk [vmem:[#allocation2 + $0x8] sm:$0x3] %vm300, %v711
    %v714 = vld [vmem:[#allocation3 + $0xa] sm:$0x3]
    %v715 = vsel %vm193, %v711, 0
    %717 = vmatprep.subr.mxu0 0.0
    %718 = vmatpush1.msra.mxu0 %v94
    %719 = vmatprep.subr.mxu0 0.0
    %720 = vmatpush1.msra.mxu0 %v95
    %721 = vmatprep.subr.mxu0 0.0
    %722 = vmatpush1.msra.mxu0 %v96
    %723 = vmatprep.subr.mxu0 0.0
    %724 = vmatpush1.msra.mxu0 %v97
    %725 = vmatprep.subr.mxu0 0.0
    %726 = vmatpush1.msra.mxu0 0.0
    %727 = vmatprep.subr.mxu0 0.0
    %728 = vmatpush1.msra.mxu0 0.0
    %729 = vmatprep.subr.mxu0 0.0
    %730 = vmatpush1.msra.mxu0 0.0
    %731 = vmatprep.subr.mxu0 0.0
    %732 = vmatpush1.msra.mxu0 0.0
    %733 = vmatprep.subr.mxu0 0.0
    %734 = vmatpush1.msra.mxu0 0.0
    %735 = vmatprep.subr.mxu0 0.0
    %736 = vmatpush1.msra.mxu0 0.0
    %737 = vmatprep.subr.mxu0 0.0
    %738 = vmatpush1.msra.mxu0 0.0
    %739 = vmatprep.subr.mxu0 0.0
    %740 = vmatpush1.msra.mxu0 0.0
    %741 = vmatprep.subr.mxu0 0.0
    %742 = vmatpush1.msra.mxu0 0.0
    %743 = vmatprep.subr.mxu0 0.0
    %744 = vmatpush1.msra.mxu0 0.0
    %745 = vmatprep.subr.mxu0 0.0
    %746 = vmatpush1.msra.mxu0 0.0
    %747 = vmatprep.subr.mxu0 0.0
    %748 = vmatpush1.msra.mxu0 0.0
    %749 = vmatprep.subr.mxu0 0.0
    %750 = vmatpush1.msra.mxu0 0.0
    %751 = vmatprep.subr.mxu0 0.0
    %752 = vmatpush1.msra.mxu0 0.0
    %753 = vmatprep.subr.mxu0 0.0
    %754 = vmatpush1.msra.mxu0 0.0
    %755 = vmatprep.subr.mxu0 0.0
    %756 = vmatpush1.msra.mxu0 0.0
    %757 = vmatprep.subr.mxu0 0.0
    %758 = vmatpush1.msra.mxu0 0.0
    %759 = vmatprep.subr.mxu0 0.0
    %760 = vmatpush1.msra.mxu0 0.0
    %761 = vmatprep.subr.mxu0 0.0
    %762 = vmatpush1.msra.mxu0 0.0
    %763 = vmatprep.subr.mxu0 0.0
    %764 = vmatpush1.msra.mxu0 0.0
    %765 = vmatprep.subr.mxu0 0.0
    %766 = vmatpush1.msra.mxu0 0.0
    %767 = vmatprep.subr.mxu0 0.0
    %768 = vmatpush1.msra.mxu0 0.0
    %769 = vmatprep.subr.mxu0 0.0
    %770 = vmatpush1.msra.mxu0 0.0
    %771 = vmatprep.subr.mxu0 0.0
    %772 = vmatpush1.msra.mxu0 0.0
    %773 = vmatprep.subr.mxu0 0.0
    %774 = vmatpush1.msra.mxu0 0.0
    %775 = vmatprep.subr.mxu0 0.0
    %776 = vmatpush1.msra.mxu0 0.0
    %777 = vmatprep.subr.mxu0 0.0
    %778 = vmatpush1.msra.mxu0 0.0
    %779 = vmatprep.subr.mxu0 0.0
    %780 = vmatpush1.msra.mxu0 0.0
    %781 = vmatprep.mubr.f32.mxu0 0.0
    %782 = vmatmul.mubr.f32.gmra.mrb[0].mxu0 %v715
    %v783 = vpop.f32.mrb[0].mxu0
    %v784 = vadd.f32 0.0, %v783
    %v785 = vpop.f32.mrb[0].mxu0
    %786 = vdwg.mxu0
    %v787 = vadd.f32 %v714, %v784
    %v788 = vxor.u32 %v787, 2147483648
    %v789 = vmul.f32 %v788, 1.442695
    %v790 = vpow.pop %v789
    %v791 = vadd.f32 %v790, 1.0
    %v792 = vrcp.pop %v791
    %v793 = vmul.f32 1.0, %v792
    %v794 = vtanh.pop %v787
    %v795 = vmul.f32 %v793, %v702
    %797 = vrot.lane.b32.xlu0 %v794, 64
    %v798 = vpop.permute.xlu0 %797
    %v800 = vmul.f32 %v793, %v798
    %802 = vrot.lane.b32.xlu0 %v800, 32
    %v803 = vpop.permute.xlu0 %802
    %v805 = vadd.f32 %v795, %v803
    %v806 = vtanh.pop %v805
    %808 = vrot.lane.b32.xlu0 %v806, 64
    %v809 = vpop.permute.xlu0 %808
    %v811 = vmul.f32 %v793, %v809
    %813 = vrot.lane.b32.xlu0 %v811, 32
    %v814 = vpop.permute.xlu0 %813
    %816 = vst.msk [vmem:[#allocation2 + $0xa] sm:$0x3] %vm300, %v814
    %v817 = vld [vmem:[#allocation3 + $0xc] sm:$0x3]
    %v818 = vsel %vm193, %v814, 0
    %820 = vmatprep.subr.mxu0 0.0
    %821 = vmatpush1.msra.mxu0 %v94
    %822 = vmatprep.subr.mxu0 0.0
    %823 = vmatpush1.msra.mxu0 %v95
    %824 = vmatprep.subr.mxu0 0.0
    %825 = vmatpush1.msra.mxu0 %v96
    %826 = vmatprep.subr.mxu0 0.0
    %827 = vmatpush1.msra.mxu0 %v97
    %828 = vmatprep.subr.mxu0 0.0
    %829 = vmatpush1.msra.mxu0 0.0
    %830 = vmatprep.subr.mxu0 0.0
    %831 = vmatpush1.msra.mxu0 0.0
    %832 = vmatprep.subr.mxu0 0.0
    %833 = vmatpush1.msra.mxu0 0.0
    %834 = vmatprep.subr.mxu0 0.0
    %835 = vmatpush1.msra.mxu0 0.0
    %836 = vmatprep.subr.mxu0 0.0
    %837 = vmatpush1.msra.mxu0 0.0
    %838 = vmatprep.subr.mxu0 0.0
    %839 = vmatpush1.msra.mxu0 0.0
    %840 = vmatprep.subr.mxu0 0.0
    %841 = vmatpush1.msra.mxu0 0.0
    %842 = vmatprep.subr.mxu0 0.0
    %843 = vmatpush1.msra.mxu0 0.0
    %844 = vmatprep.subr.mxu0 0.0
    %845 = vmatpush1.msra.mxu0 0.0
    %846 = vmatprep.subr.mxu0 0.0
    %847 = vmatpush1.msra.mxu0 0.0
    %848 = vmatprep.subr.mxu0 0.0
    %849 = vmatpush1.msra.mxu0 0.0
    %850 = vmatprep.subr.mxu0 0.0
    %851 = vmatpush1.msra.mxu0 0.0
    %852 = vmatprep.subr.mxu0 0.0
    %853 = vmatpush1.msra.mxu0 0.0
    %854 = vmatprep.subr.mxu0 0.0
    %855 = vmatpush1.msra.mxu0 0.0
    %856 = vmatprep.subr.mxu0 0.0
    %857 = vmatpush1.msra.mxu0 0.0
    %858 = vmatprep.subr.mxu0 0.0
    %859 = vmatpush1.msra.mxu0 0.0
    %860 = vmatprep.subr.mxu0 0.0
    %861 = vmatpush1.msra.mxu0 0.0
    %862 = vmatprep.subr.mxu0 0.0
    %863 = vmatpush1.msra.mxu0 0.0
    %864 = vmatprep.subr.mxu0 0.0
    %865 = vmatpush1.msra.mxu0 0.0
    %866 = vmatprep.subr.mxu0 0.0
    %867 = vmatpush1.msra.mxu0 0.0
    %868 = vmatprep.subr.mxu0 0.0
    %869 = vmatpush1.msra.mxu0 0.0
    %870 = vmatprep.subr.mxu0 0.0
    %871 = vmatpush1.msra.mxu0 0.0
    %872 = vmatprep.subr.mxu0 0.0
    %873 = vmatpush1.msra.mxu0 0.0
    %874 = vmatprep.subr.mxu0 0.0
    %875 = vmatpush1.msra.mxu0 0.0
    %876 = vmatprep.subr.mxu0 0.0
    %877 = vmatpush1.msra.mxu0 0.0
    %878 = vmatprep.subr.mxu0 0.0
    %879 = vmatpush1.msra.mxu0 0.0
    %880 = vmatprep.subr.mxu0 0.0
    %881 = vmatpush1.msra.mxu0 0.0
    %882 = vmatprep.subr.mxu0 0.0
    %883 = vmatpush1.msra.mxu0 0.0
    %884 = vmatprep.mubr.f32.mxu0 0.0
    %885 = vmatmul.mubr.f32.gmra.mrb[0].mxu0 %v818
    %v886 = vpop.f32.mrb[0].mxu0
    %v887 = vadd.f32 0.0, %v886
    %v888 = vpop.f32.mrb[0].mxu0
    %889 = vdwg.mxu0
    %v890 = vadd.f32 %v817, %v887
    %v891 = vxor.u32 %v890, 2147483648
    %v892 = vmul.f32 %v891, 1.442695
    %v893 = vpow.pop %v892
    %v894 = vadd.f32 %v893, 1.0
    %v895 = vrcp.pop %v894
    %v896 = vmul.f32 1.0, %v895
    %v897 = vtanh.pop %v890
    %v898 = vmul.f32 %v896, %v805
    %900 = vrot.lane.b32.xlu0 %v897, 64
    %v901 = vpop.permute.xlu0 %900
    %v903 = vmul.f32 %v896, %v901
    %905 = vrot.lane.b32.xlu0 %v903, 32
    %v906 = vpop.permute.xlu0 %905
    %v908 = vadd.f32 %v898, %v906
    %v909 = vtanh.pop %v908
    %911 = vrot.lane.b32.xlu0 %v909, 64
    %v912 = vpop.permute.xlu0 %911
    %v914 = vmul.f32 %v896, %v912
    %916 = vrot.lane.b32.xlu0 %v914, 32
    %v917 = vpop.permute.xlu0 %916
    %919 = vst.msk [vmem:[#allocation2 + $0xc] sm:$0x3] %vm300, %v917
    %v920 = vld [vmem:[#allocation3 + $0xe] sm:$0x3]
    %v921 = vsel %vm193, %v917, 0
    %923 = vmatprep.subr.mxu0 0.0
    %924 = vmatpush1.msra.mxu0 %v94
    %925 = vmatprep.subr.mxu0 0.0
    %926 = vmatpush1.msra.mxu0 %v95
    %927 = vmatprep.subr.mxu0 0.0
    %928 = vmatpush1.msra.mxu0 %v96
    %929 = vmatprep.subr.mxu0 0.0
    %930 = vmatpush1.msra.mxu0 %v97
    %931 = vmatprep.subr.mxu0 0.0
    %932 = vmatpush1.msra.mxu0 0.0
    %933 = vmatprep.subr.mxu0 0.0
    %934 = vmatpush1.msra.mxu0 0.0
    %935 = vmatprep.subr.mxu0 0.0
    %936 = vmatpush1.msra.mxu0 0.0
    %937 = vmatprep.subr.mxu0 0.0
    %938 = vmatpush1.msra.mxu0 0.0
    %939 = vmatprep.subr.mxu0 0.0
    %940 = vmatpush1.msra.mxu0 0.0
    %941 = vmatprep.subr.mxu0 0.0
    %942 = vmatpush1.msra.mxu0 0.0
    %943 = vmatprep.subr.mxu0 0.0
    %944 = vmatpush1.msra.mxu0 0.0
    %945 = vmatprep.subr.mxu0 0.0
    %946 = vmatpush1.msra.mxu0 0.0
    %947 = vmatprep.subr.mxu0 0.0
    %948 = vmatpush1.msra.mxu0 0.0
    %949 = vmatprep.subr.mxu0 0.0
    %950 = vmatpush1.msra.mxu0 0.0
    %951 = vmatprep.subr.mxu0 0.0
    %952 = vmatpush1.msra.mxu0 0.0
    %953 = vmatprep.subr.mxu0 0.0
    %954 = vmatpush1.msra.mxu0 0.0
    %955 = vmatprep.subr.mxu0 0.0
    %956 = vmatpush1.msra.mxu0 0.0
    %957 = vmatprep.subr.mxu0 0.0
    %958 = vmatpush1.msra.mxu0 0.0
    %959 = vmatprep.subr.mxu0 0.0
    %960 = vmatpush1.msra.mxu0 0.0
    %961 = vmatprep.subr.mxu0 0.0
    %962 = vmatpush1.msra.mxu0 0.0
    %963 = vmatprep.subr.mxu0 0.0
    %964 = vmatpush1.msra.mxu0 0.0
    %965 = vmatprep.subr.mxu0 0.0
    %966 = vmatpush1.msra.mxu0 0.0
    %967 = vmatprep.subr.mxu0 0.0
    %968 = vmatpush1.msra.mxu0 0.0
    %969 = vmatprep.subr.mxu0 0.0
    %970 = vmatpush1.msra.mxu0 0.0
    %971 = vmatprep.subr.mxu0 0.0
    %972 = vmatpush1.msra.mxu0 0.0
    %973 = vmatprep.subr.mxu0 0.0
    %974 = vmatpush1.msra.mxu0 0.0
    %975 = vmatprep.subr.mxu0 0.0
    %976 = vmatpush1.msra.mxu0 0.0
    %977 = vmatprep.subr.mxu0 0.0
    %978 = vmatpush1.msra.mxu0 0.0
    %979 = vmatprep.subr.mxu0 0.0
    %980 = vmatpush1.msra.mxu0 0.0
    %981 = vmatprep.subr.mxu0 0.0
    %982 = vmatpush1.msra.mxu0 0.0
    %983 = vmatprep.subr.mxu0 0.0
    %984 = vmatpush1.msra.mxu0 0.0
    %985 = vmatprep.subr.mxu0 0.0
    %986 = vmatpush1.msra.mxu0 0.0
    %987 = vmatprep.mubr.f32.mxu0 0.0
    %988 = vmatmul.mubr.f32.gmra.mrb[0].mxu0 %v921
    %v989 = vpop.f32.mrb[0].mxu0
    %v990 = vadd.f32 0.0, %v989
    %v991 = vpop.f32.mrb[0].mxu0
    %992 = vdwg.mxu0
    %v993 = vadd.f32 %v920, %v990
    %v994 = vxor.u32 %v993, 2147483648
    %v995 = vmul.f32 %v994, 1.442695
    %v996 = vpow.pop %v995
    %v997 = vadd.f32 %v996, 1.0
    %v998 = vrcp.pop %v997
    %v999 = vmul.f32 1.0, %v998
    %v1000 = vtanh.pop %v993
    %v1001 = vmul.f32 %v999, %v908
    %1003 = vrot.lane.b32.xlu0 %v1000, 64
    %v1004 = vpop.permute.xlu0 %1003
    %v1006 = vmul.f32 %v999, %v1004
    %1008 = vrot.lane.b32.xlu0 %v1006, 32
    %v1009 = vpop.permute.xlu0 %1008
    %v1011 = vadd.f32 %v1001, %v1009
    %v1012 = vtanh.pop %v1011
    %1014 = vrot.lane.b32.xlu0 %v1012, 64
    %v1015 = vpop.permute.xlu0 %1014
    %v1017 = vmul.f32 %v999, %v1015
    %1019 = vrot.lane.b32.xlu0 %v1017, 32
    %v1020 = vpop.permute.xlu0 %1019
    %1022 = vst.msk [vmem:[#allocation2 + $0xe] sm:$0x3] %vm300, %v1020
    %1023 = vst.msk [vmem:[#allocation13] sm:$0x3] %vm300, %v1020
    %1025 = vrot.lane.b32.xlu0 %v1011, 96
    %v1026 = vpop.permute.xlu0 %1025
    %1028 = vst.msk [vmem:[#allocation15] sm:$0x3] %vm300, %v1026
    %s1029 = scalar_lea.vmem [#allocation7], 64
    %v1030 = vld [vmem:[%s1029] sm:$0xff]
    %v1031 = vld [vmem:[%s1029 + $0x8] sm:$0xff]
    %v1032 = vld [vmem:[%s1029 + $0x10] sm:$0xff]
    %v1033 = vld [vmem:[%s1029 + $0x18] sm:$0xff]
    %v1034 = vld [vmem:[%s1029 + $0x20] sm:$0xff]
    %v1035 = vld [vmem:[%s1029 + $0x28] sm:$0xff]
    %v1036 = vld [vmem:[%s1029 + $0x30] sm:$0xff]
    %v1037 = vld [vmem:[%s1029 + $0x38] sm:$0xff]
    %s1038 = scalar_lea.vmem [#allocation9], 32
    %v1039 = vld [vmem:[%s1038] sm:$0xff]
    %v1040 = vld [vmem:[%s1038 + $0x8] sm:$0xff]
    %v1041 = vld [vmem:[%s1038 + $0x10] sm:$0xff]
    %v1042 = vld [vmem:[%s1038 + $0x18] sm:$0xff]
    %s1043 = scalar_lea.vmem [#allocation10], 1
    %v1044 = vld [vmem:[%s1043] sm:$0x1]
    %v1045 = vld [vmem:[#allocation4] sm:$0xff]
    %v1046 = vld [vmem:[#allocation4 + $0x8] sm:$0xff]
    %v1048 = vlaneseq
    %v1049 = vshrl.u32 %v1048, 7
    %v1050 = vsub.s32 0, %v1049
    %v1051 = vrot.slane %v1044, %v1050
    %v1054 = vsel %vm83, %v1045, 0
    %v1057 = vsel %vm83, %v1046, 0
    %1059 = vmatprep.subr.mxu0 0.0
    %1060 = vmatpush1.msra.mxu0 %v1030
    %1061 = vmatprep.subr.mxu0 0.0
    %1062 = vmatpush1.msra.mxu0 %v1031
    %1063 = vmatprep.subr.mxu0 0.0
    %1064 = vmatpush1.msra.mxu0 %v1032
    %1065 = vmatprep.subr.mxu0 0.0
    %1066 = vmatpush1.msra.mxu0 %v1033
    %1067 = vmatprep.subr.mxu0 0.0
    %1068 = vmatpush1.msra.mxu0 %v1034
    %1069 = vmatprep.subr.mxu0 0.0
    %1070 = vmatpush1.msra.mxu0 %v1035
    %1071 = vmatprep.subr.mxu0 0.0
    %1072 = vmatpush1.msra.mxu0 %v1036
    %1073 = vmatprep.subr.mxu0 0.0
    %1074 = vmatpush1.msra.mxu0 %v1037
    %1075 = vmatprep.subr.mxu0 0.0
    %1076 = vmatpush1.msra.mxu0 0.0
    %1077 = vmatprep.subr.mxu0 0.0
    %1078 = vmatpush1.msra.mxu0 0.0
    %1079 = vmatprep.subr.mxu0 0.0
    %1080 = vmatpush1.msra.mxu0 0.0
    %1081 = vmatprep.subr.mxu0 0.0
    %1082 = vmatpush1.msra.mxu0 0.0
    %1083 = vmatprep.subr.mxu0 0.0
    %1084 = vmatpush1.msra.mxu0 0.0
    %1085 = vmatprep.subr.mxu0 0.0
    %1086 = vmatpush1.msra.mxu0 0.0
    %1087 = vmatprep.subr.mxu0 0.0
    %1088 = vmatpush1.msra.mxu0 0.0
    %1089 = vmatprep.subr.mxu0 0.0
    %1090 = vmatpush1.msra.mxu0 0.0
    %1091 = vmatprep.subr.mxu0 0.0
    %1092 = vmatpush1.msra.mxu0 0.0
    %1093 = vmatprep.subr.mxu0 0.0
    %1094 = vmatpush1.msra.mxu0 0.0
    %1095 = vmatprep.subr.mxu0 0.0
    %1096 = vmatpush1.msra.mxu0 0.0
    %1097 = vmatprep.subr.mxu0 0.0
    %1098 = vmatpush1.msra.mxu0 0.0
    %1099 = vmatprep.subr.mxu0 0.0
    %1100 = vmatpush1.msra.mxu0 0.0
    %1101 = vmatprep.subr.mxu0 0.0
    %1102 = vmatpush1.msra.mxu0 0.0
    %1103 = vmatprep.subr.mxu0 0.0
    %1104 = vmatpush1.msra.mxu0 0.0
    %1105 = vmatprep.subr.mxu0 0.0
    %1106 = vmatpush1.msra.mxu0 0.0
    %1107 = vmatprep.subr.mxu0 0.0
    %1108 = vmatpush1.msra.mxu0 0.0
    %1109 = vmatprep.subr.mxu0 0.0
    %1110 = vmatpush1.msra.mxu0 0.0
    %1111 = vmatprep.subr.mxu0 0.0
    %1112 = vmatpush1.msra.mxu0 0.0
    %1113 = vmatprep.subr.mxu0 0.0
    %1114 = vmatpush1.msra.mxu0 0.0
    %1115 = vmatprep.subr.mxu0 0.0
    %1116 = vmatpush1.msra.mxu0 0.0
    %1117 = vmatprep.subr.mxu0 0.0
    %1118 = vmatpush1.msra.mxu0 0.0
    %1119 = vmatprep.subr.mxu0 0.0
    %1120 = vmatpush1.msra.mxu0 0.0
    %1121 = vmatprep.subr.mxu0 0.0
    %1122 = vmatpush1.msra.mxu0 0.0
    %1123 = vmatprep.mubr.f32.mxu0 0.0
    %1124 = vmatmul.mubr.f32.gmra.mrb[0].mxu0 %v1054
    %v1125 = vpop.f32.mrb[0].mxu0
    %v1126 = vadd.f32 %v1051, %v1125
    %v1127 = vpop.f32.mrb[0].mxu0
    %1128 = vmatprep.mubr.f32.mxu0 0.0
    %1129 = vmatmul.mubr.f32.gmra.mrb[0].mxu0 %v1057
    %v1130 = vpop.f32.mrb[0].mxu0
    %v1131 = vadd.f32 %v1051, %v1130
    %v1132 = vpop.f32.mrb[0].mxu0
    %1133 = vdwg.mxu0
    %1134 = vst [vmem:[#allocation3] sm:$0xff] %v1126
    %1135 = vst [vmem:[#allocation3 + $0x8] sm:$0xff] %v1131
    %s1136 = scalar_lea.vmem %s4, 2
    %v1137 = vld [vmem:[%s1136] sm:$0x3]
    %s1138 = scalar_lea.vmem %s5, 2
    %v1139 = vld [vmem:[%s1138] sm:$0x3]
    %v1140 = vld [vmem:[#allocation3 + $0xe] sm:$0x3]
    %v1142 = vsel %vm193, %v1137, 0
    %1144 = vmatprep.subr.mxu0 0.0
    %1145 = vmatpush1.msra.mxu0 %v1039
    %1146 = vmatprep.subr.mxu0 0.0
    %1147 = vmatpush1.msra.mxu0 %v1040
    %1148 = vmatprep.subr.mxu0 0.0
    %1149 = vmatpush1.msra.mxu0 %v1041
    %1150 = vmatprep.subr.mxu0 0.0
    %1151 = vmatpush1.msra.mxu0 %v1042
    %1152 = vmatprep.subr.mxu0 0.0
    %1153 = vmatpush1.msra.mxu0 0.0
    %1154 = vmatprep.subr.mxu0 0.0
    %1155 = vmatpush1.msra.mxu0 0.0
    %1156 = vmatprep.subr.mxu0 0.0
    %1157 = vmatpush1.msra.mxu0 0.0
    %1158 = vmatprep.subr.mxu0 0.0
    %1159 = vmatpush1.msra.mxu0 0.0
    %1160 = vmatprep.subr.mxu0 0.0
    %1161 = vmatpush1.msra.mxu0 0.0
    %1162 = vmatprep.subr.mxu0 0.0
    %1163 = vmatpush1.msra.mxu0 0.0
    %1164 = vmatprep.subr.mxu0 0.0
    %1165 = vmatpush1.msra.mxu0 0.0
    %1166 = vmatprep.subr.mxu0 0.0
    %1167 = vmatpush1.msra.mxu0 0.0
    %1168 = vmatprep.subr.mxu0 0.0
    %1169 = vmatpush1.msra.mxu0 0.0
    %1170 = vmatprep.subr.mxu0 0.0
    %1171 = vmatpush1.msra.mxu0 0.0
    %1172 = vmatprep.subr.mxu0 0.0
    %1173 = vmatpush1.msra.mxu0 0.0
    %1174 = vmatprep.subr.mxu0 0.0
    %1175 = vmatpush1.msra.mxu0 0.0
    %1176 = vmatprep.subr.mxu0 0.0
    %1177 = vmatpush1.msra.mxu0 0.0
    %1178 = vmatprep.subr.mxu0 0.0
    %1179 = vmatpush1.msra.mxu0 0.0
    %1180 = vmatprep.subr.mxu0 0.0
    %1181 = vmatpush1.msra.mxu0 0.0
    %1182 = vmatprep.subr.mxu0 0.0
    %1183 = vmatpush1.msra.mxu0 0.0
    %1184 = vmatprep.subr.mxu0 0.0
    %1185 = vmatpush1.msra.mxu0 0.0
    %1186 = vmatprep.subr.mxu0 0.0
    %1187 = vmatpush1.msra.mxu0 0.0
    %1188 = vmatprep.subr.mxu0 0.0
    %1189 = vmatpush1.msra.mxu0 0.0
    %1190 = vmatprep.subr.mxu0 0.0
    %1191 = vmatpush1.msra.mxu0 0.0
    %1192 = vmatprep.subr.mxu0 0.0
    %1193 = vmatpush1.msra.mxu0 0.0
    %1194 = vmatprep.subr.mxu0 0.0
    %1195 = vmatpush1.msra.mxu0 0.0
    %1196 = vmatprep.subr.mxu0 0.0
    %1197 = vmatpush1.msra.mxu0 0.0
    %1198 = vmatprep.subr.mxu0 0.0
    %1199 = vmatpush1.msra.mxu0 0.0
    %1200 = vmatprep.subr.mxu0 0.0
    %1201 = vmatpush1.msra.mxu0 0.0
    %1202 = vmatprep.subr.mxu0 0.0
    %1203 = vmatpush1.msra.mxu0 0.0
    %1204 = vmatprep.subr.mxu0 0.0
    %1205 = vmatpush1.msra.mxu0 0.0
    %1206 = vmatprep.subr.mxu0 0.0
    %1207 = vmatpush1.msra.mxu0 0.0
    %1208 = vmatprep.mubr.f32.mxu0 0.0
    %1209 = vmatmul.mubr.f32.gmra.mrb[0].mxu0 %v1142
    %v1210 = vpop.f32.mrb[0].mxu0
    %v1211 = vadd.f32 0.0, %v1210
    %v1212 = vpop.f32.mrb[0].mxu0
    %1213 = vdwg.mxu0
    %v1214 = vadd.f32 %v1140, %v1211
    %v1215 = vxor.u32 %v1214, 2147483648
    %v1216 = vmul.f32 %v1215, 1.442695
    %v1217 = vpow.pop %v1216
    %v1218 = vadd.f32 %v1217, 1.0
    %v1219 = vrcp.pop %v1218
    %v1220 = vmul.f32 1.0, %v1219
    %v1221 = vtanh.pop %v1214
    %1223 = vrot.lane.b32.xlu0 %v1139, 32
    %v1224 = vpop.permute.xlu0 %1223
    %v1226 = vmul.f32 %v1220, %v1224
    %1228 = vrot.lane.b32.xlu0 %v1221, 64
    %v1229 = vpop.permute.xlu0 %1228
    %v1231 = vmul.f32 %v1220, %v1229
    %1233 = vrot.lane.b32.xlu0 %v1231, 32
    %v1234 = vpop.permute.xlu0 %1233
    %v1236 = vadd.f32 %v1226, %v1234
    %v1237 = vtanh.pop %v1236
    %1239 = vrot.lane.b32.xlu0 %v1237, 64
    %v1240 = vpop.permute.xlu0 %1239
    %v1242 = vmul.f32 %v1220, %v1240
    %1244 = vrot.lane.b32.xlu0 %v1242, 64
    %v1245 = vpop.permute.xlu0 %1244
    %vm1247 = vcmask 517376
    %1248 = vst.msk [vmem:[#allocation2 + $0xe] sm:$0x3] %vm1247, %v1245
    %v1249 = vld [vmem:[#allocation3 + $0xc] sm:$0x3]
    %1250 = vrot.lane.b32.xlu0 %v1242, 32
    %v1251 = vpop.permute.xlu0 %1250
    %v1252 = vsel %vm193, %v1251, 0
    %1254 = vmatprep.subr.mxu0 0.0
    %1255 = vmatpush1.msra.mxu0 %v1039
    %1256 = vmatprep.subr.mxu0 0.0
    %1257 = vmatpush1.msra.mxu0 %v1040
    %1258 = vmatprep.subr.mxu0 0.0
    %1259 = vmatpush1.msra.mxu0 %v1041
    %1260 = vmatprep.subr.mxu0 0.0
    %1261 = vmatpush1.msra.mxu0 %v1042
    %1262 = vmatprep.subr.mxu0 0.0
    %1263 = vmatpush1.msra.mxu0 0.0
    %1264 = vmatprep.subr.mxu0 0.0
    %1265 = vmatpush1.msra.mxu0 0.0
    %1266 = vmatprep.subr.mxu0 0.0
    %1267 = vmatpush1.msra.mxu0 0.0
    %1268 = vmatprep.subr.mxu0 0.0
    %1269 = vmatpush1.msra.mxu0 0.0
    %1270 = vmatprep.subr.mxu0 0.0
    %1271 = vmatpush1.msra.mxu0 0.0
    %1272 = vmatprep.subr.mxu0 0.0
    %1273 = vmatpush1.msra.mxu0 0.0
    %1274 = vmatprep.subr.mxu0 0.0
    %1275 = vmatpush1.msra.mxu0 0.0
    %1276 = vmatprep.subr.mxu0 0.0
    %1277 = vmatpush1.msra.mxu0 0.0
    %1278 = vmatprep.subr.mxu0 0.0
    %1279 = vmatpush1.msra.mxu0 0.0
    %1280 = vmatprep.subr.mxu0 0.0
    %1281 = vmatpush1.msra.mxu0 0.0
    %1282 = vmatprep.subr.mxu0 0.0
    %1283 = vmatpush1.msra.mxu0 0.0
    %1284 = vmatprep.subr.mxu0 0.0
    %1285 = vmatpush1.msra.mxu0 0.0
    %1286 = vmatprep.subr.mxu0 0.0
    %1287 = vmatpush1.msra.mxu0 0.0
    %1288 = vmatprep.subr.mxu0 0.0
    %1289 = vmatpush1.msra.mxu0 0.0
    %1290 = vmatprep.subr.mxu0 0.0
    %1291 = vmatpush1.msra.mxu0 0.0
    %1292 = vmatprep.subr.mxu0 0.0
    %1293 = vmatpush1.msra.mxu0 0.0
    %1294 = vmatprep.subr.mxu0 0.0
    %1295 = vmatpush1.msra.mxu0 0.0
    %1296 = vmatprep.subr.mxu0 0.0
    %1297 = vmatpush1.msra.mxu0 0.0
    %1298 = vmatprep.subr.mxu0 0.0
    %1299 = vmatpush1.msra.mxu0 0.0
    %1300 = vmatprep.subr.mxu0 0.0
    %1301 = vmatpush1.msra.mxu0 0.0
    %1302 = vmatprep.subr.mxu0 0.0
    %1303 = vmatpush1.msra.mxu0 0.0
    %1304 = vmatprep.subr.mxu0 0.0
    %1305 = vmatpush1.msra.mxu0 0.0
    %1306 = vmatprep.subr.mxu0 0.0
    %1307 = vmatpush1.msra.mxu0 0.0
    %1308 = vmatprep.subr.mxu0 0.0
    %1309 = vmatpush1.msra.mxu0 0.0
    %1310 = vmatprep.subr.mxu0 0.0
    %1311 = vmatpush1.msra.mxu0 0.0
    %1312 = vmatprep.subr.mxu0 0.0
    %1313 = vmatpush1.msra.mxu0 0.0
    %1314 = vmatprep.subr.mxu0 0.0
    %1315 = vmatpush1.msra.mxu0 0.0
    %1316 = vmatprep.subr.mxu0 0.0
    %1317 = vmatpush1.msra.mxu0 0.0
    %1318 = vmatprep.mubr.f32.mxu0 0.0
    %1319 = vmatmul.mubr.f32.gmra.mrb[0].mxu0 %v1252
    %v1320 = vpop.f32.mrb[0].mxu0
    %v1321 = vadd.f32 0.0, %v1320
    %v1322 = vpop.f32.mrb[0].mxu0
    %1323 = vdwg.mxu0
    %v1324 = vadd.f32 %v1249, %v1321
    %v1325 = vxor.u32 %v1324, 2147483648
    %v1326 = vmul.f32 %v1325, 1.442695
    %v1327 = vpow.pop %v1326
    %v1328 = vadd.f32 %v1327, 1.0
    %v1329 = vrcp.pop %v1328
    %v1330 = vmul.f32 1.0, %v1329
    %v1331 = vtanh.pop %v1324
    %v1332 = vmul.f32 %v1330, %v1236
    %1334 = vrot.lane.b32.xlu0 %v1331, 64
    %v1335 = vpop.permute.xlu0 %1334
    %v1337 = vmul.f32 %v1330, %v1335
    %1339 = vrot.lane.b32.xlu0 %v1337, 32
    %v1340 = vpop.permute.xlu0 %1339
    %v1342 = vadd.f32 %v1332, %v1340
    %v1343 = vtanh.pop %v1342
    %1345 = vrot.lane.b32.xlu0 %v1343, 64
    %v1346 = vpop.permute.xlu0 %1345
    %v1348 = vmul.f32 %v1330, %v1346
    %1350 = vrot.lane.b32.xlu0 %v1348, 64
    %v1351 = vpop.permute.xlu0 %1350
    %1353 = vst.msk [vmem:[#allocation2 + $0xc] sm:$0x3] %vm1247, %v1351
    %v1354 = vld [vmem:[#allocation3 + $0xa] sm:$0x3]
    %1355 = vrot.lane.b32.xlu0 %v1348, 32
    %v1356 = vpop.permute.xlu0 %1355
    %v1357 = vsel %vm193, %v1356, 0
    %1359 = vmatprep.subr.mxu0 0.0
    %1360 = vmatpush1.msra.mxu0 %v1039
    %1361 = vmatprep.subr.mxu0 0.0
    %1362 = vmatpush1.msra.mxu0 %v1040
    %1363 = vmatprep.subr.mxu0 0.0
    %1364 = vmatpush1.msra.mxu0 %v1041
    %1365 = vmatprep.subr.mxu0 0.0
    %1366 = vmatpush1.msra.mxu0 %v1042
    %1367 = vmatprep.subr.mxu0 0.0
    %1368 = vmatpush1.msra.mxu0 0.0
    %1369 = vmatprep.subr.mxu0 0.0
    %1370 = vmatpush1.msra.mxu0 0.0
    %1371 = vmatprep.subr.mxu0 0.0
    %1372 = vmatpush1.msra.mxu0 0.0
    %1373 = vmatprep.subr.mxu0 0.0
    %1374 = vmatpush1.msra.mxu0 0.0
    %1375 = vmatprep.subr.mxu0 0.0
    %1376 = vmatpush1.msra.mxu0 0.0
    %1377 = vmatprep.subr.mxu0 0.0
    %1378 = vmatpush1.msra.mxu0 0.0
    %1379 = vmatprep.subr.mxu0 0.0
    %1380 = vmatpush1.msra.mxu0 0.0
    %1381 = vmatprep.subr.mxu0 0.0
    %1382 = vmatpush1.msra.mxu0 0.0
    %1383 = vmatprep.subr.mxu0 0.0
    %1384 = vmatpush1.msra.mxu0 0.0
    %1385 = vmatprep.subr.mxu0 0.0
    %1386 = vmatpush1.msra.mxu0 0.0
    %1387 = vmatprep.subr.mxu0 0.0
    %1388 = vmatpush1.msra.mxu0 0.0
    %1389 = vmatprep.subr.mxu0 0.0
    %1390 = vmatpush1.msra.mxu0 0.0
    %1391 = vmatprep.subr.mxu0 0.0
    %1392 = vmatpush1.msra.mxu0 0.0
    %1393 = vmatprep.subr.mxu0 0.0
    %1394 = vmatpush1.msra.mxu0 0.0
    %1395 = vmatprep.subr.mxu0 0.0
    %1396 = vmatpush1.msra.mxu0 0.0
    %1397 = vmatprep.subr.mxu0 0.0
    %1398 = vmatpush1.msra.mxu0 0.0
    %1399 = vmatprep.subr.mxu0 0.0
    %1400 = vmatpush1.msra.mxu0 0.0
    %1401 = vmatprep.subr.mxu0 0.0
    %1402 = vmatpush1.msra.mxu0 0.0
    %1403 = vmatprep.subr.mxu0 0.0
    %1404 = vmatpush1.msra.mxu0 0.0
    %1405 = vmatprep.subr.mxu0 0.0
    %1406 = vmatpush1.msra.mxu0 0.0
    %1407 = vmatprep.subr.mxu0 0.0
    %1408 = vmatpush1.msra.mxu0 0.0
    %1409 = vmatprep.subr.mxu0 0.0
    %1410 = vmatpush1.msra.mxu0 0.0
    %1411 = vmatprep.subr.mxu0 0.0
    %1412 = vmatpush1.msra.mxu0 0.0
    %1413 = vmatprep.subr.mxu0 0.0
    %1414 = vmatpush1.msra.mxu0 0.0
    %1415 = vmatprep.subr.mxu0 0.0
    %1416 = vmatpush1.msra.mxu0 0.0
    %1417 = vmatprep.subr.mxu0 0.0
    %1418 = vmatpush1.msra.mxu0 0.0
    %1419 = vmatprep.subr.mxu0 0.0
    %1420 = vmatpush1.msra.mxu0 0.0
    %1421 = vmatprep.subr.mxu0 0.0
    %1422 = vmatpush1.msra.mxu0 0.0
    %1423 = vmatprep.mubr.f32.mxu0 0.0
    %1424 = vmatmul.mubr.f32.gmra.mrb[0].mxu0 %v1357
    %v1425 = vpop.f32.mrb[0].mxu0
    %v1426 = vadd.f32 0.0, %v1425
    %v1427 = vpop.f32.mrb[0].mxu0
    %1428 = vdwg.mxu0
    %v1429 = vadd.f32 %v1354, %v1426
    %v1430 = vxor.u32 %v1429, 2147483648
    %v1431 = vmul.f32 %v1430, 1.442695
    %v1432 = vpow.pop %v1431
    %v1433 = vadd.f32 %v1432, 1.0
    %v1434 = vrcp.pop %v1433
    %v1435 = vmul.f32 1.0, %v1434
    %v1436 = vtanh.pop %v1429
    %v1437 = vmul.f32 %v1435, %v1342
    %1439 = vrot.lane.b32.xlu0 %v1436, 64
    %v1440 = vpop.permute.xlu0 %1439
    %v1442 = vmul.f32 %v1435, %v1440
    %1444 = vrot.lane.b32.xlu0 %v1442, 32
    %v1445 = vpop.permute.xlu0 %1444
    %v1447 = vadd.f32 %v1437, %v1445
    %v1448 = vtanh.pop %v1447
    %1450 = vrot.lane.b32.xlu0 %v1448, 64
    %v1451 = vpop.permute.xlu0 %1450
    %v1453 = vmul.f32 %v1435, %v1451
    %1455 = vrot.lane.b32.xlu0 %v1453, 64
    %v1456 = vpop.permute.xlu0 %1455
    %1458 = vst.msk [vmem:[#allocation2 + $0xa] sm:$0x3] %vm1247, %v1456
    %v1459 = vld [vmem:[#allocation3 + $0x8] sm:$0x3]
    %1460 = vrot.lane.b32.xlu0 %v1453, 32
    %v1461 = vpop.permute.xlu0 %1460
    %v1462 = vsel %vm193, %v1461, 0
    %1464 = vmatprep.subr.mxu0 0.0
    %1465 = vmatpush1.msra.mxu0 %v1039
    %1466 = vmatprep.subr.mxu0 0.0
    %1467 = vmatpush1.msra.mxu0 %v1040
    %1468 = vmatprep.subr.mxu0 0.0
    %1469 = vmatpush1.msra.mxu0 %v1041
    %1470 = vmatprep.subr.mxu0 0.0
    %1471 = vmatpush1.msra.mxu0 %v1042
    %1472 = vmatprep.subr.mxu0 0.0
    %1473 = vmatpush1.msra.mxu0 0.0
    %1474 = vmatprep.subr.mxu0 0.0
    %1475 = vmatpush1.msra.mxu0 0.0
    %1476 = vmatprep.subr.mxu0 0.0
    %1477 = vmatpush1.msra.mxu0 0.0
    %1478 = vmatprep.subr.mxu0 0.0
    %1479 = vmatpush1.msra.mxu0 0.0
    %1480 = vmatprep.subr.mxu0 0.0
    %1481 = vmatpush1.msra.mxu0 0.0
    %1482 = vmatprep.subr.mxu0 0.0
    %1483 = vmatpush1.msra.mxu0 0.0
    %1484 = vmatprep.subr.mxu0 0.0
    %1485 = vmatpush1.msra.mxu0 0.0
    %1486 = vmatprep.subr.mxu0 0.0
    %1487 = vmatpush1.msra.mxu0 0.0
    %1488 = vmatprep.subr.mxu0 0.0
    %1489 = vmatpush1.msra.mxu0 0.0
    %1490 = vmatprep.subr.mxu0 0.0
    %1491 = vmatpush1.msra.mxu0 0.0
    %1492 = vmatprep.subr.mxu0 0.0
    %1493 = vmatpush1.msra.mxu0 0.0
    %1494 = vmatprep.subr.mxu0 0.0
    %1495 = vmatpush1.msra.mxu0 0.0
    %1496 = vmatprep.subr.mxu0 0.0
    %1497 = vmatpush1.msra.mxu0 0.0
    %1498 = vmatprep.subr.mxu0 0.0
    %1499 = vmatpush1.msra.mxu0 0.0
    %1500 = vmatprep.subr.mxu0 0.0
    %1501 = vmatpush1.msra.mxu0 0.0
    %1502 = vmatprep.subr.mxu0 0.0
    %1503 = vmatpush1.msra.mxu0 0.0
    %1504 = vmatprep.subr.mxu0 0.0
    %1505 = vmatpush1.msra.mxu0 0.0
    %1506 = vmatprep.subr.mxu0 0.0
    %1507 = vmatpush1.msra.mxu0 0.0
    %1508 = vmatprep.subr.mxu0 0.0
    %1509 = vmatpush1.msra.mxu0 0.0
    %1510 = vmatprep.subr.mxu0 0.0
    %1511 = vmatpush1.msra.mxu0 0.0
    %1512 = vmatprep.subr.mxu0 0.0
    %1513 = vmatpush1.msra.mxu0 0.0
    %1514 = vmatprep.subr.mxu0 0.0
    %1515 = vmatpush1.msra.mxu0 0.0
    %1516 = vmatprep.subr.mxu0 0.0
    %1517 = vmatpush1.msra.mxu0 0.0
    %1518 = vmatprep.subr.mxu0 0.0
    %1519 = vmatpush1.msra.mxu0 0.0
    %1520 = vmatprep.subr.mxu0 0.0
    %1521 = vmatpush1.msra.mxu0 0.0
    %1522 = vmatprep.subr.mxu0 0.0
    %1523 = vmatpush1.msra.mxu0 0.0
    %1524 = vmatprep.subr.mxu0 0.0
    %1525 = vmatpush1.msra.mxu0 0.0
    %1526 = vmatprep.subr.mxu0 0.0
    %1527 = vmatpush1.msra.mxu0 0.0
    %1528 = vmatprep.mubr.f32.mxu0 0.0
    %1529 = vmatmul.mubr.f32.gmra.mrb[0].mxu0 %v1462
    %v1530 = vpop.f32.mrb[0].mxu0
    %v1531 = vadd.f32 0.0, %v1530
    %v1532 = vpop.f32.mrb[0].mxu0
    %1533 = vdwg.mxu0
    %v1534 = vadd.f32 %v1459, %v1531
    %v1535 = vxor.u32 %v1534, 2147483648
    %v1536 = vmul.f32 %v1535, 1.442695
    %v1537 = vpow.pop %v1536
    %v1538 = vadd.f32 %v1537, 1.0
    %v1539 = vrcp.pop %v1538
    %v1540 = vmul.f32 1.0, %v1539
    %v1541 = vtanh.pop %v1534
    %v1542 = vmul.f32 %v1540, %v1447
    %1544 = vrot.lane.b32.xlu0 %v1541, 64
    %v1545 = vpop.permute.xlu0 %1544
    %v1547 = vmul.f32 %v1540, %v1545
    %1549 = vrot.lane.b32.xlu0 %v1547, 32
    %v1550 = vpop.permute.xlu0 %1549
    %v1552 = vadd.f32 %v1542, %v1550
    %v1553 = vtanh.pop %v1552
    %1555 = vrot.lane.b32.xlu0 %v1553, 64
    %v1556 = vpop.permute.xlu0 %1555
    %v1558 = vmul.f32 %v1540, %v1556
    %1560 = vrot.lane.b32.xlu0 %v1558, 64
    %v1561 = vpop.permute.xlu0 %1560
    %1563 = vst.msk [vmem:[#allocation2 + $0x8] sm:$0x3] %vm1247, %v1561
    %v1564 = vld [vmem:[#allocation3 + $0x6] sm:$0x3]
    %1565 = vrot.lane.b32.xlu0 %v1558, 32
    %v1566 = vpop.permute.xlu0 %1565
    %v1567 = vsel %vm193, %v1566, 0
    %1569 = vmatprep.subr.mxu0 0.0
    %1570 = vmatpush1.msra.mxu0 %v1039
    %1571 = vmatprep.subr.mxu0 0.0
    %1572 = vmatpush1.msra.mxu0 %v1040
    %1573 = vmatprep.subr.mxu0 0.0
    %1574 = vmatpush1.msra.mxu0 %v1041
    %1575 = vmatprep.subr.mxu0 0.0
    %1576 = vmatpush1.msra.mxu0 %v1042
    %1577 = vmatprep.subr.mxu0 0.0
    %1578 = vmatpush1.msra.mxu0 0.0
    %1579 = vmatprep.subr.mxu0 0.0
    %1580 = vmatpush1.msra.mxu0 0.0
    %1581 = vmatprep.subr.mxu0 0.0
    %1582 = vmatpush1.msra.mxu0 0.0
    %1583 = vmatprep.subr.mxu0 0.0
    %1584 = vmatpush1.msra.mxu0 0.0
    %1585 = vmatprep.subr.mxu0 0.0
    %1586 = vmatpush1.msra.mxu0 0.0
    %1587 = vmatprep.subr.mxu0 0.0
    %1588 = vmatpush1.msra.mxu0 0.0
    %1589 = vmatprep.subr.mxu0 0.0
    %1590 = vmatpush1.msra.mxu0 0.0
    %1591 = vmatprep.subr.mxu0 0.0
    %1592 = vmatpush1.msra.mxu0 0.0
    %1593 = vmatprep.subr.mxu0 0.0
    %1594 = vmatpush1.msra.mxu0 0.0
    %1595 = vmatprep.subr.mxu0 0.0
    %1596 = vmatpush1.msra.mxu0 0.0
    %1597 = vmatprep.subr.mxu0 0.0
    %1598 = vmatpush1.msra.mxu0 0.0
    %1599 = vmatprep.subr.mxu0 0.0
    %1600 = vmatpush1.msra.mxu0 0.0
    %1601 = vmatprep.subr.mxu0 0.0
    %1602 = vmatpush1.msra.mxu0 0.0
    %1603 = vmatprep.subr.mxu0 0.0
    %1604 = vmatpush1.msra.mxu0 0.0
    %1605 = vmatprep.subr.mxu0 0.0
    %1606 = vmatpush1.msra.mxu0 0.0
    %1607 = vmatprep.subr.mxu0 0.0
    %1608 = vmatpush1.msra.mxu0 0.0
    %1609 = vmatprep.subr.mxu0 0.0
    %1610 = vmatpush1.msra.mxu0 0.0
    %1611 = vmatprep.subr.mxu0 0.0
    %1612 = vmatpush1.msra.mxu0 0.0
    %1613 = vmatprep.subr.mxu0 0.0
    %1614 = vmatpush1.msra.mxu0 0.0
    %1615 = vmatprep.subr.mxu0 0.0
    %1616 = vmatpush1.msra.mxu0 0.0
    %1617 = vmatprep.subr.mxu0 0.0
    %1618 = vmatpush1.msra.mxu0 0.0
    %1619 = vmatprep.subr.mxu0 0.0
    %1620 = vmatpush1.msra.mxu0 0.0
    %1621 = vmatprep.subr.mxu0 0.0
    %1622 = vmatpush1.msra.mxu0 0.0
    %1623 = vmatprep.subr.mxu0 0.0
    %1624 = vmatpush1.msra.mxu0 0.0
    %1625 = vmatprep.subr.mxu0 0.0
    %1626 = vmatpush1.msra.mxu0 0.0
    %1627 = vmatprep.subr.mxu0 0.0
    %1628 = vmatpush1.msra.mxu0 0.0
    %1629 = vmatprep.subr.mxu0 0.0
    %1630 = vmatpush1.msra.mxu0 0.0
    %1631 = vmatprep.subr.mxu0 0.0
    %1632 = vmatpush1.msra.mxu0 0.0
    %1633 = vmatprep.mubr.f32.mxu0 0.0
    %1634 = vmatmul.mubr.f32.gmra.mrb[0].mxu0 %v1567
    %v1635 = vpop.f32.mrb[0].mxu0
    %v1636 = vadd.f32 0.0, %v1635
    %v1637 = vpop.f32.mrb[0].mxu0
    %1638 = vdwg.mxu0
    %v1639 = vadd.f32 %v1564, %v1636
    %v1640 = vxor.u32 %v1639, 2147483648
    %v1641 = vmul.f32 %v1640, 1.442695
    %v1642 = vpow.pop %v1641
    %v1643 = vadd.f32 %v1642, 1.0
    %v1644 = vrcp.pop %v1643
    %v1645 = vmul.f32 1.0, %v1644
    %v1646 = vtanh.pop %v1639
    %v1647 = vmul.f32 %v1645, %v1552
    %1649 = vrot.lane.b32.xlu0 %v1646, 64
    %v1650 = vpop.permute.xlu0 %1649
    %v1652 = vmul.f32 %v1645, %v1650
    %1654 = vrot.lane.b32.xlu0 %v1652, 32
    %v1655 = vpop.permute.xlu0 %1654
    %v1657 = vadd.f32 %v1647, %v1655
    %v1658 = vtanh.pop %v1657
    %1660 = vrot.lane.b32.xlu0 %v1658, 64
    %v1661 = vpop.permute.xlu0 %1660
    %v1663 = vmul.f32 %v1645, %v1661
    %1665 = vrot.lane.b32.xlu0 %v1663, 64
    %v1666 = vpop.permute.xlu0 %1665
    %1668 = vst.msk [vmem:[#allocation2 + $0x6] sm:$0x3] %vm1247, %v1666
    %v1669 = vld [vmem:[#allocation3 + $0x4] sm:$0x3]
    %1670 = vrot.lane.b32.xlu0 %v1663, 32
    %v1671 = vpop.permute.xlu0 %1670
    %v1672 = vsel %vm193, %v1671, 0
    %1674 = vmatprep.subr.mxu0 0.0
    %1675 = vmatpush1.msra.mxu0 %v1039
    %1676 = vmatprep.subr.mxu0 0.0
    %1677 = vmatpush1.msra.mxu0 %v1040
    %1678 = vmatprep.subr.mxu0 0.0
    %1679 = vmatpush1.msra.mxu0 %v1041
    %1680 = vmatprep.subr.mxu0 0.0
    %1681 = vmatpush1.msra.mxu0 %v1042
    %1682 = vmatprep.subr.mxu0 0.0
    %1683 = vmatpush1.msra.mxu0 0.0
    %1684 = vmatprep.subr.mxu0 0.0
    %1685 = vmatpush1.msra.mxu0 0.0
    %1686 = vmatprep.subr.mxu0 0.0
    %1687 = vmatpush1.msra.mxu0 0.0
    %1688 = vmatprep.subr.mxu0 0.0
    %1689 = vmatpush1.msra.mxu0 0.0
    %1690 = vmatprep.subr.mxu0 0.0
    %1691 = vmatpush1.msra.mxu0 0.0
    %1692 = vmatprep.subr.mxu0 0.0
    %1693 = vmatpush1.msra.mxu0 0.0
    %1694 = vmatprep.subr.mxu0 0.0
    %1695 = vmatpush1.msra.mxu0 0.0
    %1696 = vmatprep.subr.mxu0 0.0
    %1697 = vmatpush1.msra.mxu0 0.0
    %1698 = vmatprep.subr.mxu0 0.0
    %1699 = vmatpush1.msra.mxu0 0.0
    %1700 = vmatprep.subr.mxu0 0.0
    %1701 = vmatpush1.msra.mxu0 0.0
    %1702 = vmatprep.subr.mxu0 0.0
    %1703 = vmatpush1.msra.mxu0 0.0
    %1704 = vmatprep.subr.mxu0 0.0
    %1705 = vmatpush1.msra.mxu0 0.0
    %1706 = vmatprep.subr.mxu0 0.0
    %1707 = vmatpush1.msra.mxu0 0.0
    %1708 = vmatprep.subr.mxu0 0.0
    %1709 = vmatpush1.msra.mxu0 0.0
    %1710 = vmatprep.subr.mxu0 0.0
    %1711 = vmatpush1.msra.mxu0 0.0
    %1712 = vmatprep.subr.mxu0 0.0
    %1713 = vmatpush1.msra.mxu0 0.0
    %1714 = vmatprep.subr.mxu0 0.0
    %1715 = vmatpush1.msra.mxu0 0.0
    %1716 = vmatprep.subr.mxu0 0.0
    %1717 = vmatpush1.msra.mxu0 0.0
    %1718 = vmatprep.subr.mxu0 0.0
    %1719 = vmatpush1.msra.mxu0 0.0
    %1720 = vmatprep.subr.mxu0 0.0
    %1721 = vmatpush1.msra.mxu0 0.0
    %1722 = vmatprep.subr.mxu0 0.0
    %1723 = vmatpush1.msra.mxu0 0.0
    %1724 = vmatprep.subr.mxu0 0.0
    %1725 = vmatpush1.msra.mxu0 0.0
    %1726 = vmatprep.subr.mxu0 0.0
    %1727 = vmatpush1.msra.mxu0 0.0
    %1728 = vmatprep.subr.mxu0 0.0
    %1729 = vmatpush1.msra.mxu0 0.0
    %1730 = vmatprep.subr.mxu0 0.0
    %1731 = vmatpush1.msra.mxu0 0.0
    %1732 = vmatprep.subr.mxu0 0.0
    %1733 = vmatpush1.msra.mxu0 0.0
    %1734 = vmatprep.subr.mxu0 0.0
    %1735 = vmatpush1.msra.mxu0 0.0
    %1736 = vmatprep.subr.mxu0 0.0
    %1737 = vmatpush1.msra.mxu0 0.0
    %1738 = vmatprep.mubr.f32.mxu0 0.0
    %1739 = vmatmul.mubr.f32.gmra.mrb[0].mxu0 %v1672
    %v1740 = vpop.f32.mrb[0].mxu0
    %v1741 = vadd.f32 0.0, %v1740
    %v1742 = vpop.f32.mrb[0].mxu0
    %1743 = vdwg.mxu0
    %v1744 = vadd.f32 %v1669, %v1741
    %v1745 = vxor.u32 %v1744, 2147483648
    %v1746 = vmul.f32 %v1745, 1.442695
    %v1747 = vpow.pop %v1746
    %v1748 = vadd.f32 %v1747, 1.0
    %v1749 = vrcp.pop %v1748
    %v1750 = vmul.f32 1.0, %v1749
    %v1751 = vtanh.pop %v1744
    %v1752 = vmul.f32 %v1750, %v1657
    %1754 = vrot.lane.b32.xlu0 %v1751, 64
    %v1755 = vpop.permute.xlu0 %1754
    %v1757 = vmul.f32 %v1750, %v1755
    %1759 = vrot.lane.b32.xlu0 %v1757, 32
    %v1760 = vpop.permute.xlu0 %1759
    %v1762 = vadd.f32 %v1752, %v1760
    %v1763 = vtanh.pop %v1762
    %1765 = vrot.lane.b32.xlu0 %v1763, 64
    %v1766 = vpop.permute.xlu0 %1765
    %v1768 = vmul.f32 %v1750, %v1766
    %1770 = vrot.lane.b32.xlu0 %v1768, 64
    %v1771 = vpop.permute.xlu0 %1770
    %1773 = vst.msk [vmem:[#allocation2 + $0x4] sm:$0x3] %vm1247, %v1771
    %v1774 = vld [vmem:[#allocation3 + $0x2] sm:$0x3]
    %1775 = vrot.lane.b32.xlu0 %v1768, 32
    %v1776 = vpop.permute.xlu0 %1775
    %v1777 = vsel %vm193, %v1776, 0
    %1779 = vmatprep.subr.mxu0 0.0
    %1780 = vmatpush1.msra.mxu0 %v1039
    %1781 = vmatprep.subr.mxu0 0.0
    %1782 = vmatpush1.msra.mxu0 %v1040
    %1783 = vmatprep.subr.mxu0 0.0
    %1784 = vmatpush1.msra.mxu0 %v1041
    %1785 = vmatprep.subr.mxu0 0.0
    %1786 = vmatpush1.msra.mxu0 %v1042
    %1787 = vmatprep.subr.mxu0 0.0
    %1788 = vmatpush1.msra.mxu0 0.0
    %1789 = vmatprep.subr.mxu0 0.0
    %1790 = vmatpush1.msra.mxu0 0.0
    %1791 = vmatprep.subr.mxu0 0.0
    %1792 = vmatpush1.msra.mxu0 0.0
    %1793 = vmatprep.subr.mxu0 0.0
    %1794 = vmatpush1.msra.mxu0 0.0
    %1795 = vmatprep.subr.mxu0 0.0
    %1796 = vmatpush1.msra.mxu0 0.0
    %1797 = vmatprep.subr.mxu0 0.0
    %1798 = vmatpush1.msra.mxu0 0.0
    %1799 = vmatprep.subr.mxu0 0.0
    %1800 = vmatpush1.msra.mxu0 0.0
    %1801 = vmatprep.subr.mxu0 0.0
    %1802 = vmatpush1.msra.mxu0 0.0
    %1803 = vmatprep.subr.mxu0 0.0
    %1804 = vmatpush1.msra.mxu0 0.0
    %1805 = vmatprep.subr.mxu0 0.0
    %1806 = vmatpush1.msra.mxu0 0.0
    %1807 = vmatprep.subr.mxu0 0.0
    %1808 = vmatpush1.msra.mxu0 0.0
    %1809 = vmatprep.subr.mxu0 0.0
    %1810 = vmatpush1.msra.mxu0 0.0
    %1811 = vmatprep.subr.mxu0 0.0
    %1812 = vmatpush1.msra.mxu0 0.0
    %1813 = vmatprep.subr.mxu0 0.0
    %1814 = vmatpush1.msra.mxu0 0.0
    %1815 = vmatprep.subr.mxu0 0.0
    %1816 = vmatpush1.msra.mxu0 0.0
    %1817 = vmatprep.subr.mxu0 0.0
    %1818 = vmatpush1.msra.mxu0 0.0
    %1819 = vmatprep.subr.mxu0 0.0
    %1820 = vmatpush1.msra.mxu0 0.0
    %1821 = vmatprep.subr.mxu0 0.0
    %1822 = vmatpush1.msra.mxu0 0.0
    %1823 = vmatprep.subr.mxu0 0.0
    %1824 = vmatpush1.msra.mxu0 0.0
    %1825 = vmatprep.subr.mxu0 0.0
    %1826 = vmatpush1.msra.mxu0 0.0
    %1827 = vmatprep.subr.mxu0 0.0
    %1828 = vmatpush1.msra.mxu0 0.0
    %1829 = vmatprep.subr.mxu0 0.0
    %1830 = vmatpush1.msra.mxu0 0.0
    %1831 = vmatprep.subr.mxu0 0.0
    %1832 = vmatpush1.msra.mxu0 0.0
    %1833 = vmatprep.subr.mxu0 0.0
    %1834 = vmatpush1.msra.mxu0 0.0
    %1835 = vmatprep.subr.mxu0 0.0
    %1836 = vmatpush1.msra.mxu0 0.0
    %1837 = vmatprep.subr.mxu0 0.0
    %1838 = vmatpush1.msra.mxu0 0.0
    %1839 = vmatprep.subr.mxu0 0.0
    %1840 = vmatpush1.msra.mxu0 0.0
    %1841 = vmatprep.subr.mxu0 0.0
    %1842 = vmatpush1.msra.mxu0 0.0
    %1843 = vmatprep.mubr.f32.mxu0 0.0
    %1844 = vmatmul.mubr.f32.gmra.mrb[0].mxu0 %v1777
    %v1845 = vpop.f32.mrb[0].mxu0
    %v1846 = vadd.f32 0.0, %v1845
    %v1847 = vpop.f32.mrb[0].mxu0
    %1848 = vdwg.mxu0
    %v1849 = vadd.f32 %v1774, %v1846
    %v1850 = vxor.u32 %v1849, 2147483648
    %v1851 = vmul.f32 %v1850, 1.442695
    %v1852 = vpow.pop %v1851
    %v1853 = vadd.f32 %v1852, 1.0
    %v1854 = vrcp.pop %v1853
    %v1855 = vmul.f32 1.0, %v1854
    %v1856 = vtanh.pop %v1849
    %v1857 = vmul.f32 %v1855, %v1762
    %1859 = vrot.lane.b32.xlu0 %v1856, 64
    %v1860 = vpop.permute.xlu0 %1859
    %v1862 = vmul.f32 %v1855, %v1860
    %1864 = vrot.lane.b32.xlu0 %v1862, 32
    %v1865 = vpop.permute.xlu0 %1864
    %v1867 = vadd.f32 %v1857, %v1865
    %v1868 = vtanh.pop %v1867
    %1870 = vrot.lane.b32.xlu0 %v1868, 64
    %v1871 = vpop.permute.xlu0 %1870
    %v1873 = vmul.f32 %v1855, %v1871
    %1875 = vrot.lane.b32.xlu0 %v1873, 64
    %v1876 = vpop.permute.xlu0 %1875
    %1878 = vst.msk [vmem:[#allocation2 + $0x2] sm:$0x3] %vm1247, %v1876
    %v1879 = vld [vmem:[#allocation3] sm:$0x3]
    %1880 = vrot.lane.b32.xlu0 %v1873, 32
    %v1881 = vpop.permute.xlu0 %1880
    %v1882 = vsel %vm193, %v1881, 0
    %1884 = vmatprep.subr.mxu0 0.0
    %1885 = vmatpush1.msra.mxu0 %v1039
    %1886 = vmatprep.subr.mxu0 0.0
    %1887 = vmatpush1.msra.mxu0 %v1040
    %1888 = vmatprep.subr.mxu0 0.0
    %1889 = vmatpush1.msra.mxu0 %v1041
    %1890 = vmatprep.subr.mxu0 0.0
    %1891 = vmatpush1.msra.mxu0 %v1042
    %1892 = vmatprep.subr.mxu0 0.0
    %1893 = vmatpush1.msra.mxu0 0.0
    %1894 = vmatprep.subr.mxu0 0.0
    %1895 = vmatpush1.msra.mxu0 0.0
    %1896 = vmatprep.subr.mxu0 0.0
    %1897 = vmatpush1.msra.mxu0 0.0
    %1898 = vmatprep.subr.mxu0 0.0
    %1899 = vmatpush1.msra.mxu0 0.0
    %1900 = vmatprep.subr.mxu0 0.0
    %1901 = vmatpush1.msra.mxu0 0.0
    %1902 = vmatprep.subr.mxu0 0.0
    %1903 = vmatpush1.msra.mxu0 0.0
    %1904 = vmatprep.subr.mxu0 0.0
    %1905 = vmatpush1.msra.mxu0 0.0
    %1906 = vmatprep.subr.mxu0 0.0
    %1907 = vmatpush1.msra.mxu0 0.0
    %1908 = vmatprep.subr.mxu0 0.0
    %1909 = vmatpush1.msra.mxu0 0.0
    %1910 = vmatprep.subr.mxu0 0.0
    %1911 = vmatpush1.msra.mxu0 0.0
    %1912 = vmatprep.subr.mxu0 0.0
    %1913 = vmatpush1.msra.mxu0 0.0
    %1914 = vmatprep.subr.mxu0 0.0
    %1915 = vmatpush1.msra.mxu0 0.0
    %1916 = vmatprep.subr.mxu0 0.0
    %1917 = vmatpush1.msra.mxu0 0.0
    %1918 = vmatprep.subr.mxu0 0.0
    %1919 = vmatpush1.msra.mxu0 0.0
    %1920 = vmatprep.subr.mxu0 0.0
    %1921 = vmatpush1.msra.mxu0 0.0
    %1922 = vmatprep.subr.mxu0 0.0
    %1923 = vmatpush1.msra.mxu0 0.0
    %1924 = vmatprep.subr.mxu0 0.0
    %1925 = vmatpush1.msra.mxu0 0.0
    %1926 = vmatprep.subr.mxu0 0.0
    %1927 = vmatpush1.msra.mxu0 0.0
    %1928 = vmatprep.subr.mxu0 0.0
    %1929 = vmatpush1.msra.mxu0 0.0
    %1930 = vmatprep.subr.mxu0 0.0
    %1931 = vmatpush1.msra.mxu0 0.0
    %1932 = vmatprep.subr.mxu0 0.0
    %1933 = vmatpush1.msra.mxu0 0.0
    %1934 = vmatprep.subr.mxu0 0.0
    %1935 = vmatpush1.msra.mxu0 0.0
    %1936 = vmatprep.subr.mxu0 0.0
    %1937 = vmatpush1.msra.mxu0 0.0
    %1938 = vmatprep.subr.mxu0 0.0
    %1939 = vmatpush1.msra.mxu0 0.0
    %1940 = vmatprep.subr.mxu0 0.0
    %1941 = vmatpush1.msra.mxu0 0.0
    %1942 = vmatprep.subr.mxu0 0.0
    %1943 = vmatpush1.msra.mxu0 0.0
    %1944 = vmatprep.subr.mxu0 0.0
    %1945 = vmatpush1.msra.mxu0 0.0
    %1946 = vmatprep.subr.mxu0 0.0
    %1947 = vmatpush1.msra.mxu0 0.0
    %1948 = vmatprep.mubr.f32.mxu0 0.0
    %1949 = vmatmul.mubr.f32.gmra.mrb[0].mxu0 %v1882
    %v1950 = vpop.f32.mrb[0].mxu0
    %v1951 = vadd.f32 0.0, %v1950
    %v1952 = vpop.f32.mrb[0].mxu0
    %1953 = vdwg.mxu0
    %v1954 = vadd.f32 %v1879, %v1951
    %v1955 = vxor.u32 %v1954, 2147483648
    %v1956 = vmul.f32 %v1955, 1.442695
    %v1957 = vpow.pop %v1956
    %v1958 = vadd.f32 %v1957, 1.0
    %v1959 = vrcp.pop %v1958
    %v1960 = vmul.f32 1.0, %v1959
    %v1961 = vtanh.pop %v1954
    %v1962 = vmul.f32 %v1960, %v1867
    %1964 = vrot.lane.b32.xlu0 %v1961, 64
    %v1965 = vpop.permute.xlu0 %1964
    %v1967 = vmul.f32 %v1960, %v1965
    %1969 = vrot.lane.b32.xlu0 %v1967, 32
    %v1970 = vpop.permute.xlu0 %1969
    %v1972 = vadd.f32 %v1962, %v1970
    %v1973 = vtanh.pop %v1972
    %1975 = vrot.lane.b32.xlu0 %v1973, 64
    %v1976 = vpop.permute.xlu0 %1975
    %v1978 = vmul.f32 %v1960, %v1976
    %1980 = vrot.lane.b32.xlu0 %v1978, 64
    %v1981 = vpop.permute.xlu0 %1980
    %1983 = vst.msk [vmem:[#allocation2] sm:$0x3] %vm1247, %v1981
    %1984 = vrot.lane.b32.xlu0 %v1978, 32
    %v1985 = vpop.permute.xlu0 %1984
    %s1987 = scalar_lea.vmem [#allocation13], 2
    %1988 = vst.msk [vmem:[%s1987] sm:$0x3] %vm300, %v1985
    %1990 = vrot.lane.b32.xlu0 %v1972, 96
    %v1991 = vpop.permute.xlu0 %1990
    %s1993 = scalar_lea.vmem [#allocation15], 2
    %1994 = vst.msk [vmem:[%s1993] sm:$0x3] %vm300, %v1991
    %s1995 = scalar_lea.vmem [#allocation7], 128
    %v1996 = vld [vmem:[%s1995] sm:$0xff]
    %v1997 = vld [vmem:[%s1995 + $0x8] sm:$0xff]
    %v1998 = vld [vmem:[%s1995 + $0x10] sm:$0xff]
    %v1999 = vld [vmem:[%s1995 + $0x18] sm:$0xff]
    %v2000 = vld [vmem:[%s1995 + $0x20] sm:$0xff]
    %v2001 = vld [vmem:[%s1995 + $0x28] sm:$0xff]
    %v2002 = vld [vmem:[%s1995 + $0x30] sm:$0xff]
    %v2003 = vld [vmem:[%s1995 + $0x38] sm:$0xff]
    %s2004 = scalar_lea.vmem [#allocation9], 64
    %v2005 = vld [vmem:[%s2004] sm:$0xff]
    %v2006 = vld [vmem:[%s2004 + $0x8] sm:$0xff]
    %v2007 = vld [vmem:[%s2004 + $0x10] sm:$0xff]
    %v2008 = vld [vmem:[%s2004 + $0x18] sm:$0xff]
    %s2009 = scalar_lea.vmem [#allocation10], 2
    %v2010 = vld [vmem:[%s2009] sm:$0x1]
    %v2011 = vld [vmem:[#allocation2] sm:$0xff]
    %v2012 = vld [vmem:[#allocation2 + $0x8] sm:$0xff]
    %v2014 = vlaneseq
    %v2015 = vshrl.u32 %v2014, 7
    %v2016 = vsub.s32 0, %v2015
    %v2017 = vrot.slane %v2010, %v2016
    %v2020 = vsel %vm83, %v2011, 0
    %v2023 = vsel %vm83, %v2012, 0
    %2025 = vmatprep.subr.mxu0 0.0
    %2026 = vmatpush1.msra.mxu0 %v1996
    %2027 = vmatprep.subr.mxu0 0.0
    %2028 = vmatpush1.msra.mxu0 %v1997
    %2029 = vmatprep.subr.mxu0 0.0
    %2030 = vmatpush1.msra.mxu0 %v1998
    %2031 = vmatprep.subr.mxu0 0.0
    %2032 = vmatpush1.msra.mxu0 %v1999
    %2033 = vmatprep.subr.mxu0 0.0
    %2034 = vmatpush1.msra.mxu0 %v2000
    %2035 = vmatprep.subr.mxu0 0.0
    %2036 = vmatpush1.msra.mxu0 %v2001
    %2037 = vmatprep.subr.mxu0 0.0
    %2038 = vmatpush1.msra.mxu0 %v2002
    %2039 = vmatprep.subr.mxu0 0.0
    %2040 = vmatpush1.msra.mxu0 %v2003
    %2041 = vmatprep.subr.mxu0 0.0
    %2042 = vmatpush1.msra.mxu0 0.0
    %2043 = vmatprep.subr.mxu0 0.0
    %2044 = vmatpush1.msra.mxu0 0.0
    %2045 = vmatprep.subr.mxu0 0.0
    %2046 = vmatpush1.msra.mxu0 0.0
    %2047 = vmatprep.subr.mxu0 0.0
    %2048 = vmatpush1.msra.mxu0 0.0
    %2049 = vmatprep.subr.mxu0 0.0
    %2050 = vmatpush1.msra.mxu0 0.0
    %2051 = vmatprep.subr.mxu0 0.0
    %2052 = vmatpush1.msra.mxu0 0.0
    %2053 = vmatprep.subr.mxu0 0.0
    %2054 = vmatpush1.msra.mxu0 0.0
    %2055 = vmatprep.subr.mxu0 0.0
    %2056 = vmatpush1.msra.mxu0 0.0
    %2057 = vmatprep.subr.mxu0 0.0
    %2058 = vmatpush1.msra.mxu0 0.0
    %2059 = vmatprep.subr.mxu0 0.0
    %2060 = vmatpush1.msra.mxu0 0.0
    %2061 = vmatprep.subr.mxu0 0.0
    %2062 = vmatpush1.msra.mxu0 0.0
    %2063 = vmatprep.subr.mxu0 0.0
    %2064 = vmatpush1.msra.mxu0 0.0
    %2065 = vmatprep.subr.mxu0 0.0
    %2066 = vmatpush1.msra.mxu0 0.0
    %2067 = vmatprep.subr.mxu0 0.0
    %2068 = vmatpush1.msra.mxu0 0.0
    %2069 = vmatprep.subr.mxu0 0.0
    %2070 = vmatpush1.msra.mxu0 0.0
    %2071 = vmatprep.subr.mxu0 0.0
    %2072 = vmatpush1.msra.mxu0 0.0
    %2073 = vmatprep.subr.mxu0 0.0
    %2074 = vmatpush1.msra.mxu0 0.0
    %2075 = vmatprep.subr.mxu0 0.0
    %2076 = vmatpush1.msra.mxu0 0.0
    %2077 = vmatprep.subr.mxu0 0.0
    %2078 = vmatpush1.msra.mxu0 0.0
    %2079 = vmatprep.subr.mxu0 0.0
    %2080 = vmatpush1.msra.mxu0 0.0
    %2081 = vmatprep.subr.mxu0 0.0
    %2082 = vmatpush1.msra.mxu0 0.0
    %2083 = vmatprep.subr.mxu0 0.0
    %2084 = vmatpush1.msra.mxu0 0.0
    %2085 = vmatprep.subr.mxu0 0.0
    %2086 = vmatpush1.msra.mxu0 0.0
    %2087 = vmatprep.subr.mxu0 0.0
    %2088 = vmatpush1.msra.mxu0 0.0
    %2089 = vmatprep.mubr.f32.mxu0 0.0
    %2090 = vmatmul.mubr.f32.gmra.mrb[0].mxu0 %v2020
    %v2091 = vpop.f32.mrb[0].mxu0
    %v2092 = vadd.f32 %v2017, %v2091
    %v2093 = vpop.f32.mrb[0].mxu0
    %2094 = vmatprep.mubr.f32.mxu0 0.0
    %2095 = vmatmul.mubr.f32.gmra.mrb[0].mxu0 %v2023
    %v2096 = vpop.f32.mrb[0].mxu0
    %v2097 = vadd.f32 %v2017, %v2096
    %v2098 = vpop.f32.mrb[0].mxu0
    %2099 = vdwg.mxu0
    %2100 = vst [vmem:[#allocation3] sm:$0xff] %v2092
    %2101 = vst [vmem:[#allocation3 + $0x8] sm:$0xff] %v2097
    %s2102 = scalar_lea.vmem %s4, 4
    %v2103 = vld [vmem:[%s2102] sm:$0x3]
    %s2104 = scalar_lea.vmem %s5, 4
    %v2105 = vld [vmem:[%s2104] sm:$0x3]
    %v2106 = vld [vmem:[#allocation3] sm:$0x3]
    %v2108 = vsel %vm193, %v2103, 0
    %2110 = vmatprep.subr.mxu0 0.0
    %2111 = vmatpush1.msra.mxu0 %v2005
    %2112 = vmatprep.subr.mxu0 0.0
    %2113 = vmatpush1.msra.mxu0 %v2006
    %2114 = vmatprep.subr.mxu0 0.0
    %2115 = vmatpush1.msra.mxu0 %v2007
    %2116 = vmatprep.subr.mxu0 0.0
    %2117 = vmatpush1.msra.mxu0 %v2008
    %2118 = vmatprep.subr.mxu0 0.0
    %2119 = vmatpush1.msra.mxu0 0.0
    %2120 = vmatprep.subr.mxu0 0.0
    %2121 = vmatpush1.msra.mxu0 0.0
    %2122 = vmatprep.subr.mxu0 0.0
    %2123 = vmatpush1.msra.mxu0 0.0
    %2124 = vmatprep.subr.mxu0 0.0
    %2125 = vmatpush1.msra.mxu0 0.0
    %2126 = vmatprep.subr.mxu0 0.0
    %2127 = vmatpush1.msra.mxu0 0.0
    %2128 = vmatprep.subr.mxu0 0.0
    %2129 = vmatpush1.msra.mxu0 0.0
    %2130 = vmatprep.subr.mxu0 0.0
    %2131 = vmatpush1.msra.mxu0 0.0
    %2132 = vmatprep.subr.mxu0 0.0
    %2133 = vmatpush1.msra.mxu0 0.0
    %2134 = vmatprep.subr.mxu0 0.0
    %2135 = vmatpush1.msra.mxu0 0.0
    %2136 = vmatprep.subr.mxu0 0.0
    %2137 = vmatpush1.msra.mxu0 0.0
    %2138 = vmatprep.subr.mxu0 0.0
    %2139 = vmatpush1.msra.mxu0 0.0
    %2140 = vmatprep.subr.mxu0 0.0
    %2141 = vmatpush1.msra.mxu0 0.0
    %2142 = vmatprep.subr.mxu0 0.0
    %2143 = vmatpush1.msra.mxu0 0.0
    %2144 = vmatprep.subr.mxu0 0.0
    %2145 = vmatpush1.msra.mxu0 0.0
    %2146 = vmatprep.subr.mxu0 0.0
    %2147 = vmatpush1.msra.mxu0 0.0
    %2148 = vmatprep.subr.mxu0 0.0
    %2149 = vmatpush1.msra.mxu0 0.0
    %2150 = vmatprep.subr.mxu0 0.0
    %2151 = vmatpush1.msra.mxu0 0.0
    %2152 = vmatprep.subr.mxu0 0.0
    %2153 = vmatpush1.msra.mxu0 0.0
    %2154 = vmatprep.subr.mxu0 0.0
    %2155 = vmatpush1.msra.mxu0 0.0
    %2156 = vmatprep.subr.mxu0 0.0
    %2157 = vmatpush1.msra.mxu0 0.0
    %2158 = vmatprep.subr.mxu0 0.0
    %2159 = vmatpush1.msra.mxu0 0.0
    %2160 = vmatprep.subr.mxu0 0.0
    %2161 = vmatpush1.msra.mxu0 0.0
    %2162 = vmatprep.subr.mxu0 0.0
    %2163 = vmatpush1.msra.mxu0 0.0
    %2164 = vmatprep.subr.mxu0 0.0
    %2165 = vmatpush1.msra.mxu0 0.0
    %2166 = vmatprep.subr.mxu0 0.0
    %2167 = vmatpush1.msra.mxu0 0.0
    %2168 = vmatprep.subr.mxu0 0.0
    %2169 = vmatpush1.msra.mxu0 0.0
    %2170 = vmatprep.subr.mxu0 0.0
    %2171 = vmatpush1.msra.mxu0 0.0
    %2172 = vmatprep.subr.mxu0 0.0
    %2173 = vmatpush1.msra.mxu0 0.0
    %2174 = vmatprep.mubr.f32.mxu0 0.0
    %2175 = vmatmul.mubr.f32.gmra.mrb[0].mxu0 %v2108
    %v2176 = vpop.f32.mrb[0].mxu0
    %v2177 = vadd.f32 0.0, %v2176
    %v2178 = vpop.f32.mrb[0].mxu0
    %2179 = vdwg.mxu0
    %v2180 = vadd.f32 %v2106, %v2177
    %v2181 = vxor.u32 %v2180, 2147483648
    %v2182 = vmul.f32 %v2181, 1.442695
    %v2183 = vpow.pop %v2182
    %v2184 = vadd.f32 %v2183, 1.0
    %v2185 = vrcp.pop %v2184
    %v2186 = vmul.f32 1.0, %v2185
    %v2187 = vtanh.pop %v2180
    %2189 = vrot.lane.b32.xlu0 %v2105, 32
    %v2190 = vpop.permute.xlu0 %2189
    %v2192 = vmul.f32 %v2186, %v2190
    %2194 = vrot.lane.b32.xlu0 %v2187, 64
    %v2195 = vpop.permute.xlu0 %2194
    %v2197 = vmul.f32 %v2186, %v2195
    %2199 = vrot.lane.b32.xlu0 %v2197, 32
    %v2200 = vpop.permute.xlu0 %2199
    %v2202 = vadd.f32 %v2192, %v2200
    %v2203 = vtanh.pop %v2202
    %2205 = vrot.lane.b32.xlu0 %v2203, 64
    %v2206 = vpop.permute.xlu0 %2205
    %v2208 = vmul.f32 %v2186, %v2206
    %2210 = vrot.lane.b32.xlu0 %v2208, 32
    %v2211 = vpop.permute.xlu0 %2210
    %2213 = vst.msk [vmem:[#allocation12] sm:$0x3] %vm300, %v2211
    %v2214 = vld [vmem:[#allocation3 + $0x2] sm:$0x3]
    %v2215 = vsel %vm193, %v2211, 0
    %2217 = vmatprep.subr.mxu0 0.0
    %2218 = vmatpush1.msra.mxu0 %v2005
    %2219 = vmatprep.subr.mxu0 0.0
    %2220 = vmatpush1.msra.mxu0 %v2006
    %2221 = vmatprep.subr.mxu0 0.0
    %2222 = vmatpush1.msra.mxu0 %v2007
    %2223 = vmatprep.subr.mxu0 0.0
    %2224 = vmatpush1.msra.mxu0 %v2008
    %2225 = vmatprep.subr.mxu0 0.0
    %2226 = vmatpush1.msra.mxu0 0.0
    %2227 = vmatprep.subr.mxu0 0.0
    %2228 = vmatpush1.msra.mxu0 0.0
    %2229 = vmatprep.subr.mxu0 0.0
    %2230 = vmatpush1.msra.mxu0 0.0
    %2231 = vmatprep.subr.mxu0 0.0
    %2232 = vmatpush1.msra.mxu0 0.0
    %2233 = vmatprep.subr.mxu0 0.0
    %2234 = vmatpush1.msra.mxu0 0.0
    %2235 = vmatprep.subr.mxu0 0.0
    %2236 = vmatpush1.msra.mxu0 0.0
    %2237 = vmatprep.subr.mxu0 0.0
    %2238 = vmatpush1.msra.mxu0 0.0
    %2239 = vmatprep.subr.mxu0 0.0
    %2240 = vmatpush1.msra.mxu0 0.0
    %2241 = vmatprep.subr.mxu0 0.0
    %2242 = vmatpush1.msra.mxu0 0.0
    %2243 = vmatprep.subr.mxu0 0.0
    %2244 = vmatpush1.msra.mxu0 0.0
    %2245 = vmatprep.subr.mxu0 0.0
    %2246 = vmatpush1.msra.mxu0 0.0
    %2247 = vmatprep.subr.mxu0 0.0
    %2248 = vmatpush1.msra.mxu0 0.0
    %2249 = vmatprep.subr.mxu0 0.0
    %2250 = vmatpush1.msra.mxu0 0.0
    %2251 = vmatprep.subr.mxu0 0.0
    %2252 = vmatpush1.msra.mxu0 0.0
    %2253 = vmatprep.subr.mxu0 0.0
    %2254 = vmatpush1.msra.mxu0 0.0
    %2255 = vmatprep.subr.mxu0 0.0
    %2256 = vmatpush1.msra.mxu0 0.0
    %2257 = vmatprep.subr.mxu0 0.0
    %2258 = vmatpush1.msra.mxu0 0.0
    %2259 = vmatprep.subr.mxu0 0.0
    %2260 = vmatpush1.msra.mxu0 0.0
    %2261 = vmatprep.subr.mxu0 0.0
    %2262 = vmatpush1.msra.mxu0 0.0
    %2263 = vmatprep.subr.mxu0 0.0
    %2264 = vmatpush1.msra.mxu0 0.0
    %2265 = vmatprep.subr.mxu0 0.0
    %2266 = vmatpush1.msra.mxu0 0.0
    %2267 = vmatprep.subr.mxu0 0.0
    %2268 = vmatpush1.msra.mxu0 0.0
    %2269 = vmatprep.subr.mxu0 0.0
    %2270 = vmatpush1.msra.mxu0 0.0
    %2271 = vmatprep.subr.mxu0 0.0
    %2272 = vmatpush1.msra.mxu0 0.0
    %2273 = vmatprep.subr.mxu0 0.0
    %2274 = vmatpush1.msra.mxu0 0.0
    %2275 = vmatprep.subr.mxu0 0.0
    %2276 = vmatpush1.msra.mxu0 0.0
    %2277 = vmatprep.subr.mxu0 0.0
    %2278 = vmatpush1.msra.mxu0 0.0
    %2279 = vmatprep.subr.mxu0 0.0
    %2280 = vmatpush1.msra.mxu0 0.0
    %2281 = vmatprep.mubr.f32.mxu0 0.0
    %2282 = vmatmul.mubr.f32.gmra.mrb[0].mxu0 %v2215
    %v2283 = vpop.f32.mrb[0].mxu0
    %v2284 = vadd.f32 0.0, %v2283
    %v2285 = vpop.f32.mrb[0].mxu0
    %2286 = vdwg.mxu0
    %v2287 = vadd.f32 %v2214, %v2284
    %v2288 = vxor.u32 %v2287, 2147483648
    %v2289 = vmul.f32 %v2288, 1.442695
    %v2290 = vpow.pop %v2289
    %v2291 = vadd.f32 %v2290, 1.0
    %v2292 = vrcp.pop %v2291
    %v2293 = vmul.f32 1.0, %v2292
    %v2294 = vtanh.pop %v2287
    %v2295 = vmul.f32 %v2293, %v2202
    %2297 = vrot.lane.b32.xlu0 %v2294, 64
    %v2298 = vpop.permute.xlu0 %2297
    %v2300 = vmul.f32 %v2293, %v2298
    %2302 = vrot.lane.b32.xlu0 %v2300, 32
    %v2303 = vpop.permute.xlu0 %2302
    %v2305 = vadd.f32 %v2295, %v2303
    %v2306 = vtanh.pop %v2305
    %2308 = vrot.lane.b32.xlu0 %v2306, 64
    %v2309 = vpop.permute.xlu0 %2308
    %v2311 = vmul.f32 %v2293, %v2309
    %2313 = vrot.lane.b32.xlu0 %v2311, 32
    %v2314 = vpop.permute.xlu0 %2313
    %2316 = vst.msk [vmem:[#allocation12 + $0x2] sm:$0x3] %vm300, %v2314
    %v2317 = vld [vmem:[#allocation3 + $0x4] sm:$0x3]
    %v2318 = vsel %vm193, %v2314, 0
    %2320 = vmatprep.subr.mxu0 0.0
    %2321 = vmatpush1.msra.mxu0 %v2005
    %2322 = vmatprep.subr.mxu0 0.0
    %2323 = vmatpush1.msra.mxu0 %v2006
    %2324 = vmatprep.subr.mxu0 0.0
    %2325 = vmatpush1.msra.mxu0 %v2007
    %2326 = vmatprep.subr.mxu0 0.0
    %2327 = vmatpush1.msra.mxu0 %v2008
    %2328 = vmatprep.subr.mxu0 0.0
    %2329 = vmatpush1.msra.mxu0 0.0
    %2330 = vmatprep.subr.mxu0 0.0
    %2331 = vmatpush1.msra.mxu0 0.0
    %2332 = vmatprep.subr.mxu0 0.0
    %2333 = vmatpush1.msra.mxu0 0.0
    %2334 = vmatprep.subr.mxu0 0.0
    %2335 = vmatpush1.msra.mxu0 0.0
    %2336 = vmatprep.subr.mxu0 0.0
    %2337 = vmatpush1.msra.mxu0 0.0
    %2338 = vmatprep.subr.mxu0 0.0
    %2339 = vmatpush1.msra.mxu0 0.0
    %2340 = vmatprep.subr.mxu0 0.0
    %2341 = vmatpush1.msra.mxu0 0.0
    %2342 = vmatprep.subr.mxu0 0.0
    %2343 = vmatpush1.msra.mxu0 0.0
    %2344 = vmatprep.subr.mxu0 0.0
    %2345 = vmatpush1.msra.mxu0 0.0
    %2346 = vmatprep.subr.mxu0 0.0
    %2347 = vmatpush1.msra.mxu0 0.0
    %2348 = vmatprep.subr.mxu0 0.0
    %2349 = vmatpush1.msra.mxu0 0.0
    %2350 = vmatprep.subr.mxu0 0.0
    %2351 = vmatpush1.msra.mxu0 0.0
    %2352 = vmatprep.subr.mxu0 0.0
    %2353 = vmatpush1.msra.mxu0 0.0
    %2354 = vmatprep.subr.mxu0 0.0
    %2355 = vmatpush1.msra.mxu0 0.0
    %2356 = vmatprep.subr.mxu0 0.0
    %2357 = vmatpush1.msra.mxu0 0.0
    %2358 = vmatprep.subr.mxu0 0.0
    %2359 = vmatpush1.msra.mxu0 0.0
    %2360 = vmatprep.subr.mxu0 0.0
    %2361 = vmatpush1.msra.mxu0 0.0
    %2362 = vmatprep.subr.mxu0 0.0
    %2363 = vmatpush1.msra.mxu0 0.0
    %2364 = vmatprep.subr.mxu0 0.0
    %2365 = vmatpush1.msra.mxu0 0.0
    %2366 = vmatprep.subr.mxu0 0.0
    %2367 = vmatpush1.msra.mxu0 0.0
    %2368 = vmatprep.subr.mxu0 0.0
    %2369 = vmatpush1.msra.mxu0 0.0
    %2370 = vmatprep.subr.mxu0 0.0
    %2371 = vmatpush1.msra.mxu0 0.0
    %2372 = vmatprep.subr.mxu0 0.0
    %2373 = vmatpush1.msra.mxu0 0.0
    %2374 = vmatprep.subr.mxu0 0.0
    %2375 = vmatpush1.msra.mxu0 0.0
    %2376 = vmatprep.subr.mxu0 0.0
    %2377 = vmatpush1.msra.mxu0 0.0
    %2378 = vmatprep.subr.mxu0 0.0
    %2379 = vmatpush1.msra.mxu0 0.0
    %2380 = vmatprep.subr.mxu0 0.0
    %2381 = vmatpush1.msra.mxu0 0.0
    %2382 = vmatprep.subr.mxu0 0.0
    %2383 = vmatpush1.msra.mxu0 0.0
    %2384 = vmatprep.mubr.f32.mxu0 0.0
    %2385 = vmatmul.mubr.f32.gmra.mrb[0].mxu0 %v2318
    %v2386 = vpop.f32.mrb[0].mxu0
    %v2387 = vadd.f32 0.0, %v2386
    %v2388 = vpop.f32.mrb[0].mxu0
    %2389 = vdwg.mxu0
    %v2390 = vadd.f32 %v2317, %v2387
    %v2391 = vxor.u32 %v2390, 2147483648
    %v2392 = vmul.f32 %v2391, 1.442695
    %v2393 = vpow.pop %v2392
    %v2394 = vadd.f32 %v2393, 1.0
    %v2395 = vrcp.pop %v2394
    %v2396 = vmul.f32 1.0, %v2395
    %v2397 = vtanh.pop %v2390
    %v2398 = vmul.f32 %v2396, %v2305
    %2400 = vrot.lane.b32.xlu0 %v2397, 64
    %v2401 = vpop.permute.xlu0 %2400
    %v2403 = vmul.f32 %v2396, %v2401
    %2405 = vrot.lane.b32.xlu0 %v2403, 32
    %v2406 = vpop.permute.xlu0 %2405
    %v2408 = vadd.f32 %v2398, %v2406
    %v2409 = vtanh.pop %v2408
    %2411 = vrot.lane.b32.xlu0 %v2409, 64
    %v2412 = vpop.permute.xlu0 %2411
    %v2414 = vmul.f32 %v2396, %v2412
    %2416 = vrot.lane.b32.xlu0 %v2414, 32
    %v2417 = vpop.permute.xlu0 %2416
    %2419 = vst.msk [vmem:[#allocation12 + $0x4] sm:$0x3] %vm300, %v2417
    %v2420 = vld [vmem:[#allocation3 + $0x6] sm:$0x3]
    %v2421 = vsel %vm193, %v2417, 0
    %2423 = vmatprep.subr.mxu0 0.0
    %2424 = vmatpush1.msra.mxu0 %v2005
    %2425 = vmatprep.subr.mxu0 0.0
    %2426 = vmatpush1.msra.mxu0 %v2006
    %2427 = vmatprep.subr.mxu0 0.0
    %2428 = vmatpush1.msra.mxu0 %v2007
    %2429 = vmatprep.subr.mxu0 0.0
    %2430 = vmatpush1.msra.mxu0 %v2008
    %2431 = vmatprep.subr.mxu0 0.0
    %2432 = vmatpush1.msra.mxu0 0.0
    %2433 = vmatprep.subr.mxu0 0.0
    %2434 = vmatpush1.msra.mxu0 0.0
    %2435 = vmatprep.subr.mxu0 0.0
    %2436 = vmatpush1.msra.mxu0 0.0
    %2437 = vmatprep.subr.mxu0 0.0
    %2438 = vmatpush1.msra.mxu0 0.0
    %2439 = vmatprep.subr.mxu0 0.0
    %2440 = vmatpush1.msra.mxu0 0.0
    %2441 = vmatprep.subr.mxu0 0.0
    %2442 = vmatpush1.msra.mxu0 0.0
    %2443 = vmatprep.subr.mxu0 0.0
    %2444 = vmatpush1.msra.mxu0 0.0
    %2445 = vmatprep.subr.mxu0 0.0
    %2446 = vmatpush1.msra.mxu0 0.0
    %2447 = vmatprep.subr.mxu0 0.0
    %2448 = vmatpush1.msra.mxu0 0.0
    %2449 = vmatprep.subr.mxu0 0.0
    %2450 = vmatpush1.msra.mxu0 0.0
    %2451 = vmatprep.subr.mxu0 0.0
    %2452 = vmatpush1.msra.mxu0 0.0
    %2453 = vmatprep.subr.mxu0 0.0
    %2454 = vmatpush1.msra.mxu0 0.0
    %2455 = vmatprep.subr.mxu0 0.0
    %2456 = vmatpush1.msra.mxu0 0.0
    %2457 = vmatprep.subr.mxu0 0.0
    %2458 = vmatpush1.msra.mxu0 0.0
    %2459 = vmatprep.subr.mxu0 0.0
    %2460 = vmatpush1.msra.mxu0 0.0
    %2461 = vmatprep.subr.mxu0 0.0
    %2462 = vmatpush1.msra.mxu0 0.0
    %2463 = vmatprep.subr.mxu0 0.0
    %2464 = vmatpush1.msra.mxu0 0.0
    %2465 = vmatprep.subr.mxu0 0.0
    %2466 = vmatpush1.msra.mxu0 0.0
    %2467 = vmatprep.subr.mxu0 0.0
    %2468 = vmatpush1.msra.mxu0 0.0
    %2469 = vmatprep.subr.mxu0 0.0
    %2470 = vmatpush1.msra.mxu0 0.0
    %2471 = vmatprep.subr.mxu0 0.0
    %2472 = vmatpush1.msra.mxu0 0.0
    %2473 = vmatprep.subr.mxu0 0.0
    %2474 = vmatpush1.msra.mxu0 0.0
    %2475 = vmatprep.subr.mxu0 0.0
    %2476 = vmatpush1.msra.mxu0 0.0
    %2477 = vmatprep.subr.mxu0 0.0
    %2478 = vmatpush1.msra.mxu0 0.0
    %2479 = vmatprep.subr.mxu0 0.0
    %2480 = vmatpush1.msra.mxu0 0.0
    %2481 = vmatprep.subr.mxu0 0.0
    %2482 = vmatpush1.msra.mxu0 0.0
    %2483 = vmatprep.subr.mxu0 0.0
    %2484 = vmatpush1.msra.mxu0 0.0
    %2485 = vmatprep.subr.mxu0 0.0
    %2486 = vmatpush1.msra.mxu0 0.0
    %2487 = vmatprep.mubr.f32.mxu0 0.0
    %2488 = vmatmul.mubr.f32.gmra.mrb[0].mxu0 %v2421
    %v2489 = vpop.f32.mrb[0].mxu0
    %v2490 = vadd.f32 0.0, %v2489
    %v2491 = vpop.f32.mrb[0].mxu0
    %2492 = vdwg.mxu0
    %v2493 = vadd.f32 %v2420, %v2490
    %v2494 = vxor.u32 %v2493, 2147483648
    %v2495 = vmul.f32 %v2494, 1.442695
    %v2496 = vpow.pop %v2495
    %v2497 = vadd.f32 %v2496, 1.0
    %v2498 = vrcp.pop %v2497
    %v2499 = vmul.f32 1.0, %v2498
    %v2500 = vtanh.pop %v2493
    %v2501 = vmul.f32 %v2499, %v2408
    %2503 = vrot.lane.b32.xlu0 %v2500, 64
    %v2504 = vpop.permute.xlu0 %2503
    %v2506 = vmul.f32 %v2499, %v2504
    %2508 = vrot.lane.b32.xlu0 %v2506, 32
    %v2509 = vpop.permute.xlu0 %2508
    %v2511 = vadd.f32 %v2501, %v2509
    %v2512 = vtanh.pop %v2511
    %2514 = vrot.lane.b32.xlu0 %v2512, 64
    %v2515 = vpop.permute.xlu0 %2514
    %v2517 = vmul.f32 %v2499, %v2515
    %2519 = vrot.lane.b32.xlu0 %v2517, 32
    %v2520 = vpop.permute.xlu0 %2519
    %2522 = vst.msk [vmem:[#allocation12 + $0x6] sm:$0x3] %vm300, %v2520
    %v2523 = vld [vmem:[#allocation3 + $0x8] sm:$0x3]
    %v2524 = vsel %vm193, %v2520, 0
    %2526 = vmatprep.subr.mxu0 0.0
    %2527 = vmatpush1.msra.mxu0 %v2005
    %2528 = vmatprep.subr.mxu0 0.0
    %2529 = vmatpush1.msra.mxu0 %v2006
    %2530 = vmatprep.subr.mxu0 0.0
    %2531 = vmatpush1.msra.mxu0 %v2007
    %2532 = vmatprep.subr.mxu0 0.0
    %2533 = vmatpush1.msra.mxu0 %v2008
    %2534 = vmatprep.subr.mxu0 0.0
    %2535 = vmatpush1.msra.mxu0 0.0
    %2536 = vmatprep.subr.mxu0 0.0
    %2537 = vmatpush1.msra.mxu0 0.0
    %2538 = vmatprep.subr.mxu0 0.0
    %2539 = vmatpush1.msra.mxu0 0.0
    %2540 = vmatprep.subr.mxu0 0.0
    %2541 = vmatpush1.msra.mxu0 0.0
    %2542 = vmatprep.subr.mxu0 0.0
    %2543 = vmatpush1.msra.mxu0 0.0
    %2544 = vmatprep.subr.mxu0 0.0
    %2545 = vmatpush1.msra.mxu0 0.0
    %2546 = vmatprep.subr.mxu0 0.0
    %2547 = vmatpush1.msra.mxu0 0.0
    %2548 = vmatprep.subr.mxu0 0.0
    %2549 = vmatpush1.msra.mxu0 0.0
    %2550 = vmatprep.subr.mxu0 0.0
    %2551 = vmatpush1.msra.mxu0 0.0
    %2552 = vmatprep.subr.mxu0 0.0
    %2553 = vmatpush1.msra.mxu0 0.0
    %2554 = vmatprep.subr.mxu0 0.0
    %2555 = vmatpush1.msra.mxu0 0.0
    %2556 = vmatprep.subr.mxu0 0.0
    %2557 = vmatpush1.msra.mxu0 0.0
    %2558 = vmatprep.subr.mxu0 0.0
    %2559 = vmatpush1.msra.mxu0 0.0
    %2560 = vmatprep.subr.mxu0 0.0
    %2561 = vmatpush1.msra.mxu0 0.0
    %2562 = vmatprep.subr.mxu0 0.0
    %2563 = vmatpush1.msra.mxu0 0.0
    %2564 = vmatprep.subr.mxu0 0.0
    %2565 = vmatpush1.msra.mxu0 0.0
    %2566 = vmatprep.subr.mxu0 0.0
    %2567 = vmatpush1.msra.mxu0 0.0
    %2568 = vmatprep.subr.mxu0 0.0
    %2569 = vmatpush1.msra.mxu0 0.0
    %2570 = vmatprep.subr.mxu0 0.0
    %2571 = vmatpush1.msra.mxu0 0.0
    %2572 = vmatprep.subr.mxu0 0.0
    %2573 = vmatpush1.msra.mxu0 0.0
    %2574 = vmatprep.subr.mxu0 0.0
    %2575 = vmatpush1.msra.mxu0 0.0
    %2576 = vmatprep.subr.mxu0 0.0
    %2577 = vmatpush1.msra.mxu0 0.0
    %2578 = vmatprep.subr.mxu0 0.0
    %2579 = vmatpush1.msra.mxu0 0.0
    %2580 = vmatprep.subr.mxu0 0.0
    %2581 = vmatpush1.msra.mxu0 0.0
    %2582 = vmatprep.subr.mxu0 0.0
    %2583 = vmatpush1.msra.mxu0 0.0
    %2584 = vmatprep.subr.mxu0 0.0
    %2585 = vmatpush1.msra.mxu0 0.0
    %2586 = vmatprep.subr.mxu0 0.0
    %2587 = vmatpush1.msra.mxu0 0.0
    %2588 = vmatprep.subr.mxu0 0.0
    %2589 = vmatpush1.msra.mxu0 0.0
    %2590 = vmatprep.mubr.f32.mxu0 0.0
    %2591 = vmatmul.mubr.f32.gmra.mrb[0].mxu0 %v2524
    %v2592 = vpop.f32.mrb[0].mxu0
    %v2593 = vadd.f32 0.0, %v2592
    %v2594 = vpop.f32.mrb[0].mxu0
    %2595 = vdwg.mxu0
    %v2596 = vadd.f32 %v2523, %v2593
    %v2597 = vxor.u32 %v2596, 2147483648
    %v2598 = vmul.f32 %v2597, 1.442695
    %v2599 = vpow.pop %v2598
    %v2600 = vadd.f32 %v2599, 1.0
    %v2601 = vrcp.pop %v2600
    %v2602 = vmul.f32 1.0, %v2601
    %v2603 = vtanh.pop %v2596
    %v2604 = vmul.f32 %v2602, %v2511
    %2606 = vrot.lane.b32.xlu0 %v2603, 64
    %v2607 = vpop.permute.xlu0 %2606
    %v2609 = vmul.f32 %v2602, %v2607
    %2611 = vrot.lane.b32.xlu0 %v2609, 32
    %v2612 = vpop.permute.xlu0 %2611
    %v2614 = vadd.f32 %v2604, %v2612
    %v2615 = vtanh.pop %v2614
    %2617 = vrot.lane.b32.xlu0 %v2615, 64
    %v2618 = vpop.permute.xlu0 %2617
    %v2620 = vmul.f32 %v2602, %v2618
    %2622 = vrot.lane.b32.xlu0 %v2620, 32
    %v2623 = vpop.permute.xlu0 %2622
    %2625 = vst.msk [vmem:[#allocation12 + $0x8] sm:$0x3] %vm300, %v2623
    %v2626 = vld [vmem:[#allocation3 + $0xa] sm:$0x3]
    %v2627 = vsel %vm193, %v2623, 0
    %2629 = vmatprep.subr.mxu0 0.0
    %2630 = vmatpush1.msra.mxu0 %v2005
    %2631 = vmatprep.subr.mxu0 0.0
    %2632 = vmatpush1.msra.mxu0 %v2006
    %2633 = vmatprep.subr.mxu0 0.0
    %2634 = vmatpush1.msra.mxu0 %v2007
    %2635 = vmatprep.subr.mxu0 0.0
    %2636 = vmatpush1.msra.mxu0 %v2008
    %2637 = vmatprep.subr.mxu0 0.0
    %2638 = vmatpush1.msra.mxu0 0.0
    %2639 = vmatprep.subr.mxu0 0.0
    %2640 = vmatpush1.msra.mxu0 0.0
    %2641 = vmatprep.subr.mxu0 0.0
    %2642 = vmatpush1.msra.mxu0 0.0
    %2643 = vmatprep.subr.mxu0 0.0
    %2644 = vmatpush1.msra.mxu0 0.0
    %2645 = vmatprep.subr.mxu0 0.0
    %2646 = vmatpush1.msra.mxu0 0.0
    %2647 = vmatprep.subr.mxu0 0.0
    %2648 = vmatpush1.msra.mxu0 0.0
    %2649 = vmatprep.subr.mxu0 0.0
    %2650 = vmatpush1.msra.mxu0 0.0
    %2651 = vmatprep.subr.mxu0 0.0
    %2652 = vmatpush1.msra.mxu0 0.0
    %2653 = vmatprep.subr.mxu0 0.0
    %2654 = vmatpush1.msra.mxu0 0.0
    %2655 = vmatprep.subr.mxu0 0.0
    %2656 = vmatpush1.msra.mxu0 0.0
    %2657 = vmatprep.subr.mxu0 0.0
    %2658 = vmatpush1.msra.mxu0 0.0
    %2659 = vmatprep.subr.mxu0 0.0
    %2660 = vmatpush1.msra.mxu0 0.0
    %2661 = vmatprep.subr.mxu0 0.0
    %2662 = vmatpush1.msra.mxu0 0.0
    %2663 = vmatprep.subr.mxu0 0.0
    %2664 = vmatpush1.msra.mxu0 0.0
    %2665 = vmatprep.subr.mxu0 0.0
    %2666 = vmatpush1.msra.mxu0 0.0
    %2667 = vmatprep.subr.mxu0 0.0
    %2668 = vmatpush1.msra.mxu0 0.0
    %2669 = vmatprep.subr.mxu0 0.0
    %2670 = vmatpush1.msra.mxu0 0.0
    %2671 = vmatprep.subr.mxu0 0.0
    %2672 = vmatpush1.msra.mxu0 0.0
    %2673 = vmatprep.subr.mxu0 0.0
    %2674 = vmatpush1.msra.mxu0 0.0
    %2675 = vmatprep.subr.mxu0 0.0
    %2676 = vmatpush1.msra.mxu0 0.0
    %2677 = vmatprep.subr.mxu0 0.0
    %2678 = vmatpush1.msra.mxu0 0.0
    %2679 = vmatprep.subr.mxu0 0.0
    %2680 = vmatpush1.msra.mxu0 0.0
    %2681 = vmatprep.subr.mxu0 0.0
    %2682 = vmatpush1.msra.mxu0 0.0
    %2683 = vmatprep.subr.mxu0 0.0
    %2684 = vmatpush1.msra.mxu0 0.0
    %2685 = vmatprep.subr.mxu0 0.0
    %2686 = vmatpush1.msra.mxu0 0.0
    %2687 = vmatprep.subr.mxu0 0.0
    %2688 = vmatpush1.msra.mxu0 0.0
    %2689 = vmatprep.subr.mxu0 0.0
    %2690 = vmatpush1.msra.mxu0 0.0
    %2691 = vmatprep.subr.mxu0 0.0
    %2692 = vmatpush1.msra.mxu0 0.0
    %2693 = vmatprep.mubr.f32.mxu0 0.0
    %2694 = vmatmul.mubr.f32.gmra.mrb[0].mxu0 %v2627
    %v2695 = vpop.f32.mrb[0].mxu0
    %v2696 = vadd.f32 0.0, %v2695
    %v2697 = vpop.f32.mrb[0].mxu0
    %2698 = vdwg.mxu0
    %v2699 = vadd.f32 %v2626, %v2696
    %v2700 = vxor.u32 %v2699, 2147483648
    %v2701 = vmul.f32 %v2700, 1.442695
    %v2702 = vpow.pop %v2701
    %v2703 = vadd.f32 %v2702, 1.0
    %v2704 = vrcp.pop %v2703
    %v2705 = vmul.f32 1.0, %v2704
    %v2706 = vtanh.pop %v2699
    %v2707 = vmul.f32 %v2705, %v2614
    %2709 = vrot.lane.b32.xlu0 %v2706, 64
    %v2710 = vpop.permute.xlu0 %2709
    %v2712 = vmul.f32 %v2705, %v2710
    %2714 = vrot.lane.b32.xlu0 %v2712, 32
    %v2715 = vpop.permute.xlu0 %2714
    %v2717 = vadd.f32 %v2707, %v2715
    %v2718 = vtanh.pop %v2717
    %2720 = vrot.lane.b32.xlu0 %v2718, 64
    %v2721 = vpop.permute.xlu0 %2720
    %v2723 = vmul.f32 %v2705, %v2721
    %2725 = vrot.lane.b32.xlu0 %v2723, 32
    %v2726 = vpop.permute.xlu0 %2725
    %2728 = vst.msk [vmem:[#allocation12 + $0xa] sm:$0x3] %vm300, %v2726
    %v2729 = vld [vmem:[#allocation3 + $0xc] sm:$0x3]
    %v2730 = vsel %vm193, %v2726, 0
    %2732 = vmatprep.subr.mxu0 0.0
    %2733 = vmatpush1.msra.mxu0 %v2005
    %2734 = vmatprep.subr.mxu0 0.0
    %2735 = vmatpush1.msra.mxu0 %v2006
    %2736 = vmatprep.subr.mxu0 0.0
    %2737 = vmatpush1.msra.mxu0 %v2007
    %2738 = vmatprep.subr.mxu0 0.0
    %2739 = vmatpush1.msra.mxu0 %v2008
    %2740 = vmatprep.subr.mxu0 0.0
    %2741 = vmatpush1.msra.mxu0 0.0
    %2742 = vmatprep.subr.mxu0 0.0
    %2743 = vmatpush1.msra.mxu0 0.0
    %2744 = vmatprep.subr.mxu0 0.0
    %2745 = vmatpush1.msra.mxu0 0.0
    %2746 = vmatprep.subr.mxu0 0.0
    %2747 = vmatpush1.msra.mxu0 0.0
    %2748 = vmatprep.subr.mxu0 0.0
    %2749 = vmatpush1.msra.mxu0 0.0
    %2750 = vmatprep.subr.mxu0 0.0
    %2751 = vmatpush1.msra.mxu0 0.0
    %2752 = vmatprep.subr.mxu0 0.0
    %2753 = vmatpush1.msra.mxu0 0.0
    %2754 = vmatprep.subr.mxu0 0.0
    %2755 = vmatpush1.msra.mxu0 0.0
    %2756 = vmatprep.subr.mxu0 0.0
    %2757 = vmatpush1.msra.mxu0 0.0
    %2758 = vmatprep.subr.mxu0 0.0
    %2759 = vmatpush1.msra.mxu0 0.0
    %2760 = vmatprep.subr.mxu0 0.0
    %2761 = vmatpush1.msra.mxu0 0.0
    %2762 = vmatprep.subr.mxu0 0.0
    %2763 = vmatpush1.msra.mxu0 0.0
    %2764 = vmatprep.subr.mxu0 0.0
    %2765 = vmatpush1.msra.mxu0 0.0
    %2766 = vmatprep.subr.mxu0 0.0
    %2767 = vmatpush1.msra.mxu0 0.0
    %2768 = vmatprep.subr.mxu0 0.0
    %2769 = vmatpush1.msra.mxu0 0.0
    %2770 = vmatprep.subr.mxu0 0.0
    %2771 = vmatpush1.msra.mxu0 0.0
    %2772 = vmatprep.subr.mxu0 0.0
    %2773 = vmatpush1.msra.mxu0 0.0
    %2774 = vmatprep.subr.mxu0 0.0
    %2775 = vmatpush1.msra.mxu0 0.0
    %2776 = vmatprep.subr.mxu0 0.0
    %2777 = vmatpush1.msra.mxu0 0.0
    %2778 = vmatprep.subr.mxu0 0.0
    %2779 = vmatpush1.msra.mxu0 0.0
    %2780 = vmatprep.subr.mxu0 0.0
    %2781 = vmatpush1.msra.mxu0 0.0
    %2782 = vmatprep.subr.mxu0 0.0
    %2783 = vmatpush1.msra.mxu0 0.0
    %2784 = vmatprep.subr.mxu0 0.0
    %2785 = vmatpush1.msra.mxu0 0.0
    %2786 = vmatprep.subr.mxu0 0.0
    %2787 = vmatpush1.msra.mxu0 0.0
    %2788 = vmatprep.subr.mxu0 0.0
    %2789 = vmatpush1.msra.mxu0 0.0
    %2790 = vmatprep.subr.mxu0 0.0
    %2791 = vmatpush1.msra.mxu0 0.0
    %2792 = vmatprep.subr.mxu0 0.0
    %2793 = vmatpush1.msra.mxu0 0.0
    %2794 = vmatprep.subr.mxu0 0.0
    %2795 = vmatpush1.msra.mxu0 0.0
    %2796 = vmatprep.mubr.f32.mxu0 0.0
    %2797 = vmatmul.mubr.f32.gmra.mrb[0].mxu0 %v2730
    %v2798 = vpop.f32.mrb[0].mxu0
    %v2799 = vadd.f32 0.0, %v2798
    %v2800 = vpop.f32.mrb[0].mxu0
    %2801 = vdwg.mxu0
    %v2802 = vadd.f32 %v2729, %v2799
    %v2803 = vxor.u32 %v2802, 2147483648
    %v2804 = vmul.f32 %v2803, 1.442695
    %v2805 = vpow.pop %v2804
    %v2806 = vadd.f32 %v2805, 1.0
    %v2807 = vrcp.pop %v2806
    %v2808 = vmul.f32 1.0, %v2807
    %v2809 = vtanh.pop %v2802
    %v2810 = vmul.f32 %v2808, %v2717
    %2812 = vrot.lane.b32.xlu0 %v2809, 64
    %v2813 = vpop.permute.xlu0 %2812
    %v2815 = vmul.f32 %v2808, %v2813
    %2817 = vrot.lane.b32.xlu0 %v2815, 32
    %v2818 = vpop.permute.xlu0 %2817
    %v2820 = vadd.f32 %v2810, %v2818
    %v2821 = vtanh.pop %v2820
    %2823 = vrot.lane.b32.xlu0 %v2821, 64
    %v2824 = vpop.permute.xlu0 %2823
    %v2826 = vmul.f32 %v2808, %v2824
    %2828 = vrot.lane.b32.xlu0 %v2826, 32
    %v2829 = vpop.permute.xlu0 %2828
    %2831 = vst.msk [vmem:[#allocation12 + $0xc] sm:$0x3] %vm300, %v2829
    %v2832 = vld [vmem:[#allocation3 + $0xe] sm:$0x3]
    %v2833 = vsel %vm193, %v2829, 0
    %2835 = vmatprep.subr.mxu0 0.0
    %2836 = vmatpush1.msra.mxu0 %v2005
    %2837 = vmatprep.subr.mxu0 0.0
    %2838 = vmatpush1.msra.mxu0 %v2006
    %2839 = vmatprep.subr.mxu0 0.0
    %2840 = vmatpush1.msra.mxu0 %v2007
    %2841 = vmatprep.subr.mxu0 0.0
    %2842 = vmatpush1.msra.mxu0 %v2008
    %2843 = vmatprep.subr.mxu0 0.0
    %2844 = vmatpush1.msra.mxu0 0.0
    %2845 = vmatprep.subr.mxu0 0.0
    %2846 = vmatpush1.msra.mxu0 0.0
    %2847 = vmatprep.subr.mxu0 0.0
    %2848 = vmatpush1.msra.mxu0 0.0
    %2849 = vmatprep.subr.mxu0 0.0
    %2850 = vmatpush1.msra.mxu0 0.0
    %2851 = vmatprep.subr.mxu0 0.0
    %2852 = vmatpush1.msra.mxu0 0.0
    %2853 = vmatprep.subr.mxu0 0.0
    %2854 = vmatpush1.msra.mxu0 0.0
    %2855 = vmatprep.subr.mxu0 0.0
    %2856 = vmatpush1.msra.mxu0 0.0
    %2857 = vmatprep.subr.mxu0 0.0
    %2858 = vmatpush1.msra.mxu0 0.0
    %2859 = vmatprep.subr.mxu0 0.0
    %2860 = vmatpush1.msra.mxu0 0.0
    %2861 = vmatprep.subr.mxu0 0.0
    %2862 = vmatpush1.msra.mxu0 0.0
    %2863 = vmatprep.subr.mxu0 0.0
    %2864 = vmatpush1.msra.mxu0 0.0
    %2865 = vmatprep.subr.mxu0 0.0
    %2866 = vmatpush1.msra.mxu0 0.0
    %2867 = vmatprep.subr.mxu0 0.0
    %2868 = vmatpush1.msra.mxu0 0.0
    %2869 = vmatprep.subr.mxu0 0.0
    %2870 = vmatpush1.msra.mxu0 0.0
    %2871 = vmatprep.subr.mxu0 0.0
    %2872 = vmatpush1.msra.mxu0 0.0
    %2873 = vmatprep.subr.mxu0 0.0
    %2874 = vmatpush1.msra.mxu0 0.0
    %2875 = vmatprep.subr.mxu0 0.0
    %2876 = vmatpush1.msra.mxu0 0.0
    %2877 = vmatprep.subr.mxu0 0.0
    %2878 = vmatpush1.msra.mxu0 0.0
    %2879 = vmatprep.subr.mxu0 0.0
    %2880 = vmatpush1.msra.mxu0 0.0
    %2881 = vmatprep.subr.mxu0 0.0
    %2882 = vmatpush1.msra.mxu0 0.0
    %2883 = vmatprep.subr.mxu0 0.0
    %2884 = vmatpush1.msra.mxu0 0.0
    %2885 = vmatprep.subr.mxu0 0.0
    %2886 = vmatpush1.msra.mxu0 0.0
    %2887 = vmatprep.subr.mxu0 0.0
    %2888 = vmatpush1.msra.mxu0 0.0
    %2889 = vmatprep.subr.mxu0 0.0
    %2890 = vmatpush1.msra.mxu0 0.0
    %2891 = vmatprep.subr.mxu0 0.0
    %2892 = vmatpush1.msra.mxu0 0.0
    %2893 = vmatprep.subr.mxu0 0.0
    %2894 = vmatpush1.msra.mxu0 0.0
    %2895 = vmatprep.subr.mxu0 0.0
    %2896 = vmatpush1.msra.mxu0 0.0
    %2897 = vmatprep.subr.mxu0 0.0
    %2898 = vmatpush1.msra.mxu0 0.0
    %2899 = vmatprep.mubr.f32.mxu0 0.0
    %2900 = vmatmul.mubr.f32.gmra.mrb[0].mxu0 %v2833
    %v2901 = vpop.f32.mrb[0].mxu0
    %v2902 = vadd.f32 0.0, %v2901
    %v2903 = vpop.f32.mrb[0].mxu0
    %2904 = vdwg.mxu0
    %v2905 = vadd.f32 %v2832, %v2902
    %v2906 = vxor.u32 %v2905, 2147483648
    %v2907 = vmul.f32 %v2906, 1.442695
    %v2908 = vpow.pop %v2907
    %v2909 = vadd.f32 %v2908, 1.0
    %v2910 = vrcp.pop %v2909
    %v2911 = vmul.f32 1.0, %v2910
    %v2912 = vtanh.pop %v2905
    %v2913 = vmul.f32 %v2911, %v2820
    %2915 = vrot.lane.b32.xlu0 %v2912, 64
    %v2916 = vpop.permute.xlu0 %2915
    %v2918 = vmul.f32 %v2911, %v2916
    %2920 = vrot.lane.b32.xlu0 %v2918, 32
    %v2921 = vpop.permute.xlu0 %2920
    %v2923 = vadd.f32 %v2913, %v2921
    %v2924 = vtanh.pop %v2923
    %2926 = vrot.lane.b32.xlu0 %v2924, 64
    %v2927 = vpop.permute.xlu0 %2926
    %v2929 = vmul.f32 %v2911, %v2927
    %2931 = vrot.lane.b32.xlu0 %v2929, 32
    %v2932 = vpop.permute.xlu0 %2931
    %2934 = vst.msk [vmem:[#allocation12 + $0xe] sm:$0x3] %vm300, %v2932
    %s2935 = scalar_lea.vmem [#allocation13], 4
    %2936 = vst.msk [vmem:[%s2935] sm:$0x3] %vm300, %v2932
    %2938 = vrot.lane.b32.xlu0 %v2923, 96
    %v2939 = vpop.permute.xlu0 %2938
    %s2941 = scalar_lea.vmem [#allocation15], 4
    %2942 = vst.msk [vmem:[%s2941] sm:$0x3] %vm300, %v2939
    %s2943 = scalar_lea.vmem [#allocation7], 192
    %v2944 = vld [vmem:[%s2943] sm:$0xff]
    %v2945 = vld [vmem:[%s2943 + $0x8] sm:$0xff]
    %v2946 = vld [vmem:[%s2943 + $0x10] sm:$0xff]
    %v2947 = vld [vmem:[%s2943 + $0x18] sm:$0xff]
    %v2948 = vld [vmem:[%s2943 + $0x20] sm:$0xff]
    %v2949 = vld [vmem:[%s2943 + $0x28] sm:$0xff]
    %v2950 = vld [vmem:[%s2943 + $0x30] sm:$0xff]
    %v2951 = vld [vmem:[%s2943 + $0x38] sm:$0xff]
    %s2952 = scalar_lea.vmem [#allocation9], 96
    %v2953 = vld [vmem:[%s2952] sm:$0xff]
    %v2954 = vld [vmem:[%s2952 + $0x8] sm:$0xff]
    %v2955 = vld [vmem:[%s2952 + $0x10] sm:$0xff]
    %v2956 = vld [vmem:[%s2952 + $0x18] sm:$0xff]
    %s2957 = scalar_lea.vmem [#allocation10], 3
    %v2958 = vld [vmem:[%s2957] sm:$0x1]
    %v2959 = vld [vmem:[#allocation2] sm:$0xff]
    %v2960 = vld [vmem:[#allocation2 + $0x8] sm:$0xff]
    %v2962 = vlaneseq
    %v2963 = vshrl.u32 %v2962, 7
    %v2964 = vsub.s32 0, %v2963
    %v2965 = vrot.slane %v2958, %v2964
    %v2968 = vsel %vm83, %v2959, 0
    %v2971 = vsel %vm83, %v2960, 0
    %2973 = vmatprep.subr.mxu0 0.0
    %2974 = vmatpush1.msra.mxu0 %v2944
    %2975 = vmatprep.subr.mxu0 0.0
    %2976 = vmatpush1.msra.mxu0 %v2945
    %2977 = vmatprep.subr.mxu0 0.0
    %2978 = vmatpush1.msra.mxu0 %v2946
    %2979 = vmatprep.subr.mxu0 0.0
    %2980 = vmatpush1.msra.mxu0 %v2947
    %2981 = vmatprep.subr.mxu0 0.0
    %2982 = vmatpush1.msra.mxu0 %v2948
    %2983 = vmatprep.subr.mxu0 0.0
    %2984 = vmatpush1.msra.mxu0 %v2949
    %2985 = vmatprep.subr.mxu0 0.0
    %2986 = vmatpush1.msra.mxu0 %v2950
    %2987 = vmatprep.subr.mxu0 0.0
    %2988 = vmatpush1.msra.mxu0 %v2951
    %2989 = vmatprep.subr.mxu0 0.0
    %2990 = vmatpush1.msra.mxu0 0.0
    %2991 = vmatprep.subr.mxu0 0.0
    %2992 = vmatpush1.msra.mxu0 0.0
    %2993 = vmatprep.subr.mxu0 0.0
    %2994 = vmatpush1.msra.mxu0 0.0
    %2995 = vmatprep.subr.mxu0 0.0
    %2996 = vmatpush1.msra.mxu0 0.0
    %2997 = vmatprep.subr.mxu0 0.0
    %2998 = vmatpush1.msra.mxu0 0.0
    %2999 = vmatprep.subr.mxu0 0.0
    %3000 = vmatpush1.msra.mxu0 0.0
    %3001 = vmatprep.subr.mxu0 0.0
    %3002 = vmatpush1.msra.mxu0 0.0
    %3003 = vmatprep.subr.mxu0 0.0
    %3004 = vmatpush1.msra.mxu0 0.0
    %3005 = vmatprep.subr.mxu0 0.0
    %3006 = vmatpush1.msra.mxu0 0.0
    %3007 = vmatprep.subr.mxu0 0.0
    %3008 = vmatpush1.msra.mxu0 0.0
    %3009 = vmatprep.subr.mxu0 0.0
    %3010 = vmatpush1.msra.mxu0 0.0
    %3011 = vmatprep.subr.mxu0 0.0
    %3012 = vmatpush1.msra.mxu0 0.0
    %3013 = vmatprep.subr.mxu0 0.0
    %3014 = vmatpush1.msra.mxu0 0.0
    %3015 = vmatprep.subr.mxu0 0.0
    %3016 = vmatpush1.msra.mxu0 0.0
    %3017 = vmatprep.subr.mxu0 0.0
    %3018 = vmatpush1.msra.mxu0 0.0
    %3019 = vmatprep.subr.mxu0 0.0
    %3020 = vmatpush1.msra.mxu0 0.0
    %3021 = vmatprep.subr.mxu0 0.0
    %3022 = vmatpush1.msra.mxu0 0.0
    %3023 = vmatprep.subr.mxu0 0.0
    %3024 = vmatpush1.msra.mxu0 0.0
    %3025 = vmatprep.subr.mxu0 0.0
    %3026 = vmatpush1.msra.mxu0 0.0
    %3027 = vmatprep.subr.mxu0 0.0
    %3028 = vmatpush1.msra.mxu0 0.0
    %3029 = vmatprep.subr.mxu0 0.0
    %3030 = vmatpush1.msra.mxu0 0.0
    %3031 = vmatprep.subr.mxu0 0.0
    %3032 = vmatpush1.msra.mxu0 0.0
    %3033 = vmatprep.subr.mxu0 0.0
    %3034 = vmatpush1.msra.mxu0 0.0
    %3035 = vmatprep.subr.mxu0 0.0
    %3036 = vmatpush1.msra.mxu0 0.0
    %3037 = vmatprep.mubr.f32.mxu0 0.0
    %3038 = vmatmul.mubr.f32.gmra.mrb[0].mxu0 %v2968
    %v3039 = vpop.f32.mrb[0].mxu0
    %v3040 = vadd.f32 %v2965, %v3039
    %v3041 = vpop.f32.mrb[0].mxu0
    %3042 = vmatprep.mubr.f32.mxu0 0.0
    %3043 = vmatmul.mubr.f32.gmra.mrb[0].mxu0 %v2971
    %v3044 = vpop.f32.mrb[0].mxu0
    %v3045 = vadd.f32 %v2965, %v3044
    %v3046 = vpop.f32.mrb[0].mxu0
    %3047 = vdwg.mxu0
    %3048 = vst [vmem:[#allocation3] sm:$0xff] %v3040
    %3049 = vst [vmem:[#allocation3 + $0x8] sm:$0xff] %v3045
    %s3050 = scalar_lea.vmem %s4, 6
    %v3051 = vld [vmem:[%s3050] sm:$0x3]
    %s3052 = scalar_lea.vmem %s5, 6
    %v3053 = vld [vmem:[%s3052] sm:$0x3]
    %v3054 = vld [vmem:[#allocation3 + $0xe] sm:$0x3]
    %v3056 = vsel %vm193, %v3051, 0
    %3058 = vmatprep.subr.mxu0 0.0
    %3059 = vmatpush1.msra.mxu0 %v2953
    %3060 = vmatprep.subr.mxu0 0.0
    %3061 = vmatpush1.msra.mxu0 %v2954
    %3062 = vmatprep.subr.mxu0 0.0
    %3063 = vmatpush1.msra.mxu0 %v2955
    %3064 = vmatprep.subr.mxu0 0.0
    %3065 = vmatpush1.msra.mxu0 %v2956
    %3066 = vmatprep.subr.mxu0 0.0
    %3067 = vmatpush1.msra.mxu0 0.0
    %3068 = vmatprep.subr.mxu0 0.0
    %3069 = vmatpush1.msra.mxu0 0.0
    %3070 = vmatprep.subr.mxu0 0.0
    %3071 = vmatpush1.msra.mxu0 0.0
    %3072 = vmatprep.subr.mxu0 0.0
    %3073 = vmatpush1.msra.mxu0 0.0
    %3074 = vmatprep.subr.mxu0 0.0
    %3075 = vmatpush1.msra.mxu0 0.0
    %3076 = vmatprep.subr.mxu0 0.0
    %3077 = vmatpush1.msra.mxu0 0.0
    %3078 = vmatprep.subr.mxu0 0.0
    %3079 = vmatpush1.msra.mxu0 0.0
    %3080 = vmatprep.subr.mxu0 0.0
    %3081 = vmatpush1.msra.mxu0 0.0
    %3082 = vmatprep.subr.mxu0 0.0
    %3083 = vmatpush1.msra.mxu0 0.0
    %3084 = vmatprep.subr.mxu0 0.0
    %3085 = vmatpush1.msra.mxu0 0.0
    %3086 = vmatprep.subr.mxu0 0.0
    %3087 = vmatpush1.msra.mxu0 0.0
    %3088 = vmatprep.subr.mxu0 0.0
    %3089 = vmatpush1.msra.mxu0 0.0
    %3090 = vmatprep.subr.mxu0 0.0
    %3091 = vmatpush1.msra.mxu0 0.0
    %3092 = vmatprep.subr.mxu0 0.0
    %3093 = vmatpush1.msra.mxu0 0.0
    %3094 = vmatprep.subr.mxu0 0.0
    %3095 = vmatpush1.msra.mxu0 0.0
    %3096 = vmatprep.subr.mxu0 0.0
    %3097 = vmatpush1.msra.mxu0 0.0
    %3098 = vmatprep.subr.mxu0 0.0
    %3099 = vmatpush1.msra.mxu0 0.0
    %3100 = vmatprep.subr.mxu0 0.0
    %3101 = vmatpush1.msra.mxu0 0.0
    %3102 = vmatprep.subr.mxu0 0.0
    %3103 = vmatpush1.msra.mxu0 0.0
    %3104 = vmatprep.subr.mxu0 0.0
    %3105 = vmatpush1.msra.mxu0 0.0
    %3106 = vmatprep.subr.mxu0 0.0
    %3107 = vmatpush1.msra.mxu0 0.0
    %3108 = vmatprep.subr.mxu0 0.0
    %3109 = vmatpush1.msra.mxu0 0.0
    %3110 = vmatprep.subr.mxu0 0.0
    %3111 = vmatpush1.msra.mxu0 0.0
    %3112 = vmatprep.subr.mxu0 0.0
    %3113 = vmatpush1.msra.mxu0 0.0
    %3114 = vmatprep.subr.mxu0 0.0
    %3115 = vmatpush1.msra.mxu0 0.0
    %3116 = vmatprep.subr.mxu0 0.0
    %3117 = vmatpush1.msra.mxu0 0.0
    %3118 = vmatprep.subr.mxu0 0.0
    %3119 = vmatpush1.msra.mxu0 0.0
    %3120 = vmatprep.subr.mxu0 0.0
    %3121 = vmatpush1.msra.mxu0 0.0
    %3122 = vmatprep.mubr.f32.mxu0 0.0
    %3123 = vmatmul.mubr.f32.gmra.mrb[0].mxu0 %v3056
    %v3124 = vpop.f32.mrb[0].mxu0
    %v3125 = vadd.f32 0.0, %v3124
    %v3126 = vpop.f32.mrb[0].mxu0
    %3127 = vdwg.mxu0
    %v3128 = vadd.f32 %v3054, %v3125
    %v3129 = vxor.u32 %v3128, 2147483648
    %v3130 = vmul.f32 %v3129, 1.442695
    %v3131 = vpow.pop %v3130
    %v3132 = vadd.f32 %v3131, 1.0
    %v3133 = vrcp.pop %v3132
    %v3134 = vmul.f32 1.0, %v3133
    %v3135 = vtanh.pop %v3128
    %3137 = vrot.lane.b32.xlu0 %v3053, 32
    %v3138 = vpop.permute.xlu0 %3137
    %v3140 = vmul.f32 %v3134, %v3138
    %3142 = vrot.lane.b32.xlu0 %v3135, 64
    %v3143 = vpop.permute.xlu0 %3142
    %v3145 = vmul.f32 %v3134, %v3143
    %3147 = vrot.lane.b32.xlu0 %v3145, 32
    %v3148 = vpop.permute.xlu0 %3147
    %v3150 = vadd.f32 %v3140, %v3148
    %v3151 = vtanh.pop %v3150
    %3153 = vrot.lane.b32.xlu0 %v3151, 64
    %v3154 = vpop.permute.xlu0 %3153
    %v3156 = vmul.f32 %v3134, %v3154
    %3158 = vrot.lane.b32.xlu0 %v3156, 64
    %v3159 = vpop.permute.xlu0 %3158
    %3161 = vst.msk [vmem:[#allocation12 + $0xe] sm:$0x3] %vm1247, %v3159
    %v3162 = vld [vmem:[#allocation3 + $0xc] sm:$0x3]
    %3163 = vrot.lane.b32.xlu0 %v3156, 32
    %v3164 = vpop.permute.xlu0 %3163
    %v3165 = vsel %vm193, %v3164, 0
    %3167 = vmatprep.subr.mxu0 0.0
    %3168 = vmatpush1.msra.mxu0 %v2953
    %3169 = vmatprep.subr.mxu0 0.0
    %3170 = vmatpush1.msra.mxu0 %v2954
    %3171 = vmatprep.subr.mxu0 0.0
    %3172 = vmatpush1.msra.mxu0 %v2955
    %3173 = vmatprep.subr.mxu0 0.0
    %3174 = vmatpush1.msra.mxu0 %v2956
    %3175 = vmatprep.subr.mxu0 0.0
    %3176 = vmatpush1.msra.mxu0 0.0
    %3177 = vmatprep.subr.mxu0 0.0
    %3178 = vmatpush1.msra.mxu0 0.0
    %3179 = vmatprep.subr.mxu0 0.0
    %3180 = vmatpush1.msra.mxu0 0.0
    %3181 = vmatprep.subr.mxu0 0.0
    %3182 = vmatpush1.msra.mxu0 0.0
    %3183 = vmatprep.subr.mxu0 0.0
    %3184 = vmatpush1.msra.mxu0 0.0
    %3185 = vmatprep.subr.mxu0 0.0
    %3186 = vmatpush1.msra.mxu0 0.0
    %3187 = vmatprep.subr.mxu0 0.0
    %3188 = vmatpush1.msra.mxu0 0.0
    %3189 = vmatprep.subr.mxu0 0.0
    %3190 = vmatpush1.msra.mxu0 0.0
    %3191 = vmatprep.subr.mxu0 0.0
    %3192 = vmatpush1.msra.mxu0 0.0
    %3193 = vmatprep.subr.mxu0 0.0
    %3194 = vmatpush1.msra.mxu0 0.0
    %3195 = vmatprep.subr.mxu0 0.0
    %3196 = vmatpush1.msra.mxu0 0.0
    %3197 = vmatprep.subr.mxu0 0.0
    %3198 = vmatpush1.msra.mxu0 0.0
    %3199 = vmatprep.subr.mxu0 0.0
    %3200 = vmatpush1.msra.mxu0 0.0
    %3201 = vmatprep.subr.mxu0 0.0
    %3202 = vmatpush1.msra.mxu0 0.0
    %3203 = vmatprep.subr.mxu0 0.0
    %3204 = vmatpush1.msra.mxu0 0.0
    %3205 = vmatprep.subr.mxu0 0.0
    %3206 = vmatpush1.msra.mxu0 0.0
    %3207 = vmatprep.subr.mxu0 0.0
    %3208 = vmatpush1.msra.mxu0 0.0
    %3209 = vmatprep.subr.mxu0 0.0
    %3210 = vmatpush1.msra.mxu0 0.0
    %3211 = vmatprep.subr.mxu0 0.0
    %3212 = vmatpush1.msra.mxu0 0.0
    %3213 = vmatprep.subr.mxu0 0.0
    %3214 = vmatpush1.msra.mxu0 0.0
    %3215 = vmatprep.subr.mxu0 0.0
    %3216 = vmatpush1.msra.mxu0 0.0
    %3217 = vmatprep.subr.mxu0 0.0
    %3218 = vmatpush1.msra.mxu0 0.0
    %3219 = vmatprep.subr.mxu0 0.0
    %3220 = vmatpush1.msra.mxu0 0.0
    %3221 = vmatprep.subr.mxu0 0.0
    %3222 = vmatpush1.msra.mxu0 0.0
    %3223 = vmatprep.subr.mxu0 0.0
    %3224 = vmatpush1.msra.mxu0 0.0
    %3225 = vmatprep.subr.mxu0 0.0
    %3226 = vmatpush1.msra.mxu0 0.0
    %3227 = vmatprep.subr.mxu0 0.0
    %3228 = vmatpush1.msra.mxu0 0.0
    %3229 = vmatprep.subr.mxu0 0.0
    %3230 = vmatpush1.msra.mxu0 0.0
    %3231 = vmatprep.mubr.f32.mxu0 0.0
    %3232 = vmatmul.mubr.f32.gmra.mrb[0].mxu0 %v3165
    %v3233 = vpop.f32.mrb[0].mxu0
    %v3234 = vadd.f32 0.0, %v3233
    %v3235 = vpop.f32.mrb[0].mxu0
    %3236 = vdwg.mxu0
    %v3237 = vadd.f32 %v3162, %v3234
    %v3238 = vxor.u32 %v3237, 2147483648
    %v3239 = vmul.f32 %v3238, 1.442695
    %v3240 = vpow.pop %v3239
    %v3241 = vadd.f32 %v3240, 1.0
    %v3242 = vrcp.pop %v3241
    %v3243 = vmul.f32 1.0, %v3242
    %v3244 = vtanh.pop %v3237
    %v3245 = vmul.f32 %v3243, %v3150
    %3247 = vrot.lane.b32.xlu0 %v3244, 64
    %v3248 = vpop.permute.xlu0 %3247
    %v3250 = vmul.f32 %v3243, %v3248
    %3252 = vrot.lane.b32.xlu0 %v3250, 32
    %v3253 = vpop.permute.xlu0 %3252
    %v3255 = vadd.f32 %v3245, %v3253
    %v3256 = vtanh.pop %v3255
    %3258 = vrot.lane.b32.xlu0 %v3256, 64
    %v3259 = vpop.permute.xlu0 %3258
    %v3261 = vmul.f32 %v3243, %v3259
    %3263 = vrot.lane.b32.xlu0 %v3261, 64
    %v3264 = vpop.permute.xlu0 %3263
    %3266 = vst.msk [vmem:[#allocation12 + $0xc] sm:$0x3] %vm1247, %v3264
    %v3267 = vld [vmem:[#allocation3 + $0xa] sm:$0x3]
    %3268 = vrot.lane.b32.xlu0 %v3261, 32
    %v3269 = vpop.permute.xlu0 %3268
    %v3270 = vsel %vm193, %v3269, 0
    %3272 = vmatprep.subr.mxu0 0.0
    %3273 = vmatpush1.msra.mxu0 %v2953
    %3274 = vmatprep.subr.mxu0 0.0
    %3275 = vmatpush1.msra.mxu0 %v2954
    %3276 = vmatprep.subr.mxu0 0.0
    %3277 = vmatpush1.msra.mxu0 %v2955
    %3278 = vmatprep.subr.mxu0 0.0
    %3279 = vmatpush1.msra.mxu0 %v2956
    %3280 = vmatprep.subr.mxu0 0.0
    %3281 = vmatpush1.msra.mxu0 0.0
    %3282 = vmatprep.subr.mxu0 0.0
    %3283 = vmatpush1.msra.mxu0 0.0
    %3284 = vmatprep.subr.mxu0 0.0
    %3285 = vmatpush1.msra.mxu0 0.0
    %3286 = vmatprep.subr.mxu0 0.0
    %3287 = vmatpush1.msra.mxu0 0.0
    %3288 = vmatprep.subr.mxu0 0.0
    %3289 = vmatpush1.msra.mxu0 0.0
    %3290 = vmatprep.subr.mxu0 0.0
    %3291 = vmatpush1.msra.mxu0 0.0
    %3292 = vmatprep.subr.mxu0 0.0
    %3293 = vmatpush1.msra.mxu0 0.0
    %3294 = vmatprep.subr.mxu0 0.0
    %3295 = vmatpush1.msra.mxu0 0.0
    %3296 = vmatprep.subr.mxu0 0.0
    %3297 = vmatpush1.msra.mxu0 0.0
    %3298 = vmatprep.subr.mxu0 0.0
    %3299 = vmatpush1.msra.mxu0 0.0
    %3300 = vmatprep.subr.mxu0 0.0
    %3301 = vmatpush1.msra.mxu0 0.0
    %3302 = vmatprep.subr.mxu0 0.0
    %3303 = vmatpush1.msra.mxu0 0.0
    %3304 = vmatprep.subr.mxu0 0.0
    %3305 = vmatpush1.msra.mxu0 0.0
    %3306 = vmatprep.subr.mxu0 0.0
    %3307 = vmatpush1.msra.mxu0 0.0
    %3308 = vmatprep.subr.mxu0 0.0
    %3309 = vmatpush1.msra.mxu0 0.0
    %3310 = vmatprep.subr.mxu0 0.0
    %3311 = vmatpush1.msra.mxu0 0.0
    %3312 = vmatprep.subr.mxu0 0.0
    %3313 = vmatpush1.msra.mxu0 0.0
    %3314 = vmatprep.subr.mxu0 0.0
    %3315 = vmatpush1.msra.mxu0 0.0
    %3316 = vmatprep.subr.mxu0 0.0
    %3317 = vmatpush1.msra.mxu0 0.0
    %3318 = vmatprep.subr.mxu0 0.0
    %3319 = vmatpush1.msra.mxu0 0.0
    %3320 = vmatprep.subr.mxu0 0.0
    %3321 = vmatpush1.msra.mxu0 0.0
    %3322 = vmatprep.subr.mxu0 0.0
    %3323 = vmatpush1.msra.mxu0 0.0
    %3324 = vmatprep.subr.mxu0 0.0
    %3325 = vmatpush1.msra.mxu0 0.0
    %3326 = vmatprep.subr.mxu0 0.0
    %3327 = vmatpush1.msra.mxu0 0.0
    %3328 = vmatprep.subr.mxu0 0.0
    %3329 = vmatpush1.msra.mxu0 0.0
    %3330 = vmatprep.subr.mxu0 0.0
    %3331 = vmatpush1.msra.mxu0 0.0
    %3332 = vmatprep.subr.mxu0 0.0
    %3333 = vmatpush1.msra.mxu0 0.0
    %3334 = vmatprep.subr.mxu0 0.0
    %3335 = vmatpush1.msra.mxu0 0.0
    %3336 = vmatprep.mubr.f32.mxu0 0.0
    %3337 = vmatmul.mubr.f32.gmra.mrb[0].mxu0 %v3270
    %v3338 = vpop.f32.mrb[0].mxu0
    %v3339 = vadd.f32 0.0, %v3338
    %v3340 = vpop.f32.mrb[0].mxu0
    %3341 = vdwg.mxu0
    %v3342 = vadd.f32 %v3267, %v3339
    %v3343 = vxor.u32 %v3342, 2147483648
    %v3344 = vmul.f32 %v3343, 1.442695
    %v3345 = vpow.pop %v3344
    %v3346 = vadd.f32 %v3345, 1.0
    %v3347 = vrcp.pop %v3346
    %v3348 = vmul.f32 1.0, %v3347
    %v3349 = vtanh.pop %v3342
    %v3350 = vmul.f32 %v3348, %v3255
    %3352 = vrot.lane.b32.xlu0 %v3349, 64
    %v3353 = vpop.permute.xlu0 %3352
    %v3355 = vmul.f32 %v3348, %v3353
    %3357 = vrot.lane.b32.xlu0 %v3355, 32
    %v3358 = vpop.permute.xlu0 %3357
    %v3360 = vadd.f32 %v3350, %v3358
    %v3361 = vtanh.pop %v3360
    %3363 = vrot.lane.b32.xlu0 %v3361, 64
    %v3364 = vpop.permute.xlu0 %3363
    %v3366 = vmul.f32 %v3348, %v3364
    %3368 = vrot.lane.b32.xlu0 %v3366, 64
    %v3369 = vpop.permute.xlu0 %3368
    %3371 = vst.msk [vmem:[#allocation12 + $0xa] sm:$0x3] %vm1247, %v3369
    %v3372 = vld [vmem:[#allocation3 + $0x8] sm:$0x3]
    %3373 = vrot.lane.b32.xlu0 %v3366, 32
    %v3374 = vpop.permute.xlu0 %3373
    %v3375 = vsel %vm193, %v3374, 0
    %3377 = vmatprep.subr.mxu0 0.0
    %3378 = vmatpush1.msra.mxu0 %v2953
    %3379 = vmatprep.subr.mxu0 0.0
    %3380 = vmatpush1.msra.mxu0 %v2954
    %3381 = vmatprep.subr.mxu0 0.0
    %3382 = vmatpush1.msra.mxu0 %v2955
    %3383 = vmatprep.subr.mxu0 0.0
    %3384 = vmatpush1.msra.mxu0 %v2956
    %3385 = vmatprep.subr.mxu0 0.0
    %3386 = vmatpush1.msra.mxu0 0.0
    %3387 = vmatprep.subr.mxu0 0.0
    %3388 = vmatpush1.msra.mxu0 0.0
    %3389 = vmatprep.subr.mxu0 0.0
    %3390 = vmatpush1.msra.mxu0 0.0
    %3391 = vmatprep.subr.mxu0 0.0
    %3392 = vmatpush1.msra.mxu0 0.0
    %3393 = vmatprep.subr.mxu0 0.0
    %3394 = vmatpush1.msra.mxu0 0.0
    %3395 = vmatprep.subr.mxu0 0.0
    %3396 = vmatpush1.msra.mxu0 0.0
    %3397 = vmatprep.subr.mxu0 0.0
    %3398 = vmatpush1.msra.mxu0 0.0
    %3399 = vmatprep.subr.mxu0 0.0
    %3400 = vmatpush1.msra.mxu0 0.0
    %3401 = vmatprep.subr.mxu0 0.0
    %3402 = vmatpush1.msra.mxu0 0.0
    %3403 = vmatprep.subr.mxu0 0.0
    %3404 = vmatpush1.msra.mxu0 0.0
    %3405 = vmatprep.subr.mxu0 0.0
    %3406 = vmatpush1.msra.mxu0 0.0
    %3407 = vmatprep.subr.mxu0 0.0
    %3408 = vmatpush1.msra.mxu0 0.0
    %3409 = vmatprep.subr.mxu0 0.0
    %3410 = vmatpush1.msra.mxu0 0.0
    %3411 = vmatprep.subr.mxu0 0.0
    %3412 = vmatpush1.msra.mxu0 0.0
    %3413 = vmatprep.subr.mxu0 0.0
    %3414 = vmatpush1.msra.mxu0 0.0
    %3415 = vmatprep.subr.mxu0 0.0
    %3416 = vmatpush1.msra.mxu0 0.0
    %3417 = vmatprep.subr.mxu0 0.0
    %3418 = vmatpush1.msra.mxu0 0.0
    %3419 = vmatprep.subr.mxu0 0.0
    %3420 = vmatpush1.msra.mxu0 0.0
    %3421 = vmatprep.subr.mxu0 0.0
    %3422 = vmatpush1.msra.mxu0 0.0
    %3423 = vmatprep.subr.mxu0 0.0
    %3424 = vmatpush1.msra.mxu0 0.0
    %3425 = vmatprep.subr.mxu0 0.0
    %3426 = vmatpush1.msra.mxu0 0.0
    %3427 = vmatprep.subr.mxu0 0.0
    %3428 = vmatpush1.msra.mxu0 0.0
    %3429 = vmatprep.subr.mxu0 0.0
    %3430 = vmatpush1.msra.mxu0 0.0
    %3431 = vmatprep.subr.mxu0 0.0
    %3432 = vmatpush1.msra.mxu0 0.0
    %3433 = vmatprep.subr.mxu0 0.0
    %3434 = vmatpush1.msra.mxu0 0.0
    %3435 = vmatprep.subr.mxu0 0.0
    %3436 = vmatpush1.msra.mxu0 0.0
    %3437 = vmatprep.subr.mxu0 0.0
    %3438 = vmatpush1.msra.mxu0 0.0
    %3439 = vmatprep.subr.mxu0 0.0
    %3440 = vmatpush1.msra.mxu0 0.0
    %3441 = vmatprep.mubr.f32.mxu0 0.0
    %3442 = vmatmul.mubr.f32.gmra.mrb[0].mxu0 %v3375
    %v3443 = vpop.f32.mrb[0].mxu0
    %v3444 = vadd.f32 0.0, %v3443
    %v3445 = vpop.f32.mrb[0].mxu0
    %3446 = vdwg.mxu0
    %v3447 = vadd.f32 %v3372, %v3444
    %v3448 = vxor.u32 %v3447, 2147483648
    %v3449 = vmul.f32 %v3448, 1.442695
    %v3450 = vpow.pop %v3449
    %v3451 = vadd.f32 %v3450, 1.0
    %v3452 = vrcp.pop %v3451
    %v3453 = vmul.f32 1.0, %v3452
    %v3454 = vtanh.pop %v3447
    %v3455 = vmul.f32 %v3453, %v3360
    %3457 = vrot.lane.b32.xlu0 %v3454, 64
    %v3458 = vpop.permute.xlu0 %3457
    %v3460 = vmul.f32 %v3453, %v3458
    %3462 = vrot.lane.b32.xlu0 %v3460, 32
    %v3463 = vpop.permute.xlu0 %3462
    %v3465 = vadd.f32 %v3455, %v3463
    %v3466 = vtanh.pop %v3465
    %3468 = vrot.lane.b32.xlu0 %v3466, 64
    %v3469 = vpop.permute.xlu0 %3468
    %v3471 = vmul.f32 %v3453, %v3469
    %3473 = vrot.lane.b32.xlu0 %v3471, 64
    %v3474 = vpop.permute.xlu0 %3473
    %3476 = vst.msk [vmem:[#allocation12 + $0x8] sm:$0x3] %vm1247, %v3474
    %v3477 = vld [vmem:[#allocation3 + $0x6] sm:$0x3]
    %3478 = vrot.lane.b32.xlu0 %v3471, 32
    %v3479 = vpop.permute.xlu0 %3478
    %v3480 = vsel %vm193, %v3479, 0
    %3482 = vmatprep.subr.mxu0 0.0
    %3483 = vmatpush1.msra.mxu0 %v2953
    %3484 = vmatprep.subr.mxu0 0.0
    %3485 = vmatpush1.msra.mxu0 %v2954
    %3486 = vmatprep.subr.mxu0 0.0
    %3487 = vmatpush1.msra.mxu0 %v2955
    %3488 = vmatprep.subr.mxu0 0.0
    %3489 = vmatpush1.msra.mxu0 %v2956
    %3490 = vmatprep.subr.mxu0 0.0
    %3491 = vmatpush1.msra.mxu0 0.0
    %3492 = vmatprep.subr.mxu0 0.0
    %3493 = vmatpush1.msra.mxu0 0.0
    %3494 = vmatprep.subr.mxu0 0.0
    %3495 = vmatpush1.msra.mxu0 0.0
    %3496 = vmatprep.subr.mxu0 0.0
    %3497 = vmatpush1.msra.mxu0 0.0
    %3498 = vmatprep.subr.mxu0 0.0
    %3499 = vmatpush1.msra.mxu0 0.0
    %3500 = vmatprep.subr.mxu0 0.0
    %3501 = vmatpush1.msra.mxu0 0.0
    %3502 = vmatprep.subr.mxu0 0.0
    %3503 = vmatpush1.msra.mxu0 0.0
    %3504 = vmatprep.subr.mxu0 0.0
    %3505 = vmatpush1.msra.mxu0 0.0
    %3506 = vmatprep.subr.mxu0 0.0
    %3507 = vmatpush1.msra.mxu0 0.0
    %3508 = vmatprep.subr.mxu0 0.0
    %3509 = vmatpush1.msra.mxu0 0.0
    %3510 = vmatprep.subr.mxu0 0.0
    %3511 = vmatpush1.msra.mxu0 0.0
    %3512 = vmatprep.subr.mxu0 0.0
    %3513 = vmatpush1.msra.mxu0 0.0
    %3514 = vmatprep.subr.mxu0 0.0
    %3515 = vmatpush1.msra.mxu0 0.0
    %3516 = vmatprep.subr.mxu0 0.0
    %3517 = vmatpush1.msra.mxu0 0.0
    %3518 = vmatprep.subr.mxu0 0.0
    %3519 = vmatpush1.msra.mxu0 0.0
    %3520 = vmatprep.subr.mxu0 0.0
    %3521 = vmatpush1.msra.mxu0 0.0
    %3522 = vmatprep.subr.mxu0 0.0
    %3523 = vmatpush1.msra.mxu0 0.0
    %3524 = vmatprep.subr.mxu0 0.0
    %3525 = vmatpush1.msra.mxu0 0.0
    %3526 = vmatprep.subr.mxu0 0.0
    %3527 = vmatpush1.msra.mxu0 0.0
    %3528 = vmatprep.subr.mxu0 0.0
    %3529 = vmatpush1.msra.mxu0 0.0
    %3530 = vmatprep.subr.mxu0 0.0
    %3531 = vmatpush1.msra.mxu0 0.0
    %3532 = vmatprep.subr.mxu0 0.0
    %3533 = vmatpush1.msra.mxu0 0.0
    %3534 = vmatprep.subr.mxu0 0.0
    %3535 = vmatpush1.msra.mxu0 0.0
    %3536 = vmatprep.subr.mxu0 0.0
    %3537 = vmatpush1.msra.mxu0 0.0
    %3538 = vmatprep.subr.mxu0 0.0
    %3539 = vmatpush1.msra.mxu0 0.0
    %3540 = vmatprep.subr.mxu0 0.0
    %3541 = vmatpush1.msra.mxu0 0.0
    %3542 = vmatprep.subr.mxu0 0.0
    %3543 = vmatpush1.msra.mxu0 0.0
    %3544 = vmatprep.subr.mxu0 0.0
    %3545 = vmatpush1.msra.mxu0 0.0
    %3546 = vmatprep.mubr.f32.mxu0 0.0
    %3547 = vmatmul.mubr.f32.gmra.mrb[0].mxu0 %v3480
    %v3548 = vpop.f32.mrb[0].mxu0
    %v3549 = vadd.f32 0.0, %v3548
    %v3550 = vpop.f32.mrb[0].mxu0
    %3551 = vdwg.mxu0
    %v3552 = vadd.f32 %v3477, %v3549
    %v3553 = vxor.u32 %v3552, 2147483648
    %v3554 = vmul.f32 %v3553, 1.442695
    %v3555 = vpow.pop %v3554
    %v3556 = vadd.f32 %v3555, 1.0
    %v3557 = vrcp.pop %v3556
    %v3558 = vmul.f32 1.0, %v3557
    %v3559 = vtanh.pop %v3552
    %v3560 = vmul.f32 %v3558, %v3465
    %3562 = vrot.lane.b32.xlu0 %v3559, 64
    %v3563 = vpop.permute.xlu0 %3562
    %v3565 = vmul.f32 %v3558, %v3563
    %3567 = vrot.lane.b32.xlu0 %v3565, 32
    %v3568 = vpop.permute.xlu0 %3567
    %v3570 = vadd.f32 %v3560, %v3568
    %v3571 = vtanh.pop %v3570
    %3573 = vrot.lane.b32.xlu0 %v3571, 64
    %v3574 = vpop.permute.xlu0 %3573
    %v3576 = vmul.f32 %v3558, %v3574
    %3578 = vrot.lane.b32.xlu0 %v3576, 64
    %v3579 = vpop.permute.xlu0 %3578
    %3581 = vst.msk [vmem:[#allocation12 + $0x6] sm:$0x3] %vm1247, %v3579
    %v3582 = vld [vmem:[#allocation3 + $0x4] sm:$0x3]
    %3583 = vrot.lane.b32.xlu0 %v3576, 32
    %v3584 = vpop.permute.xlu0 %3583
    %v3585 = vsel %vm193, %v3584, 0
    %3587 = vmatprep.subr.mxu0 0.0
    %3588 = vmatpush1.msra.mxu0 %v2953
    %3589 = vmatprep.subr.mxu0 0.0
    %3590 = vmatpush1.msra.mxu0 %v2954
    %3591 = vmatprep.subr.mxu0 0.0
    %3592 = vmatpush1.msra.mxu0 %v2955
    %3593 = vmatprep.subr.mxu0 0.0
    %3594 = vmatpush1.msra.mxu0 %v2956
    %3595 = vmatprep.subr.mxu0 0.0
    %3596 = vmatpush1.msra.mxu0 0.0
    %3597 = vmatprep.subr.mxu0 0.0
    %3598 = vmatpush1.msra.mxu0 0.0
    %3599 = vmatprep.subr.mxu0 0.0
    %3600 = vmatpush1.msra.mxu0 0.0
    %3601 = vmatprep.subr.mxu0 0.0
    %3602 = vmatpush1.msra.mxu0 0.0
    %3603 = vmatprep.subr.mxu0 0.0
    %3604 = vmatpush1.msra.mxu0 0.0
    %3605 = vmatprep.subr.mxu0 0.0
    %3606 = vmatpush1.msra.mxu0 0.0
    %3607 = vmatprep.subr.mxu0 0.0
    %3608 = vmatpush1.msra.mxu0 0.0
    %3609 = vmatprep.subr.mxu0 0.0
    %3610 = vmatpush1.msra.mxu0 0.0
    %3611 = vmatprep.subr.mxu0 0.0
    %3612 = vmatpush1.msra.mxu0 0.0
    %3613 = vmatprep.subr.mxu0 0.0
    %3614 = vmatpush1.msra.mxu0 0.0
    %3615 = vmatprep.subr.mxu0 0.0
    %3616 = vmatpush1.msra.mxu0 0.0
    %3617 = vmatprep.subr.mxu0 0.0
    %3618 = vmatpush1.msra.mxu0 0.0
    %3619 = vmatprep.subr.mxu0 0.0
    %3620 = vmatpush1.msra.mxu0 0.0
    %3621 = vmatprep.subr.mxu0 0.0
    %3622 = vmatpush1.msra.mxu0 0.0
    %3623 = vmatprep.subr.mxu0 0.0
    %3624 = vmatpush1.msra.mxu0 0.0
    %3625 = vmatprep.subr.mxu0 0.0
    %3626 = vmatpush1.msra.mxu0 0.0
    %3627 = vmatprep.subr.mxu0 0.0
    %3628 = vmatpush1.msra.mxu0 0.0
    %3629 = vmatprep.subr.mxu0 0.0
    %3630 = vmatpush1.msra.mxu0 0.0
    %3631 = vmatprep.subr.mxu0 0.0
    %3632 = vmatpush1.msra.mxu0 0.0
    %3633 = vmatprep.subr.mxu0 0.0
    %3634 = vmatpush1.msra.mxu0 0.0
    %3635 = vmatprep.subr.mxu0 0.0
    %3636 = vmatpush1.msra.mxu0 0.0
    %3637 = vmatprep.subr.mxu0 0.0
    %3638 = vmatpush1.msra.mxu0 0.0
    %3639 = vmatprep.subr.mxu0 0.0
    %3640 = vmatpush1.msra.mxu0 0.0
    %3641 = vmatprep.subr.mxu0 0.0
    %3642 = vmatpush1.msra.mxu0 0.0
    %3643 = vmatprep.subr.mxu0 0.0
    %3644 = vmatpush1.msra.mxu0 0.0
    %3645 = vmatprep.subr.mxu0 0.0
    %3646 = vmatpush1.msra.mxu0 0.0
    %3647 = vmatprep.subr.mxu0 0.0
    %3648 = vmatpush1.msra.mxu0 0.0
    %3649 = vmatprep.subr.mxu0 0.0
    %3650 = vmatpush1.msra.mxu0 0.0
    %3651 = vmatprep.mubr.f32.mxu0 0.0
    %3652 = vmatmul.mubr.f32.gmra.mrb[0].mxu0 %v3585
    %v3653 = vpop.f32.mrb[0].mxu0
    %v3654 = vadd.f32 0.0, %v3653
    %v3655 = vpop.f32.mrb[0].mxu0
    %3656 = vdwg.mxu0
    %v3657 = vadd.f32 %v3582, %v3654
    %v3658 = vxor.u32 %v3657, 2147483648
    %v3659 = vmul.f32 %v3658, 1.442695
    %v3660 = vpow.pop %v3659
    %v3661 = vadd.f32 %v3660, 1.0
    %v3662 = vrcp.pop %v3661
    %v3663 = vmul.f32 1.0, %v3662
    %v3664 = vtanh.pop %v3657
    %v3665 = vmul.f32 %v3663, %v3570
    %3667 = vrot.lane.b32.xlu0 %v3664, 64
    %v3668 = vpop.permute.xlu0 %3667
    %v3670 = vmul.f32 %v3663, %v3668
    %3672 = vrot.lane.b32.xlu0 %v3670, 32
    %v3673 = vpop.permute.xlu0 %3672
    %v3675 = vadd.f32 %v3665, %v3673
    %v3676 = vtanh.pop %v3675
    %3678 = vrot.lane.b32.xlu0 %v3676, 64
    %v3679 = vpop.permute.xlu0 %3678
    %v3681 = vmul.f32 %v3663, %v3679
    %3683 = vrot.lane.b32.xlu0 %v3681, 64
    %v3684 = vpop.permute.xlu0 %3683
    %3686 = vst.msk [vmem:[#allocation12 + $0x4] sm:$0x3] %vm1247, %v3684
    %v3687 = vld [vmem:[#allocation3 + $0x2] sm:$0x3]
    %3688 = vrot.lane.b32.xlu0 %v3681, 32
    %v3689 = vpop.permute.xlu0 %3688
    %v3690 = vsel %vm193, %v3689, 0
    %3692 = vmatprep.subr.mxu0 0.0
    %3693 = vmatpush1.msra.mxu0 %v2953
    %3694 = vmatprep.subr.mxu0 0.0
    %3695 = vmatpush1.msra.mxu0 %v2954
    %3696 = vmatprep.subr.mxu0 0.0
    %3697 = vmatpush1.msra.mxu0 %v2955
    %3698 = vmatprep.subr.mxu0 0.0
    %3699 = vmatpush1.msra.mxu0 %v2956
    %3700 = vmatprep.subr.mxu0 0.0
    %3701 = vmatpush1.msra.mxu0 0.0
    %3702 = vmatprep.subr.mxu0 0.0
    %3703 = vmatpush1.msra.mxu0 0.0
    %3704 = vmatprep.subr.mxu0 0.0
    %3705 = vmatpush1.msra.mxu0 0.0
    %3706 = vmatprep.subr.mxu0 0.0
    %3707 = vmatpush1.msra.mxu0 0.0
    %3708 = vmatprep.subr.mxu0 0.0
    %3709 = vmatpush1.msra.mxu0 0.0
    %3710 = vmatprep.subr.mxu0 0.0
    %3711 = vmatpush1.msra.mxu0 0.0
    %3712 = vmatprep.subr.mxu0 0.0
    %3713 = vmatpush1.msra.mxu0 0.0
    %3714 = vmatprep.subr.mxu0 0.0
    %3715 = vmatpush1.msra.mxu0 0.0
    %3716 = vmatprep.subr.mxu0 0.0
    %3717 = vmatpush1.msra.mxu0 0.0
    %3718 = vmatprep.subr.mxu0 0.0
    %3719 = vmatpush1.msra.mxu0 0.0
    %3720 = vmatprep.subr.mxu0 0.0
    %3721 = vmatpush1.msra.mxu0 0.0
    %3722 = vmatprep.subr.mxu0 0.0
    %3723 = vmatpush1.msra.mxu0 0.0
    %3724 = vmatprep.subr.mxu0 0.0
    %3725 = vmatpush1.msra.mxu0 0.0
    %3726 = vmatprep.subr.mxu0 0.0
    %3727 = vmatpush1.msra.mxu0 0.0
    %3728 = vmatprep.subr.mxu0 0.0
    %3729 = vmatpush1.msra.mxu0 0.0
    %3730 = vmatprep.subr.mxu0 0.0
    %3731 = vmatpush1.msra.mxu0 0.0
    %3732 = vmatprep.subr.mxu0 0.0
    %3733 = vmatpush1.msra.mxu0 0.0
    %3734 = vmatprep.subr.mxu0 0.0
    %3735 = vmatpush1.msra.mxu0 0.0
    %3736 = vmatprep.subr.mxu0 0.0
    %3737 = vmatpush1.msra.mxu0 0.0
    %3738 = vmatprep.subr.mxu0 0.0
    %3739 = vmatpush1.msra.mxu0 0.0
    %3740 = vmatprep.subr.mxu0 0.0
    %3741 = vmatpush1.msra.mxu0 0.0
    %3742 = vmatprep.subr.mxu0 0.0
    %3743 = vmatpush1.msra.mxu0 0.0
    %3744 = vmatprep.subr.mxu0 0.0
    %3745 = vmatpush1.msra.mxu0 0.0
    %3746 = vmatprep.subr.mxu0 0.0
    %3747 = vmatpush1.msra.mxu0 0.0
    %3748 = vmatprep.subr.mxu0 0.0
    %3749 = vmatpush1.msra.mxu0 0.0
    %3750 = vmatprep.subr.mxu0 0.0
    %3751 = vmatpush1.msra.mxu0 0.0
    %3752 = vmatprep.subr.mxu0 0.0
    %3753 = vmatpush1.msra.mxu0 0.0
    %3754 = vmatprep.subr.mxu0 0.0
    %3755 = vmatpush1.msra.mxu0 0.0
    %3756 = vmatprep.mubr.f32.mxu0 0.0
    %3757 = vmatmul.mubr.f32.gmra.mrb[0].mxu0 %v3690
    %v3758 = vpop.f32.mrb[0].mxu0
    %v3759 = vadd.f32 0.0, %v3758
    %v3760 = vpop.f32.mrb[0].mxu0
    %3761 = vdwg.mxu0
    %v3762 = vadd.f32 %v3687, %v3759
    %v3763 = vxor.u32 %v3762, 2147483648
    %v3764 = vmul.f32 %v3763, 1.442695
    %v3765 = vpow.pop %v3764
    %v3766 = vadd.f32 %v3765, 1.0
    %v3767 = vrcp.pop %v3766
    %v3768 = vmul.f32 1.0, %v3767
    %v3769 = vtanh.pop %v3762
    %v3770 = vmul.f32 %v3768, %v3675
    %3772 = vrot.lane.b32.xlu0 %v3769, 64
    %v3773 = vpop.permute.xlu0 %3772
    %v3775 = vmul.f32 %v3768, %v3773
    %3777 = vrot.lane.b32.xlu0 %v3775, 32
    %v3778 = vpop.permute.xlu0 %3777
    %v3780 = vadd.f32 %v3770, %v3778
    %v3781 = vtanh.pop %v3780
    %3783 = vrot.lane.b32.xlu0 %v3781, 64
    %v3784 = vpop.permute.xlu0 %3783
    %v3786 = vmul.f32 %v3768, %v3784
    %3788 = vrot.lane.b32.xlu0 %v3786, 64
    %v3789 = vpop.permute.xlu0 %3788
    %3791 = vst.msk [vmem:[#allocation12 + $0x2] sm:$0x3] %vm1247, %v3789
    %v3792 = vld [vmem:[#allocation3] sm:$0x3]
    %3793 = vrot.lane.b32.xlu0 %v3786, 32
    %v3794 = vpop.permute.xlu0 %3793
    %v3795 = vsel %vm193, %v3794, 0
    %3797 = vmatprep.subr.mxu0 0.0
    %3798 = vmatpush1.msra.mxu0 %v2953
    %3799 = vmatprep.subr.mxu0 0.0
    %3800 = vmatpush1.msra.mxu0 %v2954
    %3801 = vmatprep.subr.mxu0 0.0
    %3802 = vmatpush1.msra.mxu0 %v2955
    %3803 = vmatprep.subr.mxu0 0.0
    %3804 = vmatpush1.msra.mxu0 %v2956
    %3805 = vmatprep.subr.mxu0 0.0
    %3806 = vmatpush1.msra.mxu0 0.0
    %3807 = vmatprep.subr.mxu0 0.0
    %3808 = vmatpush1.msra.mxu0 0.0
    %3809 = vmatprep.subr.mxu0 0.0
    %3810 = vmatpush1.msra.mxu0 0.0
    %3811 = vmatprep.subr.mxu0 0.0
    %3812 = vmatpush1.msra.mxu0 0.0
    %3813 = vmatprep.subr.mxu0 0.0
    %3814 = vmatpush1.msra.mxu0 0.0
    %3815 = vmatprep.subr.mxu0 0.0
    %3816 = vmatpush1.msra.mxu0 0.0
    %3817 = vmatprep.subr.mxu0 0.0
    %3818 = vmatpush1.msra.mxu0 0.0
    %3819 = vmatprep.subr.mxu0 0.0
    %3820 = vmatpush1.msra.mxu0 0.0
    %3821 = vmatprep.subr.mxu0 0.0
    %3822 = vmatpush1.msra.mxu0 0.0
    %3823 = vmatprep.subr.mxu0 0.0
    %3824 = vmatpush1.msra.mxu0 0.0
    %3825 = vmatprep.subr.mxu0 0.0
    %3826 = vmatpush1.msra.mxu0 0.0
    %3827 = vmatprep.subr.mxu0 0.0
    %3828 = vmatpush1.msra.mxu0 0.0
    %3829 = vmatprep.subr.mxu0 0.0
    %3830 = vmatpush1.msra.mxu0 0.0
    %3831 = vmatprep.subr.mxu0 0.0
    %3832 = vmatpush1.msra.mxu0 0.0
    %3833 = vmatprep.subr.mxu0 0.0
    %3834 = vmatpush1.msra.mxu0 0.0
    %3835 = vmatprep.subr.mxu0 0.0
    %3836 = vmatpush1.msra.mxu0 0.0
    %3837 = vmatprep.subr.mxu0 0.0
    %3838 = vmatpush1.msra.mxu0 0.0
    %3839 = vmatprep.subr.mxu0 0.0
    %3840 = vmatpush1.msra.mxu0 0.0
    %3841 = vmatprep.subr.mxu0 0.0
    %3842 = vmatpush1.msra.mxu0 0.0
    %3843 = vmatprep.subr.mxu0 0.0
    %3844 = vmatpush1.msra.mxu0 0.0
    %3845 = vmatprep.subr.mxu0 0.0
    %3846 = vmatpush1.msra.mxu0 0.0
    %3847 = vmatprep.subr.mxu0 0.0
    %3848 = vmatpush1.msra.mxu0 0.0
    %3849 = vmatprep.subr.mxu0 0.0
    %3850 = vmatpush1.msra.mxu0 0.0
    %3851 = vmatprep.subr.mxu0 0.0
    %3852 = vmatpush1.msra.mxu0 0.0
    %3853 = vmatprep.subr.mxu0 0.0
    %3854 = vmatpush1.msra.mxu0 0.0
    %3855 = vmatprep.subr.mxu0 0.0
    %3856 = vmatpush1.msra.mxu0 0.0
    %3857 = vmatprep.subr.mxu0 0.0
    %3858 = vmatpush1.msra.mxu0 0.0
    %3859 = vmatprep.subr.mxu0 0.0
    %3860 = vmatpush1.msra.mxu0 0.0
    %3861 = vmatprep.mubr.f32.mxu0 0.0
    %3862 = vmatmul.mubr.f32.gmra.mrb[0].mxu0 %v3795
    %v3863 = vpop.f32.mrb[0].mxu0
    %v3864 = vadd.f32 0.0, %v3863
    %v3865 = vpop.f32.mrb[0].mxu0
    %3866 = vdwg.mxu0
    %v3867 = vadd.f32 %v3792, %v3864
    %v3868 = vxor.u32 %v3867, 2147483648
    %v3869 = vmul.f32 %v3868, 1.442695
    %v3870 = vpow.pop %v3869
    %v3871 = vadd.f32 %v3870, 1.0
    %v3872 = vrcp.pop %v3871
    %v3873 = vmul.f32 1.0, %v3872
    %v3874 = vtanh.pop %v3867
    %v3875 = vmul.f32 %v3873, %v3780
    %3877 = vrot.lane.b32.xlu0 %v3874, 64
    %v3878 = vpop.permute.xlu0 %3877
    %v3880 = vmul.f32 %v3873, %v3878
    %3882 = vrot.lane.b32.xlu0 %v3880, 32
    %v3883 = vpop.permute.xlu0 %3882
    %v3885 = vadd.f32 %v3875, %v3883
    %v3886 = vtanh.pop %v3885
    %3888 = vrot.lane.b32.xlu0 %v3886, 64
    %v3889 = vpop.permute.xlu0 %3888
    %v3891 = vmul.f32 %v3873, %v3889
    %3893 = vrot.lane.b32.xlu0 %v3891, 64
    %v3894 = vpop.permute.xlu0 %3893
    %3896 = vst.msk [vmem:[#allocation12] sm:$0x3] %vm1247, %v3894
    %3897 = vrot.lane.b32.xlu0 %v3891, 32
    %v3898 = vpop.permute.xlu0 %3897
    %s3900 = scalar_lea.vmem [#allocation13], 6
    %3901 = vst.msk [vmem:[%s3900] sm:$0x3] %vm300, %v3898
    %3903 = vrot.lane.b32.xlu0 %v3885, 96
    %v3904 = vpop.permute.xlu0 %3903
    %s3906 = scalar_lea.vmem [#allocation15], 6
    %3907 = vst.msk [vmem:[%s3906] sm:$0x3] %vm300, %v3904
    // Predicated region
    $region42: #{tpu_custom_call.1} parent=1 // pred_check
      _
    $region43: #{tpu_custom_call.1} parent=1 // pred_check_branch
      %3909 = sbr.rel (0) target = $region45
    $region44: #{tpu_custom_call.1} parent=1 // pred_region
      %s3911 = ssub.s32 256, 256
      %3912 = vsyncadd [#allocation6], %s3911
      %s3913 = sshll.u32 [#allocation12], 4
      %s3914 = int_to_ptr.vmem [resolvable:$true] %s3913
      %3919 = dma.vmem_to_hbm [thread:$0]  %s3914, 256, %s6, [#allocation6], 128, 128, 8
    $region45: #{tpu_custom_call.1} parent=1 // pred_fallthru
      _
    // Predicated region
    $region46: #{tpu_custom_call.1} parent=1 // pred_check
      _
    $region47: #{tpu_custom_call.1} parent=1 // pred_check_branch
      %3921 = sbr.rel (0) target = $region49
    $region48: #{tpu_custom_call.1} parent=1 // pred_region
      %s3923 = ssub.s32 128, 128
      %3924 = vsyncadd [#allocation14], %s3923
      %s3925 = sshll.u32 [#allocation13], 4
      %s3926 = int_to_ptr.vmem [resolvable:$true] %s3925
      %3931 = dma.vmem_to_hbm [thread:$0]  %s3926, 128, %s7, [#allocation14], 32, 32, 2
    $region49: #{tpu_custom_call.1} parent=1 // pred_fallthru
      _
    // Predicated region
    $region50: #{tpu_custom_call.1} parent=1 // pred_check
      _
    $region51: #{tpu_custom_call.1} parent=1 // pred_check_branch
      %3933 = sbr.rel (0) target = $region53
    $region52: #{tpu_custom_call.1} parent=1 // pred_region
      %s3935 = ssub.s32 128, 128
      %3936 = vsyncadd [#allocation14], %s3935
      %s3937 = sshll.u32 [#allocation15], 4
      %s3938 = int_to_ptr.vmem [resolvable:$true] %s3937
      %3943 = dma.vmem_to_hbm [thread:$0]  %s3938, 128, %s8, [#allocation14], 32, 32, 2
    $region53: #{tpu_custom_call.1} parent=1 // pred_fallthru
      _
    // Predicated region
    $region54: #{tpu_custom_call.1} parent=1 // pred_check
      _
    $region55: #{tpu_custom_call.1} parent=1 // pred_check_branch
      %3945 = sbr.rel (0) target = $region57
    $region56: #{tpu_custom_call.1} parent=1 // pred_region
      %3946 = dma.done [#allocation6], 256
    $region57: #{tpu_custom_call.1} parent=1 // pred_fallthru
      _
    // Predicated region
    $region58: #{tpu_custom_call.1} parent=1 // pred_check
      _
    $region59: #{tpu_custom_call.1} parent=1 // pred_check_branch
      %3948 = sbr.rel (0) target = $region61
    $region60: #{tpu_custom_call.1} parent=1 // pred_region
      %3949 = dma.done [#allocation14], 128
    $region61: #{tpu_custom_call.1} parent=1 // pred_fallthru
      _
    // Predicated region
    $region62: #{tpu_custom_call.1} parent=1 // pred_check
      _
    $region63: #{tpu_custom_call.1} parent=1 // pred_check_branch
      %3951 = sbr.rel (0) target = $region65
    $region64: #{tpu_custom_call.1} parent=1 // pred_region
      %3952 = dma.done [#allocation14], 128
    $region65: #{tpu_custom_call.1} parent=1 // pred_fallthru
      _
    %3953 = vsyncpa [#allocation5], 1
    %3954 = vsyncpa [#allocation8], 1
    %3955 = vsyncpa [#allocation11], 1
    %3956 = vsyncpa [#allocation6], 1
    %3957 = vsyncpa [#allocation14], 1

</llo_original>
